<compile_context>
chip_gen: v6e
topology: v6e:2x2x1
jax: 0.10.0
libtpu: 0.0.40
codegen_flags: <defaults>
</compile_context>

<pallas_src>
import numpy as np
import jax
import jax.numpy as jnp
from jax.experimental import pallas as pl
from jax.experimental.pallas import tpu as pltpu

NDF = 18
INPUT_NC = 4
LEAKY_SLOPE = 0.01   # F.leaky_relu default
BN_EPS = 1e-5        # nn.BatchNorm2d default
K = 4
STRIDE = 2
PAD = 2
NTAPS = K * K


def _out_size(h):
    return (h + 2 * PAD - K) // STRIDE + 1


def _ceil_to(x, m):
    return ((x + m - 1) // m) * m


# ---------------------------------------------------------------------------
# Fused kernel (whole forward pass, one pallas_call, no grid)
# ---------------------------------------------------------------------------
def _make_fused_kernel(n, m1, m2, m2p, m3s, sp3p):
    def bn_lrelu(y, g, b, real_rows):
        # Training-mode batch stats (biased variance).  Rows beyond real_rows
        # (tap-block padding) are exactly zero, so summing over all rows and
        # dividing by real_rows is exact.  Single-pass E[y^2]-E[y]^2 is fine
        # at these magnitudes (see review note).
        inv = 1.0 / float(real_rows)
        mu = jnp.sum(y, axis=0, keepdims=True) * inv
        ms = jnp.sum(y * y, axis=0, keepdims=True) * inv
        var = ms - mu * mu
        a = g * jax.lax.rsqrt(var + BN_EPS)
        c = b - mu * a
        z = y * a + c
        return jnp.where(z >= 0, z, LEAKY_SLOPE * z)

    def kernel(p1_ref, w1_ref, g1_ref, b1_ref,
               s2_ref, w2_ref, g2_ref, b2_ref,
               s3_ref, w3_ref, wfc_ref, bfc_ref, o_ref):
        f32 = jnp.float32
        ntaps = w2_ref.shape[0]

        # ----- layer 1: conv1 as im2col GEMM + BN1 + leaky relu -------------
        y1 = jnp.dot(p1_ref[...], w1_ref[...], preferred_element_type=f32)  # (m1, 18)
        y1 = bn_lrelu(y1, g1_ref[...], b1_ref[...], m1)

        # ----- layer 2: gather GEMM + single batched tap contraction --------
        s2 = s2_ref[...].astype(f32)                         # 0/1, exact cast
        p2 = jnp.dot(s2, y1, preferred_element_type=f32)     # (ntaps*m2p, 18)
        p2 = p2.reshape(ntaps, m2p, p2.shape[-1])            # tile-aligned split
        y2t = jnp.einsum("tmc,tcd->tmd", p2, w2_ref[...],
                         preferred_element_type=f32)         # (ntaps, m2p, 36)
        y2 = jnp.sum(y2t, axis=0)                            # (m2p, 36)
        y2 = bn_lrelu(y2, g2_ref[...], b2_ref[...], m2)

        # ----- layer 3: gather GEMM + batched tap contraction (no BN) -------
        s3 = s3_ref[...].astype(f32)
        p3 = jnp.dot(s3, y2, preferred_element_type=f32)     # (ntaps*n*sp3p, 36)
        p3 = p3.reshape(ntaps, n * sp3p, y2.shape[-1])
        y3t = jnp.einsum("tmc,tcd->tmd", p3, w3_ref[...],
                         preferred_element_type=f32)         # (ntaps, n*sp3p, 18)
        y3 = jnp.sum(y3t, axis=0)                            # (n*sp3p, 18)

        # ----- global spatial max pool + fc1 --------------------------------
        y3 = y3.reshape(n, sp3p, y3.shape[-1])
        pooled = jnp.max(y3[:, :m3s, :], axis=1)             # (n, 18), real rows only
        o_ref[...] = (jnp.dot(pooled, wfc_ref[...], preferred_element_type=f32)
                      + bfc_ref[...])

    return kernel


# ---------------------------------------------------------------------------
# Host-side helpers
# ---------------------------------------------------------------------------
def _im2col_nchw(x, k, stride, pad):
    """x: (N,C,H,W) -> patches (N*Ho*Wo, C*k*k), feature order (c, kh, kw)."""
    n, c, h, w = x.shape
    ho = (h + 2 * pad - k) // stride + 1
    wo = (w + 2 * pad - k) // stride + 1
    xp = jnp.pad(x, ((0, 0), (0, 0), (pad, pad), (pad, pad)))
    cols = []
    for kh in range(k):
        for kw in range(k):
            cols.append(xp[:, :, kh:kh + stride * ho:stride, kw:kw + stride * wo:stride])
    p = jnp.stack(cols, axis=2).reshape(n, c * k * k, ho, wo)
    p = p.transpose(0, 2, 3, 1).reshape(n * ho * wo, c * k * k)
    return p


def _tap_gather_matrix(n, hi, wi, src_rows, ho, wo, rows_per_tap, out_stride):
    """0/1 matrix (NTAPS*rows_per_tap, src_rows): per tap t=(kh,kw), row
    t*rows_per_tap + b*out_stride + oy*wo + ox selects source row
    b*(hi*wi) + iy*wi + ix (all-zero row when the tap lands in conv padding,
    and padded output rows are never written => stay exactly zero)."""
    s = np.zeros((NTAPS * rows_per_tap, src_rows), np.float32)
    for kh in range(K):
        for kw in range(K):
            t = kh * K + kw
            for b in range(n):
                for oy in range(ho):
                    for ox in range(wo):
                        iy = STRIDE * oy + kh - PAD
                        ix = STRIDE * ox + kw - PAD
                        if 0 <= iy < hi and 0 <= ix < wi:
                            r = t * rows_per_tap + b * out_stride + oy * wo + ox
                            c = b * (hi * wi) + iy * wi + ix
                            s[r, c] = 1.0
    return s


def pack_params(params, x_shape):
    """One-time packing of module params + static gather constants (keeps the
    per-call path free of weight-prep XLA ops and the HBM constants compact)."""
    n, c_in, h0, w0 = x_shape
    ndf = params["w1"].shape[0]
    ndf2 = params["w2"].shape[0]

    h1, w1 = _out_size(h0), _out_size(w0)
    h2, w2 = _out_size(h1), _out_size(w1)
    h3, w3 = _out_size(h2), _out_size(w2)
    m1, m2 = n * h1 * w1, n * h2 * w2
    m2p = _ceil_to(m2, 8)
    sp3p = _ceil_to(h3 * w3, 8)
    m3p = n * sp3p
    assert m2p % 8 == 0 and sp3p % 8 == 0  # tile-aligned in-kernel reshapes

    s2 = _tap_gather_matrix(n, h1, w1, m1, h2, w2, m2p, h2 * w2)
    s3 = _tap_gather_matrix(n, h2, w2, m2p, h3, w3, m3p, sp3p)

    return {
        "w1": jnp.asarray(params["w1"].reshape(ndf, c_in * NTAPS).T, jnp.float32),
        "g1": params["g1"].reshape(1, ndf).astype(jnp.float32),
        "b1": params["b1"].reshape(1, ndf).astype(jnp.float32),
        "w2": jnp.transpose(params["w2"], (2, 3, 1, 0)).reshape(NTAPS, ndf, ndf2).astype(jnp.float32),
        "g2": params["g2"].reshape(1, ndf2).astype(jnp.float32),
        "b2": params["b2"].reshape(1, ndf2).astype(jnp.float32),
        "w3": jnp.transpose(params["w3"], (2, 3, 1, 0)).reshape(NTAPS, ndf2, ndf).astype(jnp.float32),
        "w_fc": params["w_fc"].T.astype(jnp.float32),
        "b_fc": params["b_fc"].reshape(1, -1).astype(jnp.float32),
        "s2": jnp.asarray(s2, jnp.bfloat16),   # 0/1 -> exact in bf16, halves DMA
        "s3": jnp.asarray(s3, jnp.bfloat16),
    }


# ---------------------------------------------------------------------------
# Forward
# ---------------------------------------------------------------------------
@jax.jit
def upps_net_forward(x, packed):
    n, c_in, h0, w0 = x.shape
    h1, w1 = _out_size(h0), _out_size(w0)
    h2, w2 = _out_size(h1), _out_size(w1)
    h3, w3 = _out_size(h2), _out_size(w2)
    m1, m2, m3s = n * h1 * w1, n * h2 * w2, h3 * w3
    m2p = _ceil_to(m2, 8)
    sp3p = _ceil_to(m3s, 8)
    m3p = n * sp3p
    assert m2p % 8 == 0 and sp3p % 8 == 0

    # Only per-call prep: tiny im2col of the raw input (8 KB).
    p1 = _im2col_nchw(x, K, STRIDE, PAD)                     # (m1, c_in*16)

    ndf = packed["w1"].shape[1]
    ndf2 = packed["w2"].shape[2]
    k1 = packed["w1"].shape[0]

    kernel = _make_fused_kernel(n, m1, m2, m2p, m3s, sp3p)
    inputs = (p1, packed["w1"], packed["g1"], packed["b1"],
              packed["s2"], packed["w2"], packed["g2"], packed["b2"],
              packed["s3"], packed["w3"], packed["w_fc"], packed["b_fc"])

    flops = 2 * (m1 * k1 * ndf
                 + (NTAPS * m2p) * m1 * ndf
                 + NTAPS * m2p * ndf * ndf2
                 + (NTAPS * m3p) * m2p * ndf2
                 + NTAPS * m3p * ndf2 * ndf
                 + n * ndf * 2)
    bytes_accessed = (sum(int(np.prod(a.shape)) * jnp.dtype(a.dtype).itemsize
                          for a in inputs) + n * 2 * 4)

    out = pl.pallas_call(
        kernel,
        out_shape=jax.ShapeDtypeStruct((n, 2), jnp.float32),
        in_specs=[pl.BlockSpec(memory_space=pltpu.MemorySpace.VMEM)] * len(inputs),
        out_specs=pl.BlockSpec(memory_space=pltpu.MemorySpace.VMEM),
        cost_estimate=pl.CostEstimate(flops=int(flops), transcendentals=64,
                                      bytes_accessed=int(bytes_accessed)),
    )(*inputs)
    return out


def init_params(key, input_nc=INPUT_NC, ndf=NDF):
    ks = jax.random.split(key, 5)
    return {
        "w1": jax.random.normal(ks[0], (ndf, input_nc, 4, 4), jnp.float32) * 0.05,
        "g1": jnp.ones((ndf,), jnp.float32),
        "b1": jnp.zeros((ndf,), jnp.float32),
        "w2": jax.random.normal(ks[1], (ndf * 2, ndf, 4, 4), jnp.float32) * 0.05,
        "g2": jnp.ones((ndf * 2,), jnp.float32),
        "b2": jnp.zeros((ndf * 2,), jnp.float32),
        "w3": jax.random.normal(ks[2], (ndf, ndf * 2, 4, 4), jnp.float32) * 0.05,
        "w_fc": jax.random.normal(ks[3], (2, ndf), jnp.float32) * 0.1,
        "b_fc": jax.random.normal(ks[4], (2,), jnp.float32) * 0.1,
    }


# Pure-JAX reference (silent correctness check).
# TODO(synk): BatchNorm running-stat buffer updates (training-mode side effect)
# are not materialized; only the forward output is reproduced.
def _ref_forward(x, p):
    hp = jax.lax.Precision.HIGHEST

    def conv(x, w):
        return jax.lax.conv_general_dilated(
            x, w, window_strides=(2, 2), padding=((2, 2), (2, 2)),
            dimension_numbers=("NCHW", "OIHW", "NCHW"), precision=hp)

    def bn_lrelu(x, g, b):
        mean = jnp.mean(x, axis=(0, 2, 3), keepdims=True)
        var = jnp.mean((x - mean) ** 2, axis=(0, 2, 3), keepdims=True)
        y = (x - mean) * jax.lax.rsqrt(var + BN_EPS)
        y = y * g.reshape(1, -1, 1, 1) + b.reshape(1, -1, 1, 1)
        return jnp.where(y >= 0, y, LEAKY_SLOPE * y)

    x = bn_lrelu(conv(x, p["w1"]), p["g1"], p["b1"])
    x = bn_lrelu(conv(x, p["w2"]), p["g2"], p["b2"])
    x = conv(x, p["w3"])
    x = jnp.max(x, axis=(2, 3))                  # global max pool -> (N, ndf)
    return jnp.dot(x, p["w_fc"].T, precision=hp) + p["b_fc"]


if __name__ == "__main__":
    key = jax.random.PRNGKey(0)
    k_x, k_p = jax.random.split(key)
    x = jax.random.normal(k_x, (2, INPUT_NC, 16, 16), jnp.float32)
    params = init_params(k_p)
    packed = pack_params(params, x.shape)        # one-time packing (not per call)

    out = jax.block_until_ready(upps_net_forward(x, packed))
    assert out.shape == (2, 2), out.shape

    ref = jax.block_until_ready(_ref_forward(x, params))
    assert jnp.allclose(out, ref, atol=1e-3, rtol=1e-3), (out, ref)

    print("KERNEL_OK")
</pallas_src>

<mosaic_0001>
module attributes {stable_mosaic.version = 11 : i64} {
  func.func @kernel(%arg0: memref<162x64xf32, #tpu.memory_space<vmem>>, %arg1: memref<64x18xf32, #tpu.memory_space<vmem>>, %arg2: memref<1x18xf32, #tpu.memory_space<vmem>>, %arg3: memref<1x18xf32, #tpu.memory_space<vmem>>, %arg4: memref<896x162xbf16, #tpu.memory_space<vmem>>, %arg5: memref<16x18x36xf32, #tpu.memory_space<vmem>>, %arg6: memref<1x36xf32, #tpu.memory_space<vmem>>, %arg7: memref<1x36xf32, #tpu.memory_space<vmem>>, %arg8: memref<512x56xbf16, #tpu.memory_space<vmem>>, %arg9: memref<16x36x18xf32, #tpu.memory_space<vmem>>, %arg10: memref<18x2xf32, #tpu.memory_space<vmem>>, %arg11: memref<1x2xf32, #tpu.memory_space<vmem>>, %arg12: memref<2x2xf32, #tpu.memory_space<vmem>>) attributes {dimension_semantics = [], scalar_prefetch = 0 : i64, scratch_operands = 0 : i64, tpu.core_type = #tpu.core_type<tc>} {
    %c0 = arith.constant 0 : index
    %c0_0 = arith.constant 0 : index
    %0 = vector.load %arg0[%c0, %c0_0] : memref<162x64xf32, #tpu.memory_space<vmem>>, vector<162x64xf32>
    %c0_1 = arith.constant 0 : index
    %c0_2 = arith.constant 0 : index
    %1 = vector.load %arg1[%c0_1, %c0_2] : memref<64x18xf32, #tpu.memory_space<vmem>>, vector<64x18xf32>
    %cst = arith.constant dense<0.000000e+00> : vector<162x18xf32>
    %2 = tpu.matmul %0, %1, %cst {dimension_numbers = #tpu.dot_dimension_numbers<[1], [0], [0], [1], [0, 0, 1, 1], [], []>} : vector<162x64xf32>, vector<64x18xf32>, vector<162x18xf32> -> vector<162x18xf32>
    %c0_3 = arith.constant 0 : index
    %c0_4 = arith.constant 0 : index
    %3 = vector.load %arg2[%c0_3, %c0_4] : memref<1x18xf32, #tpu.memory_space<vmem>>, vector<1x18xf32>
    %c0_5 = arith.constant 0 : index
    %c0_6 = arith.constant 0 : index
    %4 = vector.load %arg3[%c0_5, %c0_6] : memref<1x18xf32, #tpu.memory_space<vmem>>, vector<1x18xf32>
    %cst_7 = arith.constant dense<0.000000e+00> : vector<18xf32>
    %5 = vector.multi_reduction <add>, %2, %cst_7 [0] : vector<162x18xf32> to vector<18xf32>
    %6 = vector.shape_cast %5 : vector<18xf32> to vector<1x18xf32>
    %cst_8 = arith.constant 0.00617283955 : f32
    %7 = vector.broadcast %cst_8 : f32 to vector<1x18xf32>
    %8 = arith.mulf %6, %7 : vector<1x18xf32>
    %9 = arith.mulf %2, %2 : vector<162x18xf32>
    %cst_9 = arith.constant dense<0.000000e+00> : vector<18xf32>
    %10 = vector.multi_reduction <add>, %9, %cst_9 [0] : vector<162x18xf32> to vector<18xf32>
    %11 = vector.shape_cast %10 : vector<18xf32> to vector<1x18xf32>
    %cst_10 = arith.constant 0.00617283955 : f32
    %12 = vector.broadcast %cst_10 : f32 to vector<1x18xf32>
    %13 = arith.mulf %11, %12 : vector<1x18xf32>
    %14 = arith.mulf %8, %8 : vector<1x18xf32>
    %15 = arith.subf %13, %14 : vector<1x18xf32>
    %cst_11 = arith.constant 9.99999974E-6 : f32
    %16 = vector.broadcast %cst_11 : f32 to vector<1x18xf32>
    %17 = arith.addf %15, %16 : vector<1x18xf32>
    %18 = math.rsqrt %17 : vector<1x18xf32>
    %19 = arith.mulf %3, %18 : vector<1x18xf32>
    %20 = arith.mulf %8, %19 : vector<1x18xf32>
    %21 = arith.subf %4, %20 : vector<1x18xf32>
    %22 = vector.broadcast %19 : vector<1x18xf32> to vector<162x18xf32>
    %23 = arith.mulf %2, %22 : vector<162x18xf32>
    %24 = vector.broadcast %21 : vector<1x18xf32> to vector<162x18xf32>
    %25 = arith.addf %23, %24 : vector<162x18xf32>
    %cst_12 = arith.constant 0.000000e+00 : f32
    %26 = vector.broadcast %cst_12 : f32 to vector<162x18xf32>
    %27 = arith.cmpf oge, %25, %26 : vector<162x18xf32>
    %cst_13 = arith.constant 0.00999999977 : f32
    %28 = vector.broadcast %cst_13 : f32 to vector<162x18xf32>
    %29 = arith.mulf %28, %25 : vector<162x18xf32>
    %30 = arith.select %27, %25, %29 : vector<162x18xi1>, vector<162x18xf32>
    %c0_14 = arith.constant 0 : index
    %c0_15 = arith.constant 0 : index
    %31 = vector.load %arg4[%c0_14, %c0_15] : memref<896x162xbf16, #tpu.memory_space<vmem>>, vector<896x162xbf16>
    %32 = arith.extf %31 : vector<896x162xbf16> to vector<896x162xf32>
    %cst_16 = arith.constant dense<0.000000e+00> : vector<896x18xf32>
    %33 = tpu.matmul %32, %30, %cst_16 {dimension_numbers = #tpu.dot_dimension_numbers<[1], [0], [0], [1], [0, 0, 1, 1], [], []>} : vector<896x162xf32>, vector<162x18xf32>, vector<896x18xf32> -> vector<896x18xf32>
    %34 = vector.shape_cast %33 : vector<896x18xf32> to vector<16x56x18xf32>
    %c0_17 = arith.constant 0 : index
    %c0_18 = arith.constant 0 : index
    %c0_19 = arith.constant 0 : index
    %35 = vector.load %arg5[%c0_17, %c0_18, %c0_19] : memref<16x18x36xf32, #tpu.memory_space<vmem>>, vector<16x18x36xf32>
    "tpu.trace_start"() <{level = 10 : i32, message = "tmc,tcd->tmd"}> : () -> ()
    %cst_20 = arith.constant dense<0.000000e+00> : vector<16x56x36xf32>
    %36 = tpu.matmul %34, %35, %cst_20 {dimension_numbers = #tpu.dot_dimension_numbers<[2], [1], [1], [2], [0, 0, 0, 1, 1, 2], [0], [0]>} : vector<16x56x18xf32>, vector<16x18x36xf32>, vector<16x56x36xf32> -> vector<16x56x36xf32>
    "tpu.trace_stop"() : () -> ()
    %cst_21 = arith.constant dense<0.000000e+00> : vector<56x36xf32>
    %37 = vector.multi_reduction <add>, %36, %cst_21 [0] : vector<16x56x36xf32> to vector<56x36xf32>
    %c0_22 = arith.constant 0 : index
    %c0_23 = arith.constant 0 : index
    %38 = vector.load %arg6[%c0_22, %c0_23] : memref<1x36xf32, #tpu.memory_space<vmem>>, vector<1x36xf32>
    %c0_24 = arith.constant 0 : index
    %c0_25 = arith.constant 0 : index
    %39 = vector.load %arg7[%c0_24, %c0_25] : memref<1x36xf32, #tpu.memory_space<vmem>>, vector<1x36xf32>
    %cst_26 = arith.constant dense<0.000000e+00> : vector<36xf32>
    %40 = vector.multi_reduction <add>, %37, %cst_26 [0] : vector<56x36xf32> to vector<36xf32>
    %41 = vector.shape_cast %40 : vector<36xf32> to vector<1x36xf32>
    %cst_27 = arith.constant 2.000000e-02 : f32
    %42 = vector.broadcast %cst_27 : f32 to vector<1x36xf32>
    %43 = arith.mulf %41, %42 : vector<1x36xf32>
    %44 = arith.mulf %37, %37 : vector<56x36xf32>
    %cst_28 = arith.constant dense<0.000000e+00> : vector<36xf32>
    %45 = vector.multi_reduction <add>, %44, %cst_28 [0] : vector<56x36xf32> to vector<36xf32>
    %46 = vector.shape_cast %45 : vector<36xf32> to vector<1x36xf32>
    %cst_29 = arith.constant 2.000000e-02 : f32
    %47 = vector.broadcast %cst_29 : f32 to vector<1x36xf32>
    %48 = arith.mulf %46, %47 : vector<1x36xf32>
    %49 = arith.mulf %43, %43 : vector<1x36xf32>
    %50 = arith.subf %48, %49 : vector<1x36xf32>
    %cst_30 = arith.constant 9.99999974E-6 : f32
    %51 = vector.broadcast %cst_30 : f32 to vector<1x36xf32>
    %52 = arith.addf %50, %51 : vector<1x36xf32>
    %53 = math.rsqrt %52 : vector<1x36xf32>
    %54 = arith.mulf %38, %53 : vector<1x36xf32>
    %55 = arith.mulf %43, %54 : vector<1x36xf32>
    %56 = arith.subf %39, %55 : vector<1x36xf32>
    %57 = vector.broadcast %54 : vector<1x36xf32> to vector<56x36xf32>
    %58 = arith.mulf %37, %57 : vector<56x36xf32>
    %59 = vector.broadcast %56 : vector<1x36xf32> to vector<56x36xf32>
    %60 = arith.addf %58, %59 : vector<56x36xf32>
    %cst_31 = arith.constant 0.000000e+00 : f32
    %61 = vector.broadcast %cst_31 : f32 to vector<56x36xf32>
    %62 = arith.cmpf oge, %60, %61 : vector<56x36xf32>
    %cst_32 = arith.constant 0.00999999977 : f32
    %63 = vector.broadcast %cst_32 : f32 to vector<56x36xf32>
    %64 = arith.mulf %63, %60 : vector<56x36xf32>
    %65 = arith.select %62, %60, %64 : vector<56x36xi1>, vector<56x36xf32>
    %c0_33 = arith.constant 0 : index
    %c0_34 = arith.constant 0 : index
    %66 = vector.load %arg8[%c0_33, %c0_34] : memref<512x56xbf16, #tpu.memory_space<vmem>>, vector<512x56xbf16>
    %67 = arith.extf %66 : vector<512x56xbf16> to vector<512x56xf32>
    %cst_35 = arith.constant dense<0.000000e+00> : vector<512x36xf32>
    %68 = tpu.matmul %67, %65, %cst_35 {dimension_numbers = #tpu.dot_dimension_numbers<[1], [0], [0], [1], [0, 0, 1, 1], [], []>} : vector<512x56xf32>, vector<56x36xf32>, vector<512x36xf32> -> vector<512x36xf32>
    %69 = vector.shape_cast %68 : vector<512x36xf32> to vector<16x32x36xf32>
    %c0_36 = arith.constant 0 : index
    %c0_37 = arith.constant 0 : index
    %c0_38 = arith.constant 0 : index
    %70 = vector.load %arg9[%c0_36, %c0_37, %c0_38] : memref<16x36x18xf32, #tpu.memory_space<vmem>>, vector<16x36x18xf32>
    "tpu.trace_start"() <{level = 10 : i32, message = "tmc,tcd->tmd"}> : () -> ()
    %cst_39 = arith.constant dense<0.000000e+00> : vector<16x32x18xf32>
    %71 = tpu.matmul %69, %70, %cst_39 {dimension_numbers = #tpu.dot_dimension_numbers<[2], [1], [1], [2], [0, 0, 0, 1, 1, 2], [0], [0]>} : vector<16x32x36xf32>, vector<16x36x18xf32>, vector<16x32x18xf32> -> vector<16x32x18xf32>
    "tpu.trace_stop"() : () -> ()
    %cst_40 = arith.constant dense<0.000000e+00> : vector<32x18xf32>
    %72 = vector.multi_reduction <add>, %71, %cst_40 [0] : vector<16x32x18xf32> to vector<32x18xf32>
    %73 = vector.shape_cast %72 : vector<32x18xf32> to vector<2x16x18xf32>
    %74 = vector.extract_strided_slice %73 {offsets = [0, 0, 0], sizes = [2, 9, 18], strides = [1, 1, 1]} : vector<2x16x18xf32> to vector<2x9x18xf32>
    %cst_41 = arith.constant dense<0xFF800000> : vector<2x18xf32>
    %75 = vector.multi_reduction <maximumf>, %74, %cst_41 [1] : vector<2x9x18xf32> to vector<2x18xf32>
    %c0_42 = arith.constant 0 : index
    %c0_43 = arith.constant 0 : index
    %76 = vector.load %arg10[%c0_42, %c0_43] : memref<18x2xf32, #tpu.memory_space<vmem>>, vector<18x2xf32>
    %cst_44 = arith.constant dense<0.000000e+00> : vector<2x2xf32>
    %77 = tpu.matmul %75, %76, %cst_44 {dimension_numbers = #tpu.dot_dimension_numbers<[1], [0], [0], [1], [0, 0, 1, 1], [], []>} : vector<2x18xf32>, vector<18x2xf32>, vector<2x2xf32> -> vector<2x2xf32>
    %c0_45 = arith.constant 0 : index
    %c0_46 = arith.constant 0 : index
    %78 = vector.load %arg11[%c0_45, %c0_46] : memref<1x2xf32, #tpu.memory_space<vmem>>, vector<1x2xf32>
    %79 = vector.broadcast %78 : vector<1x2xf32> to vector<2x2xf32>
    %80 = arith.addf %77, %79 : vector<2x2xf32>
    %c0_47 = arith.constant 0 : index
    %c0_48 = arith.constant 0 : index
    %81 = vector.load %arg12[%c0_47, %c0_48] : memref<2x2xf32, #tpu.memory_space<vmem>>, vector<2x2xf32>
    tpu.vector_store %arg12[%c0_47, %c0_48], %80 {strides = array<i32>} : memref<2x2xf32, #tpu.memory_space<vmem>>, vector<2x2xf32>,
    return
  }
}

</mosaic_0001>

<llo_original>
// kernel: upps_net_forward.1
$region0: #{upps_net_forward.1}
  #allocation0 [shape = 'u32[]', space=smem, size = 0x4, offset = 0x4, fixed_abs, tag = 'smem constant byte address 0x4 - core index']
  #allocation1 [shape = 'u32[144,128]{1,0:T(1,128)}', space=vmem, size = 0x12000, scoped, tag = 'internal scratch']
  %s0 = inlined_call_operand.vmem [shape: f32[162,64], index: 0, kind: input, shape index: {}]
  %s1 = inlined_call_operand.vmem [shape: f32[64,18], index: 1, kind: input, shape index: {}]
  %s2 = inlined_call_operand.vmem [shape: f32[1,18], index: 2, kind: input, shape index: {}]
  %s3 = inlined_call_operand.vmem [shape: f32[1,18], index: 3, kind: input, shape index: {}]
  %s4 = inlined_call_operand.vmem [shape: bf16[896,162], index: 4, kind: input, shape index: {}]
  %s5 = inlined_call_operand.vmem [shape: f32[16,18,36], index: 5, kind: input, shape index: {}]
  %s6 = inlined_call_operand.vmem [shape: f32[1,36], index: 6, kind: input, shape index: {}]
  %s7 = inlined_call_operand.vmem [shape: f32[1,36], index: 7, kind: input, shape index: {}]
  %s8 = inlined_call_operand.vmem [shape: bf16[512,56], index: 8, kind: input, shape index: {}]
  %s9 = inlined_call_operand.vmem [shape: f32[16,36,18], index: 9, kind: input, shape index: {}]
  %s10 = inlined_call_operand.vmem [shape: f32[18,2], index: 10, kind: input, shape index: {}]
  %s11 = inlined_call_operand.vmem [shape: f32[1,2], index: 11, kind: input, shape index: {}]
  %s12 = inlined_call_operand.hbm [shape: f32[2,2], index: 12, kind: output, shape index: {}]
  %s13 = sld [smem:[#allocation0]]
  $region58: #{upps_net_forward.1} parent=0
    _
  %s15 = ssub.s32 1, %s13
  %s16 = scalar_select 0, %s15, %s13
  $region1: #{upps_net_forward.1} parent=0
    #allocation2 [shape = 'u8[1024]{0}', space=vmem, size = 0x400, scoped, tag = 'output window, operand 0, single buffered']
    #allocation3 [shape = 's32[1]{0}', space=sflag, size = 0x4, scoped, tag = 'scoped memory for upps_net_forward.1']
    %17 = vsyncpa [#allocation3], 0
    // Predicated region
    $region2: #{upps_net_forward.1} parent=1 // pred_check
      _
    $region3: #{upps_net_forward.1} parent=1 // pred_check_branch
      %19 = sbr.rel (0) target = $region5
    $region4: #{upps_net_forward.1} parent=1 // pred_region
      _
    $region5: #{upps_net_forward.1} parent=1 // pred_fallthru
      _
    // Predicated region
    $region6: #{upps_net_forward.1} parent=1 // pred_check
      _
    $region7: #{upps_net_forward.1} parent=1 // pred_check_branch
      %21 = sbr.rel (0) target = $region9
    $region8: #{upps_net_forward.1} parent=1 // pred_region
      _
    $region9: #{upps_net_forward.1} parent=1 // pred_fallthru
      _
    // Predicated region
    $region10: #{upps_net_forward.1} parent=1 // pred_check
      _
    $region11: #{upps_net_forward.1} parent=1 // pred_check_branch
      %23 = sbr.rel (0) target = $region13
    $region12: #{upps_net_forward.1} parent=1 // pred_region
      _
    $region13: #{upps_net_forward.1} parent=1 // pred_fallthru
      _
    // Predicated region
    $region14: #{upps_net_forward.1} parent=1 // pred_check
      _
    $region15: #{upps_net_forward.1} parent=1 // pred_check_branch
      %25 = sbr.rel (0) target = $region17
    $region16: #{upps_net_forward.1} parent=1 // pred_region
      _
    $region17: #{upps_net_forward.1} parent=1 // pred_fallthru
      _
    // Predicated region
    $region18: #{upps_net_forward.1} parent=1 // pred_check
      _
    $region19: #{upps_net_forward.1} parent=1 // pred_check_branch
      %27 = sbr.rel (0) target = $region21
    $region20: #{upps_net_forward.1} parent=1 // pred_region
      _
    $region21: #{upps_net_forward.1} parent=1 // pred_fallthru
      _
    // Predicated region
    $region22: #{upps_net_forward.1} parent=1 // pred_check
      _
    $region23: #{upps_net_forward.1} parent=1 // pred_check_branch
      %29 = sbr.rel (0) target = $region25
    $region24: #{upps_net_forward.1} parent=1 // pred_region
      _
    $region25: #{upps_net_forward.1} parent=1 // pred_fallthru
      _
    // Predicated region
    $region26: #{upps_net_forward.1} parent=1 // pred_check
      _
    $region27: #{upps_net_forward.1} parent=1 // pred_check_branch
      %31 = sbr.rel (0) target = $region29
    $region28: #{upps_net_forward.1} parent=1 // pred_region
      _
    $region29: #{upps_net_forward.1} parent=1 // pred_fallthru
      _
    // Predicated region
    $region30: #{upps_net_forward.1} parent=1 // pred_check
      _
    $region31: #{upps_net_forward.1} parent=1 // pred_check_branch
      %33 = sbr.rel (0) target = $region33
    $region32: #{upps_net_forward.1} parent=1 // pred_region
      _
    $region33: #{upps_net_forward.1} parent=1 // pred_fallthru
      _
    // Predicated region
    $region34: #{upps_net_forward.1} parent=1 // pred_check
      _
    $region35: #{upps_net_forward.1} parent=1 // pred_check_branch
      %35 = sbr.rel (0) target = $region37
    $region36: #{upps_net_forward.1} parent=1 // pred_region
      _
    $region37: #{upps_net_forward.1} parent=1 // pred_fallthru
      _
    // Predicated region
    $region38: #{upps_net_forward.1} parent=1 // pred_check
      _
    $region39: #{upps_net_forward.1} parent=1 // pred_check_branch
      %37 = sbr.rel (0) target = $region41
    $region40: #{upps_net_forward.1} parent=1 // pred_region
      _
    $region41: #{upps_net_forward.1} parent=1 // pred_fallthru
      _
    // Predicated region
    $region42: #{upps_net_forward.1} parent=1 // pred_check
      _
    $region43: #{upps_net_forward.1} parent=1 // pred_check_branch
      %39 = sbr.rel (0) target = $region45
    $region44: #{upps_net_forward.1} parent=1 // pred_region
      _
    $region45: #{upps_net_forward.1} parent=1 // pred_fallthru
      _
    // Predicated region
    $region46: #{upps_net_forward.1} parent=1 // pred_check
      _
    $region47: #{upps_net_forward.1} parent=1 // pred_check_branch
      %41 = sbr.rel (0) target = $region49
    $region48: #{upps_net_forward.1} parent=1 // pred_region
      _
    $region49: #{upps_net_forward.1} parent=1 // pred_fallthru
      _
    %v42 = vld [vmem:[%s0] sm:$0xff]
    %v43 = vld [vmem:[%s0 + $0x8] sm:$0xff]
    %v44 = vld [vmem:[%s0 + $0x10] sm:$0xff]
    %v45 = vld [vmem:[%s0 + $0x18] sm:$0xff]
    %v46 = vld [vmem:[%s0 + $0x20] sm:$0xff]
    %v47 = vld [vmem:[%s0 + $0x28] sm:$0xff]
    %v48 = vld [vmem:[%s0 + $0x30] sm:$0xff]
    %v49 = vld [vmem:[%s0 + $0x38] sm:$0xff]
    %v50 = vld [vmem:[%s0 + $0x40] sm:$0xff]
    %v51 = vld [vmem:[%s0 + $0x48] sm:$0xff]
    %v52 = vld [vmem:[%s0 + $0x50] sm:$0xff]
    %v53 = vld [vmem:[%s0 + $0x58] sm:$0xff]
    %v54 = vld [vmem:[%s0 + $0x60] sm:$0xff]
    %v55 = vld [vmem:[%s0 + $0x68] sm:$0xff]
    %v56 = vld [vmem:[%s0 + $0x70] sm:$0xff]
    %v57 = vld [vmem:[%s0 + $0x78] sm:$0xff]
    %v58 = vld [vmem:[%s0 + $0x80] sm:$0xff]
    %v59 = vld [vmem:[%s0 + $0x88] sm:$0xff]
    %v60 = vld [vmem:[%s0 + $0x90] sm:$0xff]
    %v61 = vld [vmem:[%s0 + $0x98] sm:$0xff]
    %v62 = vld [vmem:[%s0 + $0xa0] sm:$0x3]
    %v63 = vld [vmem:[%s1] sm:$0xff]
    %v64 = vld [vmem:[%s1 + $0x8] sm:$0xff]
    %v65 = vld [vmem:[%s1 + $0x10] sm:$0xff]
    %v66 = vld [vmem:[%s1 + $0x18] sm:$0xff]
    %v67 = vld [vmem:[%s1 + $0x20] sm:$0xff]
    %v68 = vld [vmem:[%s1 + $0x28] sm:$0xff]
    %v69 = vld [vmem:[%s1 + $0x30] sm:$0xff]
    %v70 = vld [vmem:[%s1 + $0x38] sm:$0xff]
    %vm71 = vcmask 523264
    %v73 = vsel %vm71, %v42, 0
    %v76 = vsel %vm71, %v43, 0
    %v79 = vsel %vm71, %v44, 0
    %v82 = vsel %vm71, %v45, 0
    %v85 = vsel %vm71, %v46, 0
    %v88 = vsel %vm71, %v47, 0
    %v91 = vsel %vm71, %v48, 0
    %v94 = vsel %vm71, %v49, 0
    %v97 = vsel %vm71, %v50, 0
    %v100 = vsel %vm71, %v51, 0
    %v103 = vsel %vm71, %v52, 0
    %v106 = vsel %vm71, %v53, 0
    %v109 = vsel %vm71, %v54, 0
    %v112 = vsel %vm71, %v55, 0
    %v115 = vsel %vm71, %v56, 0
    %v118 = vsel %vm71, %v57, 0
    %v121 = vsel %vm71, %v58, 0
    %v124 = vsel %vm71, %v59, 0
    %v127 = vsel %vm71, %v60, 0
    %v130 = vsel %vm71, %v61, 0
    %v133 = vsel %vm71, %v62, 0
    %135 = vmatprep.subr.mxu0 0.0
    %136 = vmatpush1.msra.mxu0 0.0
    %137 = vmatprep.subr.mxu0 0.0
    %138 = vmatpush1.msra.mxu0 0.0
    %139 = vmatprep.subr.mxu0 0.0
    %140 = vmatpush1.msra.mxu0 0.0
    %141 = vmatprep.subr.mxu0 0.0
    %142 = vmatpush1.msra.mxu0 0.0
    %143 = vmatprep.subr.mxu0 0.0
    %144 = vmatpush1.msra.mxu0 0.0
    %145 = vmatprep.subr.mxu0 0.0
    %146 = vmatpush1.msra.mxu0 0.0
    %147 = vmatprep.subr.mxu0 0.0
    %148 = vmatpush1.msra.mxu0 0.0
    %149 = vmatprep.subr.mxu0 0.0
    %150 = vmatpush1.msra.mxu0 0.0
    %151 = vmatprep.subr.mxu0 0.0
    %152 = vmatpush1.msra.mxu0 %v70
    %153 = vmatprep.subr.mxu0 0.0
    %154 = vmatpush1.msra.mxu0 %v69
    %155 = vmatprep.subr.mxu0 0.0
    %156 = vmatpush1.msra.mxu0 %v68
    %157 = vmatprep.subr.mxu0 0.0
    %158 = vmatpush1.msra.mxu0 %v67
    %159 = vmatprep.subr.mxu0 0.0
    %160 = vmatpush1.msra.mxu0 %v66
    %161 = vmatprep.subr.mxu0 0.0
    %162 = vmatpush1.msra.mxu0 %v65
    %163 = vmatprep.subr.mxu0 0.0
    %164 = vmatpush1.msra.mxu0 %v64
    %165 = vmatprep.subr.mxu0 0.0
    %166 = vmatpush1.msra.mxu0 %v63
    %167 = vmatprep.subr.mxu0 0.0
    %168 = vmatpush2.msra.mxu0 0.0
    %169 = vmatprep.subr.mxu0 0.0
    %170 = vmatpush2.msra.mxu0 0.0
    %171 = vmatprep.subr.mxu0 0.0
    %172 = vmatpush2.msra.mxu0 0.0
    %173 = vmatprep.subr.mxu0 0.0
    %174 = vmatpush2.msra.mxu0 0.0
    %175 = vmatprep.subr.mxu0 0.0
    %176 = vmatpush2.msra.mxu0 0.0
    %177 = vmatprep.subr.mxu0 0.0
    %178 = vmatpush2.msra.mxu0 0.0
    %179 = vmatprep.subr.mxu0 0.0
    %180 = vmatpush2.msra.mxu0 0.0
    %181 = vmatprep.subr.mxu0 0.0
    %182 = vmatpush2.msra.mxu0 0.0
    %183 = vmatprep.subr.mxu0 0.0
    %184 = vmatpush2.msra.mxu0 0.0
    %185 = vmatprep.subr.mxu0 0.0
    %186 = vmatpush2.msra.mxu0 0.0
    %187 = vmatprep.subr.mxu0 0.0
    %188 = vmatpush2.msra.mxu0 0.0
    %189 = vmatprep.subr.mxu0 0.0
    %190 = vmatpush2.msra.mxu0 0.0
    %191 = vmatprep.subr.mxu0 0.0
    %192 = vmatpush2.msra.mxu0 0.0
    %193 = vmatprep.subr.mxu0 0.0
    %194 = vmatpush2.msra.mxu0 0.0
    %195 = vmatprep.subr.mxu0 0.0
    %196 = vmatpush2.msra.mxu0 0.0
    %197 = vmatprep.subr.mxu0 0.0
    %198 = vmatpush2.msra.mxu0 0.0
    %199 = vmatprep.mubr.f32.mxu0 0.0
    %200 = vmatmul.mubr.f32.gmra.mxu0 %v73
    %v201 = vpop.f32.mrf.mxu0
    %v202 = vadd.f32 0.0, %v201
    %v203 = vpop.f32.mrf.mxu0
    %204 = vmatprep.mubr.f32.mxu0 0.0
    %205 = vmatmul.mubr.f32.gmra.mxu0 %v76
    %v206 = vpop.f32.mrf.mxu0
    %v207 = vadd.f32 0.0, %v206
    %v208 = vpop.f32.mrf.mxu0
    %209 = vmatprep.mubr.f32.mxu0 0.0
    %210 = vmatmul.mubr.f32.gmra.mxu0 %v79
    %v211 = vpop.f32.mrf.mxu0
    %v212 = vadd.f32 0.0, %v211
    %v213 = vpop.f32.mrf.mxu0
    %214 = vmatprep.mubr.f32.mxu0 0.0
    %215 = vmatmul.mubr.f32.gmra.mxu0 %v82
    %v216 = vpop.f32.mrf.mxu0
    %v217 = vadd.f32 0.0, %v216
    %v218 = vpop.f32.mrf.mxu0
    %219 = vmatprep.mubr.f32.mxu0 0.0
    %220 = vmatmul.mubr.f32.gmra.mxu0 %v85
    %v221 = vpop.f32.mrf.mxu0
    %v222 = vadd.f32 0.0, %v221
    %v223 = vpop.f32.mrf.mxu0
    %224 = vmatprep.mubr.f32.mxu0 0.0
    %225 = vmatmul.mubr.f32.gmra.mxu0 %v88
    %v226 = vpop.f32.mrf.mxu0
    %v227 = vadd.f32 0.0, %v226
    %v228 = vpop.f32.mrf.mxu0
    %229 = vmatprep.mubr.f32.mxu0 0.0
    %230 = vmatmul.mubr.f32.gmra.mxu0 %v91
    %v231 = vpop.f32.mrf.mxu0
    %v232 = vadd.f32 0.0, %v231
    %v233 = vpop.f32.mrf.mxu0
    %234 = vmatprep.mubr.f32.mxu0 0.0
    %235 = vmatmul.mubr.f32.gmra.mxu0 %v94
    %v236 = vpop.f32.mrf.mxu0
    %v237 = vadd.f32 0.0, %v236
    %v238 = vpop.f32.mrf.mxu0
    %239 = vmatprep.mubr.f32.mxu0 0.0
    %240 = vmatmul.mubr.f32.gmra.mxu0 %v97
    %v241 = vpop.f32.mrf.mxu0
    %v242 = vadd.f32 0.0, %v241
    %v243 = vpop.f32.mrf.mxu0
    %244 = vmatprep.mubr.f32.mxu0 0.0
    %245 = vmatmul.mubr.f32.gmra.mxu0 %v100
    %v246 = vpop.f32.mrf.mxu0
    %v247 = vadd.f32 0.0, %v246
    %v248 = vpop.f32.mrf.mxu0
    %249 = vmatprep.mubr.f32.mxu0 0.0
    %250 = vmatmul.mubr.f32.gmra.mxu0 %v103
    %v251 = vpop.f32.mrf.mxu0
    %v252 = vadd.f32 0.0, %v251
    %v253 = vpop.f32.mrf.mxu0
    %254 = vmatprep.mubr.f32.mxu0 0.0
    %255 = vmatmul.mubr.f32.gmra.mxu0 %v106
    %v256 = vpop.f32.mrf.mxu0
    %v257 = vadd.f32 0.0, %v256
    %v258 = vpop.f32.mrf.mxu0
    %259 = vmatprep.mubr.f32.mxu0 0.0
    %260 = vmatmul.mubr.f32.gmra.mxu0 %v109
    %v261 = vpop.f32.mrf.mxu0
    %v262 = vadd.f32 0.0, %v261
    %v263 = vpop.f32.mrf.mxu0
    %264 = vmatprep.mubr.f32.mxu0 0.0
    %265 = vmatmul.mubr.f32.gmra.mxu0 %v112
    %v266 = vpop.f32.mrf.mxu0
    %v267 = vadd.f32 0.0, %v266
    %v268 = vpop.f32.mrf.mxu0
    %269 = vmatprep.mubr.f32.mxu0 0.0
    %270 = vmatmul.mubr.f32.gmra.mxu0 %v115
    %v271 = vpop.f32.mrf.mxu0
    %v272 = vadd.f32 0.0, %v271
    %v273 = vpop.f32.mrf.mxu0
    %274 = vmatprep.mubr.f32.mxu0 0.0
    %275 = vmatmul.mubr.f32.gmra.mxu0 %v118
    %v276 = vpop.f32.mrf.mxu0
    %v277 = vadd.f32 0.0, %v276
    %v278 = vpop.f32.mrf.mxu0
    %279 = vmatprep.mubr.f32.mxu0 0.0
    %280 = vmatmul.mubr.f32.gmra.mxu0 %v121
    %v281 = vpop.f32.mrf.mxu0
    %v282 = vadd.f32 0.0, %v281
    %v283 = vpop.f32.mrf.mxu0
    %284 = vmatprep.mubr.f32.mxu0 0.0
    %285 = vmatmul.mubr.f32.gmra.mxu0 %v124
    %v286 = vpop.f32.mrf.mxu0
    %v287 = vadd.f32 0.0, %v286
    %v288 = vpop.f32.mrf.mxu0
    %289 = vmatprep.mubr.f32.mxu0 0.0
    %290 = vmatmul.mubr.f32.gmra.mxu0 %v127
    %v291 = vpop.f32.mrf.mxu0
    %v292 = vadd.f32 0.0, %v291
    %v293 = vpop.f32.mrf.mxu0
    %294 = vmatprep.mubr.f32.mxu0 0.0
    %295 = vmatmul.mubr.f32.gmra.mxu0 %v130
    %v296 = vpop.f32.mrf.mxu0
    %v297 = vadd.f32 0.0, %v296
    %v298 = vpop.f32.mrf.mxu0
    %299 = vmatprep.mubr.f32.mxu0 0.0
    %300 = vmatmul.mubr.f32.gmra.mxu0 %v133
    %v301 = vpop.f32.mrf.mxu0
    %v302 = vadd.f32 0.0, %v301
    %v303 = vpop.f32.mrf.mxu0
    %304 = vdwg.mxu0
    %v305 = vld [vmem:[%s2] sm:$0x1]
    %v306 = vld [vmem:[%s3] sm:$0x1]
    %vm307 = vcmask 146432
    %v308 = vsel %vm307, %v202, 0.0
    %v309 = vsel %vm307, %v207, 0.0
    %v310 = vadd.f32 %v308, %v309
    %v311 = vsel %vm307, %v212, 0.0
    %v312 = vadd.f32 %v310, %v311
    %v313 = vsel %vm307, %v217, 0.0
    %v314 = vadd.f32 %v312, %v313
    %v315 = vsel %vm307, %v222, 0.0
    %v316 = vadd.f32 %v314, %v315
    %v317 = vsel %vm307, %v227, 0.0
    %v318 = vadd.f32 %v316, %v317
    %v319 = vsel %vm307, %v232, 0.0
    %v320 = vadd.f32 %v318, %v319
    %v321 = vsel %vm307, %v237, 0.0
    %v322 = vadd.f32 %v320, %v321
    %v323 = vsel %vm307, %v242, 0.0
    %v324 = vadd.f32 %v322, %v323
    %v325 = vsel %vm307, %v247, 0.0
    %v326 = vadd.f32 %v324, %v325
    %v327 = vsel %vm307, %v252, 0.0
    %v328 = vadd.f32 %v326, %v327
    %v329 = vsel %vm307, %v257, 0.0
    %v330 = vadd.f32 %v328, %v329
    %v331 = vsel %vm307, %v262, 0.0
    %v332 = vadd.f32 %v330, %v331
    %v333 = vsel %vm307, %v267, 0.0
    %v334 = vadd.f32 %v332, %v333
    %v335 = vsel %vm307, %v272, 0.0
    %v336 = vadd.f32 %v334, %v335
    %v337 = vsel %vm307, %v277, 0.0
    %v338 = vadd.f32 %v336, %v337
    %v339 = vsel %vm307, %v282, 0.0
    %v340 = vadd.f32 %v338, %v339
    %v341 = vsel %vm307, %v287, 0.0
    %v342 = vadd.f32 %v340, %v341
    %v343 = vsel %vm307, %v292, 0.0
    %v344 = vadd.f32 %v342, %v343
    %v345 = vsel %vm307, %v297, 0.0
    %v346 = vadd.f32 %v344, %v345
    %vm347 = vcmask 140288
    %v348 = vsel %vm347, %v302, 0.0
    %v349 = vadd.f32 %v346, %v348
    %v350 = vrot.slane %v349, 4
    %v351 = vadd.f32 %v349, %v350
    %v352 = vrot.slane %v351, 2
    %v353 = vadd.f32 %v351, %v352
    %v354 = vrot.slane %v353, 1
    %v355 = vadd.f32 %v353, %v354
    %v356 = vmul.f32 %v355, 0.0061728396
    %v357 = vmul.f32 %v202, %v202
    %v358 = vmul.f32 %v207, %v207
    %v359 = vmul.f32 %v212, %v212
    %v360 = vmul.f32 %v217, %v217
    %v361 = vmul.f32 %v222, %v222
    %v362 = vmul.f32 %v227, %v227
    %v363 = vmul.f32 %v232, %v232
    %v364 = vmul.f32 %v237, %v237
    %v365 = vmul.f32 %v242, %v242
    %v366 = vmul.f32 %v247, %v247
    %v367 = vmul.f32 %v252, %v252
    %v368 = vmul.f32 %v257, %v257
    %v369 = vmul.f32 %v262, %v262
    %v370 = vmul.f32 %v267, %v267
    %v371 = vmul.f32 %v272, %v272
    %v372 = vmul.f32 %v277, %v277
    %v373 = vmul.f32 %v282, %v282
    %v374 = vmul.f32 %v287, %v287
    %v375 = vmul.f32 %v292, %v292
    %v376 = vmul.f32 %v297, %v297
    %v377 = vmul.f32 %v302, %v302
    %v378 = vsel %vm307, %v357, 0.0
    %v379 = vsel %vm307, %v358, 0.0
    %v380 = vadd.f32 %v378, %v379
    %v381 = vsel %vm307, %v359, 0.0
    %v382 = vadd.f32 %v380, %v381
    %v383 = vsel %vm307, %v360, 0.0
    %v384 = vadd.f32 %v382, %v383
    %v385 = vsel %vm307, %v361, 0.0
    %v386 = vadd.f32 %v384, %v385
    %v387 = vsel %vm307, %v362, 0.0
    %v388 = vadd.f32 %v386, %v387
    %v389 = vsel %vm307, %v363, 0.0
    %v390 = vadd.f32 %v388, %v389
    %v391 = vsel %vm307, %v364, 0.0
    %v392 = vadd.f32 %v390, %v391
    %v393 = vsel %vm307, %v365, 0.0
    %v394 = vadd.f32 %v392, %v393
    %v395 = vsel %vm307, %v366, 0.0
    %v396 = vadd.f32 %v394, %v395
    %v397 = vsel %vm307, %v367, 0.0
    %v398 = vadd.f32 %v396, %v397
    %v399 = vsel %vm307, %v368, 0.0
    %v400 = vadd.f32 %v398, %v399
    %v401 = vsel %vm307, %v369, 0.0
    %v402 = vadd.f32 %v400, %v401
    %v403 = vsel %vm307, %v370, 0.0
    %v404 = vadd.f32 %v402, %v403
    %v405 = vsel %vm307, %v371, 0.0
    %v406 = vadd.f32 %v404, %v405
    %v407 = vsel %vm307, %v372, 0.0
    %v408 = vadd.f32 %v406, %v407
    %v409 = vsel %vm307, %v373, 0.0
    %v410 = vadd.f32 %v408, %v409
    %v411 = vsel %vm307, %v374, 0.0
    %v412 = vadd.f32 %v410, %v411
    %v413 = vsel %vm307, %v375, 0.0
    %v414 = vadd.f32 %v412, %v413
    %v415 = vsel %vm307, %v376, 0.0
    %v416 = vadd.f32 %v414, %v415
    %v417 = vsel %vm347, %v377, 0.0
    %v418 = vadd.f32 %v416, %v417
    %v419 = vrot.slane %v418, 4
    %v420 = vadd.f32 %v418, %v419
    %v421 = vrot.slane %v420, 2
    %v422 = vadd.f32 %v420, %v421
    %v423 = vrot.slane %v422, 1
    %v424 = vadd.f32 %v422, %v423
    %v425 = vmul.f32 %v424, 0.0061728396
    %v426 = vmul.f32 %v356, %v356
    %v427 = vsub.f32 %v425, %v426
    %v428 = vadd.f32 %v427, 1e-05
    %v429 = vrsqrt.pop %v428
    %v430 = vmul.f32 %v305, %v429
    %v431 = vmul.f32 %v356, %v430
    %v432 = vsub.f32 %v306, %v431
    %v434 = vlaneseq
    %v435 = vshrl.u32 %v434, 7
    %v436 = vsub.s32 0, %v435
    %v437 = vrot.slane %v430, %v436
    %v439 = vmul.f32 %v202, %v437
    %v440 = vmul.f32 %v207, %v437
    %v441 = vmul.f32 %v212, %v437
    %v442 = vmul.f32 %v217, %v437
    %v443 = vmul.f32 %v222, %v437
    %v444 = vmul.f32 %v227, %v437
    %v445 = vmul.f32 %v232, %v437
    %v446 = vmul.f32 %v237, %v437
    %v447 = vmul.f32 %v242, %v437
    %v448 = vmul.f32 %v247, %v437
    %v449 = vmul.f32 %v252, %v437
    %v450 = vmul.f32 %v257, %v437
    %v451 = vmul.f32 %v262, %v437
    %v452 = vmul.f32 %v267, %v437
    %v453 = vmul.f32 %v272, %v437
    %v454 = vmul.f32 %v277, %v437
    %v455 = vmul.f32 %v282, %v437
    %v456 = vmul.f32 %v287, %v437
    %v457 = vmul.f32 %v292, %v437
    %v458 = vmul.f32 %v297, %v437
    %v459 = vmul.f32 %v302, %v437
    %v461 = vlaneseq
    %v462 = vshrl.u32 %v461, 7
    %v463 = vsub.s32 0, %v462
    %v464 = vrot.slane %v432, %v463
    %v466 = vadd.f32 %v439, %v464
    %v467 = vadd.f32 %v440, %v464
    %v468 = vadd.f32 %v441, %v464
    %v469 = vadd.f32 %v442, %v464
    %v470 = vadd.f32 %v443, %v464
    %v471 = vadd.f32 %v444, %v464
    %v472 = vadd.f32 %v445, %v464
    %v473 = vadd.f32 %v446, %v464
    %v474 = vadd.f32 %v447, %v464
    %v475 = vadd.f32 %v448, %v464
    %v476 = vadd.f32 %v449, %v464
    %v477 = vadd.f32 %v450, %v464
    %v478 = vadd.f32 %v451, %v464
    %v479 = vadd.f32 %v452, %v464
    %v480 = vadd.f32 %v453, %v464
    %v481 = vadd.f32 %v454, %v464
    %v482 = vadd.f32 %v455, %v464
    %v483 = vadd.f32 %v456, %v464
    %v484 = vadd.f32 %v457, %v464
    %v485 = vadd.f32 %v458, %v464
    %v486 = vadd.f32 %v459, %v464
    %vm487 = vcmp.ge.f32.partialorder %v466, 0.0
    %vm488 = vcmp.ge.f32.partialorder %v467, 0.0
    %vm489 = vcmp.ge.f32.partialorder %v468, 0.0
    %vm490 = vcmp.ge.f32.partialorder %v469, 0.0
    %vm491 = vcmp.ge.f32.partialorder %v470, 0.0
    %vm492 = vcmp.ge.f32.partialorder %v471, 0.0
    %vm493 = vcmp.ge.f32.partialorder %v472, 0.0
    %vm494 = vcmp.ge.f32.partialorder %v473, 0.0
    %vm495 = vcmp.ge.f32.partialorder %v474, 0.0
    %vm496 = vcmp.ge.f32.partialorder %v475, 0.0
    %vm497 = vcmp.ge.f32.partialorder %v476, 0.0
    %vm498 = vcmp.ge.f32.partialorder %v477, 0.0
    %vm499 = vcmp.ge.f32.partialorder %v478, 0.0
    %vm500 = vcmp.ge.f32.partialorder %v479, 0.0
    %vm501 = vcmp.ge.f32.partialorder %v480, 0.0
    %vm502 = vcmp.ge.f32.partialorder %v481, 0.0
    %vm503 = vcmp.ge.f32.partialorder %v482, 0.0
    %vm504 = vcmp.ge.f32.partialorder %v483, 0.0
    %vm505 = vcmp.ge.f32.partialorder %v484, 0.0
    %vm506 = vcmp.ge.f32.partialorder %v485, 0.0
    %vm507 = vcmp.ge.f32.partialorder %v486, 0.0
    %v508 = vmul.f32 %v466, 0.01
    %v509 = vmul.f32 %v467, 0.01
    %v510 = vmul.f32 %v468, 0.01
    %v511 = vmul.f32 %v469, 0.01
    %v512 = vmul.f32 %v470, 0.01
    %v513 = vmul.f32 %v471, 0.01
    %v514 = vmul.f32 %v472, 0.01
    %v515 = vmul.f32 %v473, 0.01
    %v516 = vmul.f32 %v474, 0.01
    %v517 = vmul.f32 %v475, 0.01
    %v518 = vmul.f32 %v476, 0.01
    %v519 = vmul.f32 %v477, 0.01
    %v520 = vmul.f32 %v478, 0.01
    %v521 = vmul.f32 %v479, 0.01
    %v522 = vmul.f32 %v480, 0.01
    %v523 = vmul.f32 %v481, 0.01
    %v524 = vmul.f32 %v482, 0.01
    %v525 = vmul.f32 %v483, 0.01
    %v526 = vmul.f32 %v484, 0.01
    %v527 = vmul.f32 %v485, 0.01
    %v528 = vmul.f32 %v486, 0.01
    %v529 = vsel %vm487, %v466, %v508
    %v530 = vsel %vm488, %v467, %v509
    %v531 = vsel %vm489, %v468, %v510
    %v532 = vsel %vm490, %v469, %v511
    %v533 = vsel %vm491, %v470, %v512
    %v534 = vsel %vm492, %v471, %v513
    %v535 = vsel %vm493, %v472, %v514
    %v536 = vsel %vm494, %v473, %v515
    %v537 = vsel %vm495, %v474, %v516
    %v538 = vsel %vm496, %v475, %v517
    %v539 = vsel %vm497, %v476, %v518
    %v540 = vsel %vm498, %v477, %v519
    %v541 = vsel %vm499, %v478, %v520
    %v542 = vsel %vm500, %v479, %v521
    %v543 = vsel %vm501, %v480, %v522
    %v544 = vsel %vm502, %v481, %v523
    %v545 = vsel %vm503, %v482, %v524
    %v546 = vsel %vm504, %v483, %v525
    %v547 = vsel %vm505, %v484, %v526
    %v548 = vsel %vm506, %v485, %v527
    %v549 = vsel %vm507, %v486, %v528
    %v550 = vld [vmem:[%s4] sm:$0xff]
    %v551 = vld [vmem:[%s4 + $0x8] sm:$0xff]
    %v552 = vld [vmem:[%s4 + $0x10] sm:$0xff]
    %v553 = vld [vmem:[%s4 + $0x18] sm:$0xff]
    %v554 = vld [vmem:[%s4 + $0x20] sm:$0xff]
    %v555 = vld [vmem:[%s4 + $0x28] sm:$0xff]
    %v556 = vld [vmem:[%s4 + $0x30] sm:$0xff]
    %v557 = vld [vmem:[%s4 + $0x38] sm:$0xff]
    %v558 = vld [vmem:[%s4 + $0x40] sm:$0xff]
    %v559 = vld [vmem:[%s4 + $0x48] sm:$0xff]
    %v560 = vld [vmem:[%s4 + $0x50] sm:$0xff]
    %v561 = vld [vmem:[%s4 + $0x58] sm:$0xff]
    %v562 = vld [vmem:[%s4 + $0x60] sm:$0xff]
    %v563 = vld [vmem:[%s4 + $0x68] sm:$0xff]
    %v564 = vld [vmem:[%s4 + $0x70] sm:$0xff]
    %v565 = vld [vmem:[%s4 + $0x78] sm:$0xff]
    %v566 = vld [vmem:[%s4 + $0x80] sm:$0xff]
    %v567 = vld [vmem:[%s4 + $0x88] sm:$0xff]
    %v568 = vld [vmem:[%s4 + $0x90] sm:$0xff]
    %v569 = vld [vmem:[%s4 + $0x98] sm:$0xff]
    %v570 = vld [vmem:[%s4 + $0xa0] sm:$0xff]
    %v571 = vld [vmem:[%s4 + $0xa8] sm:$0xff]
    %v572 = vld [vmem:[%s4 + $0xb0] sm:$0xff]
    %v573 = vld [vmem:[%s4 + $0xb8] sm:$0xff]
    %v574 = vld [vmem:[%s4 + $0xc0] sm:$0xff]
    %v575 = vld [vmem:[%s4 + $0xc8] sm:$0xff]
    %v576 = vld [vmem:[%s4 + $0xd0] sm:$0xff]
    %v577 = vld [vmem:[%s4 + $0xd8] sm:$0xff]
    %v578 = vld [vmem:[%s4 + $0xe0] sm:$0xff]
    %v579 = vld [vmem:[%s4 + $0xe8] sm:$0xff]
    %v580 = vld [vmem:[%s4 + $0xf0] sm:$0xff]
    %v581 = vld [vmem:[%s4 + $0xf8] sm:$0xff]
    %v582 = vld [vmem:[%s4 + $0x100] sm:$0xff]
    %v583 = vld [vmem:[%s4 + $0x108] sm:$0xff]
    %v584 = vld [vmem:[%s4 + $0x110] sm:$0xff]
    %v585 = vld [vmem:[%s4 + $0x118] sm:$0xff]
    %v586 = vld [vmem:[%s4 + $0x120] sm:$0xff]
    %v587 = vld [vmem:[%s4 + $0x128] sm:$0xff]
    %v588 = vld [vmem:[%s4 + $0x130] sm:$0xff]
    %v589 = vld [vmem:[%s4 + $0x138] sm:$0xff]
    %v590 = vld [vmem:[%s4 + $0x140] sm:$0xff]
    %v591 = vld [vmem:[%s4 + $0x148] sm:$0xff]
    %v592 = vld [vmem:[%s4 + $0x150] sm:$0xff]
    %v593 = vld [vmem:[%s4 + $0x158] sm:$0xff]
    %v594 = vld [vmem:[%s4 + $0x160] sm:$0xff]
    %v595 = vld [vmem:[%s4 + $0x168] sm:$0xff]
    %v596 = vld [vmem:[%s4 + $0x170] sm:$0xff]
    %v597 = vld [vmem:[%s4 + $0x178] sm:$0xff]
    %v598 = vld [vmem:[%s4 + $0x180] sm:$0xff]
    %v599 = vld [vmem:[%s4 + $0x188] sm:$0xff]
    %v600 = vld [vmem:[%s4 + $0x190] sm:$0xff]
    %v601 = vld [vmem:[%s4 + $0x198] sm:$0xff]
    %v602 = vld [vmem:[%s4 + $0x1a0] sm:$0xff]
    %v603 = vld [vmem:[%s4 + $0x1a8] sm:$0xff]
    %v604 = vld [vmem:[%s4 + $0x1b0] sm:$0xff]
    %v605 = vld [vmem:[%s4 + $0x1b8] sm:$0xff]
    %v606 = vld [vmem:[%s4 + $0x1c0] sm:$0xff]
    %v607 = vld [vmem:[%s4 + $0x1c8] sm:$0xff]
    %v608 = vld [vmem:[%s4 + $0x1d0] sm:$0xff]
    %v609 = vld [vmem:[%s4 + $0x1d8] sm:$0xff]
    %v610 = vld [vmem:[%s4 + $0x1e0] sm:$0xff]
    %v611 = vld [vmem:[%s4 + $0x1e8] sm:$0xff]
    %v612 = vld [vmem:[%s4 + $0x1f0] sm:$0xff]
    %v613 = vld [vmem:[%s4 + $0x1f8] sm:$0xff]
    %v614 = vld [vmem:[%s4 + $0x200] sm:$0xff]
    %v615 = vld [vmem:[%s4 + $0x208] sm:$0xff]
    %v616 = vld [vmem:[%s4 + $0x210] sm:$0xff]
    %v617 = vld [vmem:[%s4 + $0x218] sm:$0xff]
    %v618 = vld [vmem:[%s4 + $0x220] sm:$0xff]
    %v619 = vld [vmem:[%s4 + $0x228] sm:$0xff]
    %v620 = vld [vmem:[%s4 + $0x230] sm:$0xff]
    %v621 = vld [vmem:[%s4 + $0x238] sm:$0xff]
    %v622 = vld [vmem:[%s4 + $0x240] sm:$0xff]
    %v623 = vld [vmem:[%s4 + $0x248] sm:$0xff]
    %v624 = vld [vmem:[%s4 + $0x250] sm:$0xff]
    %v625 = vld [vmem:[%s4 + $0x258] sm:$0xff]
    %v626 = vld [vmem:[%s4 + $0x260] sm:$0xff]
    %v627 = vld [vmem:[%s4 + $0x268] sm:$0xff]
    %v628 = vld [vmem:[%s4 + $0x270] sm:$0xff]
    %v629 = vld [vmem:[%s4 + $0x278] sm:$0xff]
    %v630 = vld [vmem:[%s4 + $0x280] sm:$0xff]
    %v631 = vld [vmem:[%s4 + $0x288] sm:$0xff]
    %v632 = vld [vmem:[%s4 + $0x290] sm:$0xff]
    %v633 = vld [vmem:[%s4 + $0x298] sm:$0xff]
    %v634 = vld [vmem:[%s4 + $0x2a0] sm:$0xff]
    %v635 = vld [vmem:[%s4 + $0x2a8] sm:$0xff]
    %v636 = vld [vmem:[%s4 + $0x2b0] sm:$0xff]
    %v637 = vld [vmem:[%s4 + $0x2b8] sm:$0xff]
    %v638 = vld [vmem:[%s4 + $0x2c0] sm:$0xff]
    %v639 = vld [vmem:[%s4 + $0x2c8] sm:$0xff]
    %v640 = vld [vmem:[%s4 + $0x2d0] sm:$0xff]
    %v641 = vld [vmem:[%s4 + $0x2d8] sm:$0xff]
    %v642 = vld [vmem:[%s4 + $0x2e0] sm:$0xff]
    %v643 = vld [vmem:[%s4 + $0x2e8] sm:$0xff]
    %v644 = vld [vmem:[%s4 + $0x2f0] sm:$0xff]
    %v645 = vld [vmem:[%s4 + $0x2f8] sm:$0xff]
    %v646 = vld [vmem:[%s4 + $0x300] sm:$0xff]
    %v647 = vld [vmem:[%s4 + $0x308] sm:$0xff]
    %v648 = vld [vmem:[%s4 + $0x310] sm:$0xff]
    %v649 = vld [vmem:[%s4 + $0x318] sm:$0xff]
    %v650 = vld [vmem:[%s4 + $0x320] sm:$0xff]
    %v651 = vld [vmem:[%s4 + $0x328] sm:$0xff]
    %v652 = vld [vmem:[%s4 + $0x330] sm:$0xff]
    %v653 = vld [vmem:[%s4 + $0x338] sm:$0xff]
    %v654 = vld [vmem:[%s4 + $0x340] sm:$0xff]
    %v655 = vld [vmem:[%s4 + $0x348] sm:$0xff]
    %v656 = vld [vmem:[%s4 + $0x350] sm:$0xff]
    %v657 = vld [vmem:[%s4 + $0x358] sm:$0xff]
    %v658 = vld [vmem:[%s4 + $0x360] sm:$0xff]
    %v659 = vld [vmem:[%s4 + $0x368] sm:$0xff]
    %v660 = vld [vmem:[%s4 + $0x370] sm:$0xff]
    %v661 = vld [vmem:[%s4 + $0x378] sm:$0xff]
    %v662 = vunpack.c.l.bf16 %v550
    %v663 = vunpack.c.h.bf16 %v550
    %v664 = vunpack.c.l.bf16 %v551
    %v665 = vunpack.c.h.bf16 %v551
    %v666 = vunpack.c.l.bf16 %v552
    %v667 = vunpack.c.h.bf16 %v552
    %v668 = vunpack.c.l.bf16 %v553
    %v669 = vunpack.c.h.bf16 %v553
    %v670 = vunpack.c.l.bf16 %v554
    %v671 = vunpack.c.h.bf16 %v554
    %v672 = vunpack.c.l.bf16 %v555
    %v673 = vunpack.c.h.bf16 %v555
    %v674 = vunpack.c.l.bf16 %v556
    %v675 = vunpack.c.h.bf16 %v556
    %v676 = vunpack.c.l.bf16 %v557
    %v677 = vunpack.c.h.bf16 %v557
    %v678 = vunpack.c.l.bf16 %v558
    %v679 = vunpack.c.h.bf16 %v558
    %v680 = vunpack.c.l.bf16 %v559
    %v681 = vunpack.c.h.bf16 %v559
    %v682 = vunpack.c.l.bf16 %v560
    %v683 = vunpack.c.h.bf16 %v560
    %v684 = vunpack.c.l.bf16 %v561
    %v685 = vunpack.c.h.bf16 %v561
    %v686 = vunpack.c.l.bf16 %v562
    %v687 = vunpack.c.h.bf16 %v562
    %v688 = vunpack.c.l.bf16 %v563
    %v689 = vunpack.c.h.bf16 %v563
    %v690 = vunpack.c.l.bf16 %v564
    %v691 = vunpack.c.h.bf16 %v564
    %v692 = vunpack.c.l.bf16 %v565
    %v693 = vunpack.c.h.bf16 %v565
    %v694 = vunpack.c.l.bf16 %v566
    %v695 = vunpack.c.h.bf16 %v566
    %v696 = vunpack.c.l.bf16 %v567
    %v697 = vunpack.c.h.bf16 %v567
    %v698 = vunpack.c.l.bf16 %v568
    %v699 = vunpack.c.h.bf16 %v568
    %v700 = vunpack.c.l.bf16 %v569
    %v701 = vunpack.c.h.bf16 %v569
    %v702 = vunpack.c.l.bf16 %v570
    %v703 = vunpack.c.h.bf16 %v570
    %v704 = vunpack.c.l.bf16 %v571
    %v705 = vunpack.c.h.bf16 %v571
    %v706 = vunpack.c.l.bf16 %v572
    %v707 = vunpack.c.h.bf16 %v572
    %v708 = vunpack.c.l.bf16 %v573
    %v709 = vunpack.c.h.bf16 %v573
    %v710 = vunpack.c.l.bf16 %v574
    %v711 = vunpack.c.h.bf16 %v574
    %v712 = vunpack.c.l.bf16 %v575
    %v713 = vunpack.c.h.bf16 %v575
    %v714 = vunpack.c.l.bf16 %v576
    %v715 = vunpack.c.h.bf16 %v576
    %v716 = vunpack.c.l.bf16 %v577
    %v717 = vunpack.c.h.bf16 %v577
    %v718 = vunpack.c.l.bf16 %v578
    %v719 = vunpack.c.h.bf16 %v578
    %v720 = vunpack.c.l.bf16 %v579
    %v721 = vunpack.c.h.bf16 %v579
    %v722 = vunpack.c.l.bf16 %v580
    %v723 = vunpack.c.h.bf16 %v580
    %v724 = vunpack.c.l.bf16 %v581
    %v725 = vunpack.c.h.bf16 %v581
    %v726 = vunpack.c.l.bf16 %v582
    %v727 = vunpack.c.h.bf16 %v582
    %v728 = vunpack.c.l.bf16 %v583
    %v729 = vunpack.c.h.bf16 %v583
    %v730 = vunpack.c.l.bf16 %v584
    %v731 = vunpack.c.h.bf16 %v584
    %v732 = vunpack.c.l.bf16 %v585
    %v733 = vunpack.c.h.bf16 %v585
    %v734 = vunpack.c.l.bf16 %v586
    %v735 = vunpack.c.h.bf16 %v586
    %v736 = vunpack.c.l.bf16 %v587
    %v737 = vunpack.c.h.bf16 %v587
    %v738 = vunpack.c.l.bf16 %v588
    %v739 = vunpack.c.h.bf16 %v588
    %v740 = vunpack.c.l.bf16 %v589
    %v741 = vunpack.c.h.bf16 %v589
    %v742 = vunpack.c.l.bf16 %v590
    %v743 = vunpack.c.h.bf16 %v590
    %v744 = vunpack.c.l.bf16 %v591
    %v745 = vunpack.c.h.bf16 %v591
    %v746 = vunpack.c.l.bf16 %v592
    %v747 = vunpack.c.h.bf16 %v592
    %v748 = vunpack.c.l.bf16 %v593
    %v749 = vunpack.c.h.bf16 %v593
    %v750 = vunpack.c.l.bf16 %v594
    %v751 = vunpack.c.h.bf16 %v594
    %v752 = vunpack.c.l.bf16 %v595
    %v753 = vunpack.c.h.bf16 %v595
    %v754 = vunpack.c.l.bf16 %v596
    %v755 = vunpack.c.h.bf16 %v596
    %v756 = vunpack.c.l.bf16 %v597
    %v757 = vunpack.c.h.bf16 %v597
    %v758 = vunpack.c.l.bf16 %v598
    %v759 = vunpack.c.h.bf16 %v598
    %v760 = vunpack.c.l.bf16 %v599
    %v761 = vunpack.c.h.bf16 %v599
    %v762 = vunpack.c.l.bf16 %v600
    %v763 = vunpack.c.h.bf16 %v600
    %v764 = vunpack.c.l.bf16 %v601
    %v765 = vunpack.c.h.bf16 %v601
    %v766 = vunpack.c.l.bf16 %v602
    %v767 = vunpack.c.h.bf16 %v602
    %v768 = vunpack.c.l.bf16 %v603
    %v769 = vunpack.c.h.bf16 %v603
    %v770 = vunpack.c.l.bf16 %v604
    %v771 = vunpack.c.h.bf16 %v604
    %v772 = vunpack.c.l.bf16 %v605
    %v773 = vunpack.c.h.bf16 %v605
    %v774 = vunpack.c.l.bf16 %v606
    %v775 = vunpack.c.h.bf16 %v606
    %v776 = vunpack.c.l.bf16 %v607
    %v777 = vunpack.c.h.bf16 %v607
    %v778 = vunpack.c.l.bf16 %v608
    %v779 = vunpack.c.h.bf16 %v608
    %v780 = vunpack.c.l.bf16 %v609
    %v781 = vunpack.c.h.bf16 %v609
    %v782 = vunpack.c.l.bf16 %v610
    %v783 = vunpack.c.h.bf16 %v610
    %v784 = vunpack.c.l.bf16 %v611
    %v785 = vunpack.c.h.bf16 %v611
    %v786 = vunpack.c.l.bf16 %v612
    %v787 = vunpack.c.h.bf16 %v612
    %v788 = vunpack.c.l.bf16 %v613
    %v789 = vunpack.c.h.bf16 %v613
    %v790 = vunpack.c.l.bf16 %v614
    %v791 = vunpack.c.h.bf16 %v614
    %v792 = vunpack.c.l.bf16 %v615
    %v793 = vunpack.c.h.bf16 %v615
    %v794 = vunpack.c.l.bf16 %v616
    %v795 = vunpack.c.h.bf16 %v616
    %v796 = vunpack.c.l.bf16 %v617
    %v797 = vunpack.c.h.bf16 %v617
    %v798 = vunpack.c.l.bf16 %v618
    %v799 = vunpack.c.h.bf16 %v618
    %v800 = vunpack.c.l.bf16 %v619
    %v801 = vunpack.c.h.bf16 %v619
    %v802 = vunpack.c.l.bf16 %v620
    %v803 = vunpack.c.h.bf16 %v620
    %v804 = vunpack.c.l.bf16 %v621
    %v805 = vunpack.c.h.bf16 %v621
    %v806 = vunpack.c.l.bf16 %v622
    %v807 = vunpack.c.h.bf16 %v622
    %v808 = vunpack.c.l.bf16 %v623
    %v809 = vunpack.c.h.bf16 %v623
    %v810 = vunpack.c.l.bf16 %v624
    %v811 = vunpack.c.h.bf16 %v624
    %v812 = vunpack.c.l.bf16 %v625
    %v813 = vunpack.c.h.bf16 %v625
    %v814 = vunpack.c.l.bf16 %v626
    %v815 = vunpack.c.h.bf16 %v626
    %v816 = vunpack.c.l.bf16 %v627
    %v817 = vunpack.c.h.bf16 %v627
    %v818 = vunpack.c.l.bf16 %v628
    %v819 = vunpack.c.h.bf16 %v628
    %v820 = vunpack.c.l.bf16 %v629
    %v821 = vunpack.c.h.bf16 %v629
    %v822 = vunpack.c.l.bf16 %v630
    %v823 = vunpack.c.h.bf16 %v630
    %v824 = vunpack.c.l.bf16 %v631
    %v825 = vunpack.c.h.bf16 %v631
    %v826 = vunpack.c.l.bf16 %v632
    %v827 = vunpack.c.h.bf16 %v632
    %v828 = vunpack.c.l.bf16 %v633
    %v829 = vunpack.c.h.bf16 %v633
    %v830 = vunpack.c.l.bf16 %v634
    %v831 = vunpack.c.h.bf16 %v634
    %v832 = vunpack.c.l.bf16 %v635
    %v833 = vunpack.c.h.bf16 %v635
    %v834 = vunpack.c.l.bf16 %v636
    %v835 = vunpack.c.h.bf16 %v636
    %v836 = vunpack.c.l.bf16 %v637
    %v837 = vunpack.c.h.bf16 %v637
    %v838 = vunpack.c.l.bf16 %v638
    %v839 = vunpack.c.h.bf16 %v638
    %v840 = vunpack.c.l.bf16 %v639
    %v841 = vunpack.c.h.bf16 %v639
    %v842 = vunpack.c.l.bf16 %v640
    %v843 = vunpack.c.h.bf16 %v640
    %v844 = vunpack.c.l.bf16 %v641
    %v845 = vunpack.c.h.bf16 %v641
    %v846 = vunpack.c.l.bf16 %v642
    %v847 = vunpack.c.h.bf16 %v642
    %v848 = vunpack.c.l.bf16 %v643
    %v849 = vunpack.c.h.bf16 %v643
    %v850 = vunpack.c.l.bf16 %v644
    %v851 = vunpack.c.h.bf16 %v644
    %v852 = vunpack.c.l.bf16 %v645
    %v853 = vunpack.c.h.bf16 %v645
    %v854 = vunpack.c.l.bf16 %v646
    %v855 = vunpack.c.h.bf16 %v646
    %v856 = vunpack.c.l.bf16 %v647
    %v857 = vunpack.c.h.bf16 %v647
    %v858 = vunpack.c.l.bf16 %v648
    %v859 = vunpack.c.h.bf16 %v648
    %v860 = vunpack.c.l.bf16 %v649
    %v861 = vunpack.c.h.bf16 %v649
    %v862 = vunpack.c.l.bf16 %v650
    %v863 = vunpack.c.h.bf16 %v650
    %v864 = vunpack.c.l.bf16 %v651
    %v865 = vunpack.c.h.bf16 %v651
    %v866 = vunpack.c.l.bf16 %v652
    %v867 = vunpack.c.h.bf16 %v652
    %v868 = vunpack.c.l.bf16 %v653
    %v869 = vunpack.c.h.bf16 %v653
    %v870 = vunpack.c.l.bf16 %v654
    %v871 = vunpack.c.h.bf16 %v654
    %v872 = vunpack.c.l.bf16 %v655
    %v873 = vunpack.c.h.bf16 %v655
    %v874 = vunpack.c.l.bf16 %v656
    %v875 = vunpack.c.h.bf16 %v656
    %v876 = vunpack.c.l.bf16 %v657
    %v877 = vunpack.c.h.bf16 %v657
    %v878 = vunpack.c.l.bf16 %v658
    %v879 = vunpack.c.h.bf16 %v658
    %v880 = vunpack.c.l.bf16 %v659
    %v881 = vunpack.c.h.bf16 %v659
    %v882 = vunpack.c.l.bf16 %v660
    %v883 = vunpack.c.h.bf16 %v660
    %v884 = vunpack.c.l.bf16 %v661
    %v885 = vunpack.c.h.bf16 %v661
    %vm886 = vcmask 277504
    %v888 = vsel %vm886, %v663, 0
    %v891 = vsel %vm886, %v665, 0
    %v894 = vsel %vm886, %v667, 0
    %v897 = vsel %vm886, %v669, 0
    %v900 = vsel %vm886, %v671, 0
    %v903 = vsel %vm886, %v673, 0
    %v906 = vsel %vm886, %v675, 0
    %v909 = vsel %vm886, %v677, 0
    %v912 = vsel %vm886, %v679, 0
    %v915 = vsel %vm886, %v681, 0
    %v918 = vsel %vm886, %v683, 0
    %v921 = vsel %vm886, %v685, 0
    %v924 = vsel %vm886, %v687, 0
    %v927 = vsel %vm886, %v689, 0
    %v930 = vsel %vm886, %v691, 0
    %v933 = vsel %vm886, %v693, 0
    %v936 = vsel %vm886, %v695, 0
    %v939 = vsel %vm886, %v697, 0
    %v942 = vsel %vm886, %v699, 0
    %v945 = vsel %vm886, %v701, 0
    %v948 = vsel %vm886, %v703, 0
    %v951 = vsel %vm886, %v705, 0
    %v954 = vsel %vm886, %v707, 0
    %v957 = vsel %vm886, %v709, 0
    %v960 = vsel %vm886, %v711, 0
    %v963 = vsel %vm886, %v713, 0
    %v966 = vsel %vm886, %v715, 0
    %v969 = vsel %vm886, %v717, 0
    %v972 = vsel %vm886, %v719, 0
    %v975 = vsel %vm886, %v721, 0
    %v978 = vsel %vm886, %v723, 0
    %v981 = vsel %vm886, %v725, 0
    %v984 = vsel %vm886, %v727, 0
    %v987 = vsel %vm886, %v729, 0
    %v990 = vsel %vm886, %v731, 0
    %v993 = vsel %vm886, %v733, 0
    %v996 = vsel %vm886, %v735, 0
    %v999 = vsel %vm886, %v737, 0
    %v1002 = vsel %vm886, %v739, 0
    %v1005 = vsel %vm886, %v741, 0
    %v1008 = vsel %vm886, %v743, 0
    %v1011 = vsel %vm886, %v745, 0
    %v1014 = vsel %vm886, %v747, 0
    %v1017 = vsel %vm886, %v749, 0
    %v1020 = vsel %vm886, %v751, 0
    %v1023 = vsel %vm886, %v753, 0
    %v1026 = vsel %vm886, %v755, 0
    %v1029 = vsel %vm886, %v757, 0
    %v1032 = vsel %vm886, %v759, 0
    %v1035 = vsel %vm886, %v761, 0
    %v1038 = vsel %vm886, %v763, 0
    %v1041 = vsel %vm886, %v765, 0
    %v1044 = vsel %vm886, %v767, 0
    %v1047 = vsel %vm886, %v769, 0
    %v1050 = vsel %vm886, %v771, 0
    %v1053 = vsel %vm886, %v773, 0
    %v1056 = vsel %vm886, %v775, 0
    %v1059 = vsel %vm886, %v777, 0
    %v1062 = vsel %vm886, %v779, 0
    %v1065 = vsel %vm886, %v781, 0
    %v1068 = vsel %vm886, %v783, 0
    %v1071 = vsel %vm886, %v785, 0
    %v1074 = vsel %vm886, %v787, 0
    %v1077 = vsel %vm886, %v789, 0
    %v1080 = vsel %vm886, %v791, 0
    %v1083 = vsel %vm886, %v793, 0
    %v1086 = vsel %vm886, %v795, 0
    %v1089 = vsel %vm886, %v797, 0
    %v1092 = vsel %vm886, %v799, 0
    %v1095 = vsel %vm886, %v801, 0
    %v1098 = vsel %vm886, %v803, 0
    %v1101 = vsel %vm886, %v805, 0
    %v1104 = vsel %vm886, %v807, 0
    %v1107 = vsel %vm886, %v809, 0
    %v1110 = vsel %vm886, %v811, 0
    %v1113 = vsel %vm886, %v813, 0
    %v1116 = vsel %vm886, %v815, 0
    %v1119 = vsel %vm886, %v817, 0
    %v1122 = vsel %vm886, %v819, 0
    %v1125 = vsel %vm886, %v821, 0
    %v1128 = vsel %vm886, %v823, 0
    %v1131 = vsel %vm886, %v825, 0
    %v1134 = vsel %vm886, %v827, 0
    %v1137 = vsel %vm886, %v829, 0
    %v1140 = vsel %vm886, %v831, 0
    %v1143 = vsel %vm886, %v833, 0
    %v1146 = vsel %vm886, %v835, 0
    %v1149 = vsel %vm886, %v837, 0
    %v1152 = vsel %vm886, %v839, 0
    %v1155 = vsel %vm886, %v841, 0
    %v1158 = vsel %vm886, %v843, 0
    %v1161 = vsel %vm886, %v845, 0
    %v1164 = vsel %vm886, %v847, 0
    %v1167 = vsel %vm886, %v849, 0
    %v1170 = vsel %vm886, %v851, 0
    %v1173 = vsel %vm886, %v853, 0
    %v1176 = vsel %vm886, %v855, 0
    %v1179 = vsel %vm886, %v857, 0
    %v1182 = vsel %vm886, %v859, 0
    %v1185 = vsel %vm886, %v861, 0
    %v1188 = vsel %vm886, %v863, 0
    %v1191 = vsel %vm886, %v865, 0
    %v1194 = vsel %vm886, %v867, 0
    %v1197 = vsel %vm886, %v869, 0
    %v1200 = vsel %vm886, %v871, 0
    %v1203 = vsel %vm886, %v873, 0
    %v1206 = vsel %vm886, %v875, 0
    %v1209 = vsel %vm886, %v877, 0
    %v1212 = vsel %vm886, %v879, 0
    %v1215 = vsel %vm886, %v881, 0
    %v1218 = vsel %vm886, %v883, 0
    %v1221 = vsel %vm886, %v885, 0
    %vm1223 = vcmask 1041408
    %v1225 = vsel %vm1223, %v549, 0
    %1227 = vmatprep.subr.mxu0 0.0
    %1228 = vmatpush1.msra.mxu0 %v544
    %1229 = vmatprep.subr.mxu0 0.0
    %1230 = vmatpush1.msra.mxu0 %v543
    %1231 = vmatprep.subr.mxu0 0.0
    %1232 = vmatpush1.msra.mxu0 %v542
    %1233 = vmatprep.subr.mxu0 0.0
    %1234 = vmatpush1.msra.mxu0 %v541
    %1235 = vmatprep.subr.mxu0 0.0
    %1236 = vmatpush1.msra.mxu0 %v540
    %1237 = vmatprep.subr.mxu0 0.0
    %1238 = vmatpush1.msra.mxu0 %v539
    %1239 = vmatprep.subr.mxu0 0.0
    %1240 = vmatpush1.msra.mxu0 %v538
    %1241 = vmatprep.subr.mxu0 0.0
    %1242 = vmatpush1.msra.mxu0 %v537
    %1243 = vmatprep.subr.mxu0 0.0
    %1244 = vmatpush1.msra.mxu0 %v536
    %1245 = vmatprep.subr.mxu0 0.0
    %1246 = vmatpush1.msra.mxu0 %v535
    %1247 = vmatprep.subr.mxu0 0.0
    %1248 = vmatpush1.msra.mxu0 %v534
    %1249 = vmatprep.subr.mxu0 0.0
    %1250 = vmatpush1.msra.mxu0 %v533
    %1251 = vmatprep.subr.mxu0 0.0
    %1252 = vmatpush1.msra.mxu0 %v532
    %1253 = vmatprep.subr.mxu0 0.0
    %1254 = vmatpush1.msra.mxu0 %v531
    %1255 = vmatprep.subr.mxu0 0.0
    %1256 = vmatpush1.msra.mxu0 %v530
    %1257 = vmatprep.subr.mxu0 0.0
    %1258 = vmatpush1.msra.mxu0 %v529
    %1259 = vmatprep.subr.mxu0 0.0
    %1260 = vmatpush2.msra.mxu0 0.0
    %1261 = vmatprep.subr.mxu0 0.0
    %1262 = vmatpush2.msra.mxu0 0.0
    %1263 = vmatprep.subr.mxu0 0.0
    %1264 = vmatpush2.msra.mxu0 0.0
    %1265 = vmatprep.subr.mxu0 0.0
    %1266 = vmatpush2.msra.mxu0 0.0
    %1267 = vmatprep.subr.mxu0 0.0
    %1268 = vmatpush2.msra.mxu0 0.0
    %1269 = vmatprep.subr.mxu0 0.0
    %1270 = vmatpush2.msra.mxu0 0.0
    %1271 = vmatprep.subr.mxu0 0.0
    %1272 = vmatpush2.msra.mxu0 0.0
    %1273 = vmatprep.subr.mxu0 0.0
    %1274 = vmatpush2.msra.mxu0 0.0
    %1275 = vmatprep.subr.mxu0 0.0
    %1276 = vmatpush2.msra.mxu0 0.0
    %1277 = vmatprep.subr.mxu0 0.0
    %1278 = vmatpush2.msra.mxu0 0.0
    %1279 = vmatprep.subr.mxu0 0.0
    %1280 = vmatpush2.msra.mxu0 0.0
    %1281 = vmatprep.subr.mxu0 0.0
    %1282 = vmatpush2.msra.mxu0 %v1225
    %1283 = vmatprep.subr.mxu0 0.0
    %1284 = vmatpush2.msra.mxu0 %v548
    %1285 = vmatprep.subr.mxu0 0.0
    %1286 = vmatpush2.msra.mxu0 %v547
    %1287 = vmatprep.subr.mxu0 0.0
    %1288 = vmatpush2.msra.mxu0 %v546
    %1289 = vmatprep.subr.mxu0 0.0
    %1290 = vmatpush2.msra.mxu0 %v545
    %1291 = vmatprep.mubr.f32.mxu0 %v888
    %1292 = vmatmul.mubr.f32.gmra.mxu0 %v662
    %v1293 = vpop.f32.mrf.mxu0
    %v1294 = vadd.f32 0.0, %v1293
    %v1295 = vpop.f32.mrf.mxu0
    %1296 = vmatprep.mubr.f32.mxu0 %v891
    %1297 = vmatmul.mubr.f32.gmra.mxu0 %v664
    %v1298 = vpop.f32.mrf.mxu0
    %v1299 = vadd.f32 0.0, %v1298
    %v1300 = vpop.f32.mrf.mxu0
    %1301 = vmatprep.mubr.f32.mxu0 %v894
    %1302 = vmatmul.mubr.f32.gmra.mxu0 %v666
    %v1303 = vpop.f32.mrf.mxu0
    %v1304 = vadd.f32 0.0, %v1303
    %v1305 = vpop.f32.mrf.mxu0
    %1306 = vmatprep.mubr.f32.mxu0 %v897
    %1307 = vmatmul.mubr.f32.gmra.mxu0 %v668
    %v1308 = vpop.f32.mrf.mxu0
    %v1309 = vadd.f32 0.0, %v1308
    %v1310 = vpop.f32.mrf.mxu0
    %1311 = vmatprep.mubr.f32.mxu0 %v900
    %1312 = vmatmul.mubr.f32.gmra.mxu0 %v670
    %v1313 = vpop.f32.mrf.mxu0
    %v1314 = vadd.f32 0.0, %v1313
    %v1315 = vpop.f32.mrf.mxu0
    %1316 = vmatprep.mubr.f32.mxu0 %v903
    %1317 = vmatmul.mubr.f32.gmra.mxu0 %v672
    %v1318 = vpop.f32.mrf.mxu0
    %v1319 = vadd.f32 0.0, %v1318
    %v1320 = vpop.f32.mrf.mxu0
    %1321 = vmatprep.mubr.f32.mxu0 %v906
    %1322 = vmatmul.mubr.f32.gmra.mxu0 %v674
    %v1323 = vpop.f32.mrf.mxu0
    %v1324 = vadd.f32 0.0, %v1323
    %v1325 = vpop.f32.mrf.mxu0
    %1326 = vmatprep.mubr.f32.mxu0 %v909
    %1327 = vmatmul.mubr.f32.gmra.mxu0 %v676
    %v1328 = vpop.f32.mrf.mxu0
    %v1329 = vadd.f32 0.0, %v1328
    %v1330 = vpop.f32.mrf.mxu0
    %1331 = vmatprep.mubr.f32.mxu0 %v912
    %1332 = vmatmul.mubr.f32.gmra.mxu0 %v678
    %v1333 = vpop.f32.mrf.mxu0
    %v1334 = vadd.f32 0.0, %v1333
    %v1335 = vpop.f32.mrf.mxu0
    %1336 = vmatprep.mubr.f32.mxu0 %v915
    %1337 = vmatmul.mubr.f32.gmra.mxu0 %v680
    %v1338 = vpop.f32.mrf.mxu0
    %v1339 = vadd.f32 0.0, %v1338
    %v1340 = vpop.f32.mrf.mxu0
    %1341 = vmatprep.mubr.f32.mxu0 %v918
    %1342 = vmatmul.mubr.f32.gmra.mxu0 %v682
    %v1343 = vpop.f32.mrf.mxu0
    %v1344 = vadd.f32 0.0, %v1343
    %v1345 = vpop.f32.mrf.mxu0
    %1346 = vmatprep.mubr.f32.mxu0 %v921
    %1347 = vmatmul.mubr.f32.gmra.mxu0 %v684
    %v1348 = vpop.f32.mrf.mxu0
    %v1349 = vadd.f32 0.0, %v1348
    %v1350 = vpop.f32.mrf.mxu0
    %1351 = vmatprep.mubr.f32.mxu0 %v924
    %1352 = vmatmul.mubr.f32.gmra.mxu0 %v686
    %v1353 = vpop.f32.mrf.mxu0
    %v1354 = vadd.f32 0.0, %v1353
    %v1355 = vpop.f32.mrf.mxu0
    %1356 = vmatprep.mubr.f32.mxu0 %v927
    %1357 = vmatmul.mubr.f32.gmra.mxu0 %v688
    %v1358 = vpop.f32.mrf.mxu0
    %v1359 = vadd.f32 0.0, %v1358
    %v1360 = vpop.f32.mrf.mxu0
    %1361 = vmatprep.mubr.f32.mxu0 %v930
    %1362 = vmatmul.mubr.f32.gmra.mxu0 %v690
    %v1363 = vpop.f32.mrf.mxu0
    %v1364 = vadd.f32 0.0, %v1363
    %v1365 = vpop.f32.mrf.mxu0
    %1366 = vmatprep.mubr.f32.mxu0 %v933
    %1367 = vmatmul.mubr.f32.gmra.mxu0 %v692
    %v1368 = vpop.f32.mrf.mxu0
    %v1369 = vadd.f32 0.0, %v1368
    %v1370 = vpop.f32.mrf.mxu0
    %1371 = vmatprep.mubr.f32.mxu0 %v936
    %1372 = vmatmul.mubr.f32.gmra.mxu0 %v694
    %v1373 = vpop.f32.mrf.mxu0
    %v1374 = vadd.f32 0.0, %v1373
    %v1375 = vpop.f32.mrf.mxu0
    %1376 = vmatprep.mubr.f32.mxu0 %v939
    %1377 = vmatmul.mubr.f32.gmra.mxu0 %v696
    %v1378 = vpop.f32.mrf.mxu0
    %v1379 = vadd.f32 0.0, %v1378
    %v1380 = vpop.f32.mrf.mxu0
    %1381 = vmatprep.mubr.f32.mxu0 %v942
    %1382 = vmatmul.mubr.f32.gmra.mxu0 %v698
    %v1383 = vpop.f32.mrf.mxu0
    %v1384 = vadd.f32 0.0, %v1383
    %v1385 = vpop.f32.mrf.mxu0
    %1386 = vmatprep.mubr.f32.mxu0 %v945
    %1387 = vmatmul.mubr.f32.gmra.mxu0 %v700
    %v1388 = vpop.f32.mrf.mxu0
    %v1389 = vadd.f32 0.0, %v1388
    %v1390 = vpop.f32.mrf.mxu0
    %1391 = vmatprep.mubr.f32.mxu0 %v948
    %1392 = vmatmul.mubr.f32.gmra.mxu0 %v702
    %v1393 = vpop.f32.mrf.mxu0
    %v1394 = vadd.f32 0.0, %v1393
    %v1395 = vpop.f32.mrf.mxu0
    %1396 = vmatprep.mubr.f32.mxu0 %v951
    %1397 = vmatmul.mubr.f32.gmra.mxu0 %v704
    %v1398 = vpop.f32.mrf.mxu0
    %v1399 = vadd.f32 0.0, %v1398
    %v1400 = vpop.f32.mrf.mxu0
    %1401 = vmatprep.mubr.f32.mxu0 %v954
    %1402 = vmatmul.mubr.f32.gmra.mxu0 %v706
    %v1403 = vpop.f32.mrf.mxu0
    %v1404 = vadd.f32 0.0, %v1403
    %v1405 = vpop.f32.mrf.mxu0
    %1406 = vmatprep.mubr.f32.mxu0 %v957
    %1407 = vmatmul.mubr.f32.gmra.mxu0 %v708
    %v1408 = vpop.f32.mrf.mxu0
    %v1409 = vadd.f32 0.0, %v1408
    %v1410 = vpop.f32.mrf.mxu0
    %1411 = vmatprep.mubr.f32.mxu0 %v960
    %1412 = vmatmul.mubr.f32.gmra.mxu0 %v710
    %v1413 = vpop.f32.mrf.mxu0
    %v1414 = vadd.f32 0.0, %v1413
    %v1415 = vpop.f32.mrf.mxu0
    %1416 = vmatprep.mubr.f32.mxu0 %v963
    %1417 = vmatmul.mubr.f32.gmra.mxu0 %v712
    %v1418 = vpop.f32.mrf.mxu0
    %v1419 = vadd.f32 0.0, %v1418
    %v1420 = vpop.f32.mrf.mxu0
    %1421 = vmatprep.mubr.f32.mxu0 %v966
    %1422 = vmatmul.mubr.f32.gmra.mxu0 %v714
    %v1423 = vpop.f32.mrf.mxu0
    %v1424 = vadd.f32 0.0, %v1423
    %v1425 = vpop.f32.mrf.mxu0
    %1426 = vmatprep.mubr.f32.mxu0 %v969
    %1427 = vmatmul.mubr.f32.gmra.mxu0 %v716
    %v1428 = vpop.f32.mrf.mxu0
    %v1429 = vadd.f32 0.0, %v1428
    %v1430 = vpop.f32.mrf.mxu0
    %1431 = vmatprep.mubr.f32.mxu0 %v972
    %1432 = vmatmul.mubr.f32.gmra.mxu0 %v718
    %v1433 = vpop.f32.mrf.mxu0
    %v1434 = vadd.f32 0.0, %v1433
    %v1435 = vpop.f32.mrf.mxu0
    %1436 = vmatprep.mubr.f32.mxu0 %v975
    %1437 = vmatmul.mubr.f32.gmra.mxu0 %v720
    %v1438 = vpop.f32.mrf.mxu0
    %v1439 = vadd.f32 0.0, %v1438
    %v1440 = vpop.f32.mrf.mxu0
    %1441 = vmatprep.mubr.f32.mxu0 %v978
    %1442 = vmatmul.mubr.f32.gmra.mxu0 %v722
    %v1443 = vpop.f32.mrf.mxu0
    %v1444 = vadd.f32 0.0, %v1443
    %v1445 = vpop.f32.mrf.mxu0
    %1446 = vmatprep.mubr.f32.mxu0 %v981
    %1447 = vmatmul.mubr.f32.gmra.mxu0 %v724
    %v1448 = vpop.f32.mrf.mxu0
    %v1449 = vadd.f32 0.0, %v1448
    %v1450 = vpop.f32.mrf.mxu0
    %1451 = vmatprep.mubr.f32.mxu0 %v984
    %1452 = vmatmul.mubr.f32.gmra.mxu0 %v726
    %v1453 = vpop.f32.mrf.mxu0
    %v1454 = vadd.f32 0.0, %v1453
    %v1455 = vpop.f32.mrf.mxu0
    %1456 = vmatprep.mubr.f32.mxu0 %v987
    %1457 = vmatmul.mubr.f32.gmra.mxu0 %v728
    %v1458 = vpop.f32.mrf.mxu0
    %v1459 = vadd.f32 0.0, %v1458
    %v1460 = vpop.f32.mrf.mxu0
    %1461 = vmatprep.mubr.f32.mxu0 %v990
    %1462 = vmatmul.mubr.f32.gmra.mxu0 %v730
    %v1463 = vpop.f32.mrf.mxu0
    %v1464 = vadd.f32 0.0, %v1463
    %v1465 = vpop.f32.mrf.mxu0
    %1466 = vmatprep.mubr.f32.mxu0 %v993
    %1467 = vmatmul.mubr.f32.gmra.mxu0 %v732
    %v1468 = vpop.f32.mrf.mxu0
    %v1469 = vadd.f32 0.0, %v1468
    %v1470 = vpop.f32.mrf.mxu0
    %1471 = vmatprep.mubr.f32.mxu0 %v996
    %1472 = vmatmul.mubr.f32.gmra.mxu0 %v734
    %v1473 = vpop.f32.mrf.mxu0
    %v1474 = vadd.f32 0.0, %v1473
    %v1475 = vpop.f32.mrf.mxu0
    %1476 = vmatprep.mubr.f32.mxu0 %v999
    %1477 = vmatmul.mubr.f32.gmra.mxu0 %v736
    %v1478 = vpop.f32.mrf.mxu0
    %v1479 = vadd.f32 0.0, %v1478
    %v1480 = vpop.f32.mrf.mxu0
    %1481 = vmatprep.mubr.f32.mxu0 %v1002
    %1482 = vmatmul.mubr.f32.gmra.mxu0 %v738
    %v1483 = vpop.f32.mrf.mxu0
    %v1484 = vadd.f32 0.0, %v1483
    %v1485 = vpop.f32.mrf.mxu0
    %1486 = vmatprep.mubr.f32.mxu0 %v1005
    %1487 = vmatmul.mubr.f32.gmra.mxu0 %v740
    %v1488 = vpop.f32.mrf.mxu0
    %v1489 = vadd.f32 0.0, %v1488
    %v1490 = vpop.f32.mrf.mxu0
    %1491 = vmatprep.mubr.f32.mxu0 %v1008
    %1492 = vmatmul.mubr.f32.gmra.mxu0 %v742
    %v1493 = vpop.f32.mrf.mxu0
    %v1494 = vadd.f32 0.0, %v1493
    %v1495 = vpop.f32.mrf.mxu0
    %1496 = vmatprep.mubr.f32.mxu0 %v1011
    %1497 = vmatmul.mubr.f32.gmra.mxu0 %v744
    %v1498 = vpop.f32.mrf.mxu0
    %v1499 = vadd.f32 0.0, %v1498
    %v1500 = vpop.f32.mrf.mxu0
    %1501 = vmatprep.mubr.f32.mxu0 %v1014
    %1502 = vmatmul.mubr.f32.gmra.mxu0 %v746
    %v1503 = vpop.f32.mrf.mxu0
    %v1504 = vadd.f32 0.0, %v1503
    %v1505 = vpop.f32.mrf.mxu0
    %1506 = vmatprep.mubr.f32.mxu0 %v1017
    %1507 = vmatmul.mubr.f32.gmra.mxu0 %v748
    %v1508 = vpop.f32.mrf.mxu0
    %v1509 = vadd.f32 0.0, %v1508
    %v1510 = vpop.f32.mrf.mxu0
    %1511 = vmatprep.mubr.f32.mxu0 %v1020
    %1512 = vmatmul.mubr.f32.gmra.mxu0 %v750
    %v1513 = vpop.f32.mrf.mxu0
    %v1514 = vadd.f32 0.0, %v1513
    %v1515 = vpop.f32.mrf.mxu0
    %1516 = vmatprep.mubr.f32.mxu0 %v1023
    %1517 = vmatmul.mubr.f32.gmra.mxu0 %v752
    %v1518 = vpop.f32.mrf.mxu0
    %v1519 = vadd.f32 0.0, %v1518
    %v1520 = vpop.f32.mrf.mxu0
    %1521 = vmatprep.mubr.f32.mxu0 %v1026
    %1522 = vmatmul.mubr.f32.gmra.mxu0 %v754
    %v1523 = vpop.f32.mrf.mxu0
    %v1524 = vadd.f32 0.0, %v1523
    %v1525 = vpop.f32.mrf.mxu0
    %1526 = vmatprep.mubr.f32.mxu0 %v1029
    %1527 = vmatmul.mubr.f32.gmra.mxu0 %v756
    %v1528 = vpop.f32.mrf.mxu0
    %v1529 = vadd.f32 0.0, %v1528
    %v1530 = vpop.f32.mrf.mxu0
    %1531 = vmatprep.mubr.f32.mxu0 %v1032
    %1532 = vmatmul.mubr.f32.gmra.mxu0 %v758
    %v1533 = vpop.f32.mrf.mxu0
    %v1534 = vadd.f32 0.0, %v1533
    %v1535 = vpop.f32.mrf.mxu0
    %1536 = vmatprep.mubr.f32.mxu0 %v1035
    %1537 = vmatmul.mubr.f32.gmra.mxu0 %v760
    %v1538 = vpop.f32.mrf.mxu0
    %v1539 = vadd.f32 0.0, %v1538
    %v1540 = vpop.f32.mrf.mxu0
    %1541 = vmatprep.mubr.f32.mxu0 %v1038
    %1542 = vmatmul.mubr.f32.gmra.mxu0 %v762
    %v1543 = vpop.f32.mrf.mxu0
    %v1544 = vadd.f32 0.0, %v1543
    %v1545 = vpop.f32.mrf.mxu0
    %1546 = vmatprep.mubr.f32.mxu0 %v1041
    %1547 = vmatmul.mubr.f32.gmra.mxu0 %v764
    %v1548 = vpop.f32.mrf.mxu0
    %v1549 = vadd.f32 0.0, %v1548
    %v1550 = vpop.f32.mrf.mxu0
    %1551 = vmatprep.mubr.f32.mxu0 %v1044
    %1552 = vmatmul.mubr.f32.gmra.mxu0 %v766
    %v1553 = vpop.f32.mrf.mxu0
    %v1554 = vadd.f32 0.0, %v1553
    %v1555 = vpop.f32.mrf.mxu0
    %1556 = vmatprep.mubr.f32.mxu0 %v1047
    %1557 = vmatmul.mubr.f32.gmra.mxu0 %v768
    %v1558 = vpop.f32.mrf.mxu0
    %v1559 = vadd.f32 0.0, %v1558
    %v1560 = vpop.f32.mrf.mxu0
    %1561 = vmatprep.mubr.f32.mxu0 %v1050
    %1562 = vmatmul.mubr.f32.gmra.mxu0 %v770
    %v1563 = vpop.f32.mrf.mxu0
    %v1564 = vadd.f32 0.0, %v1563
    %v1565 = vpop.f32.mrf.mxu0
    %1566 = vmatprep.mubr.f32.mxu0 %v1053
    %1567 = vmatmul.mubr.f32.gmra.mxu0 %v772
    %v1568 = vpop.f32.mrf.mxu0
    %v1569 = vadd.f32 0.0, %v1568
    %v1570 = vpop.f32.mrf.mxu0
    %1571 = vmatprep.mubr.f32.mxu0 %v1056
    %1572 = vmatmul.mubr.f32.gmra.mxu0 %v774
    %v1573 = vpop.f32.mrf.mxu0
    %v1574 = vadd.f32 0.0, %v1573
    %v1575 = vpop.f32.mrf.mxu0
    %1576 = vmatprep.mubr.f32.mxu0 %v1059
    %1577 = vmatmul.mubr.f32.gmra.mxu0 %v776
    %v1578 = vpop.f32.mrf.mxu0
    %v1579 = vadd.f32 0.0, %v1578
    %v1580 = vpop.f32.mrf.mxu0
    %1581 = vmatprep.mubr.f32.mxu0 %v1062
    %1582 = vmatmul.mubr.f32.gmra.mxu0 %v778
    %v1583 = vpop.f32.mrf.mxu0
    %v1584 = vadd.f32 0.0, %v1583
    %v1585 = vpop.f32.mrf.mxu0
    %1586 = vmatprep.mubr.f32.mxu0 %v1065
    %1587 = vmatmul.mubr.f32.gmra.mxu0 %v780
    %v1588 = vpop.f32.mrf.mxu0
    %v1589 = vadd.f32 0.0, %v1588
    %v1590 = vpop.f32.mrf.mxu0
    %1591 = vmatprep.mubr.f32.mxu0 %v1068
    %1592 = vmatmul.mubr.f32.gmra.mxu0 %v782
    %v1593 = vpop.f32.mrf.mxu0
    %v1594 = vadd.f32 0.0, %v1593
    %v1595 = vpop.f32.mrf.mxu0
    %1596 = vmatprep.mubr.f32.mxu0 %v1071
    %1597 = vmatmul.mubr.f32.gmra.mxu0 %v784
    %v1598 = vpop.f32.mrf.mxu0
    %v1599 = vadd.f32 0.0, %v1598
    %v1600 = vpop.f32.mrf.mxu0
    %1601 = vmatprep.mubr.f32.mxu0 %v1074
    %1602 = vmatmul.mubr.f32.gmra.mxu0 %v786
    %v1603 = vpop.f32.mrf.mxu0
    %v1604 = vadd.f32 0.0, %v1603
    %v1605 = vpop.f32.mrf.mxu0
    %1606 = vmatprep.mubr.f32.mxu0 %v1077
    %1607 = vmatmul.mubr.f32.gmra.mxu0 %v788
    %v1608 = vpop.f32.mrf.mxu0
    %v1609 = vadd.f32 0.0, %v1608
    %v1610 = vpop.f32.mrf.mxu0
    %1611 = vmatprep.mubr.f32.mxu0 %v1080
    %1612 = vmatmul.mubr.f32.gmra.mxu0 %v790
    %v1613 = vpop.f32.mrf.mxu0
    %v1614 = vadd.f32 0.0, %v1613
    %v1615 = vpop.f32.mrf.mxu0
    %1616 = vmatprep.mubr.f32.mxu0 %v1083
    %1617 = vmatmul.mubr.f32.gmra.mxu0 %v792
    %v1618 = vpop.f32.mrf.mxu0
    %v1619 = vadd.f32 0.0, %v1618
    %v1620 = vpop.f32.mrf.mxu0
    %1621 = vmatprep.mubr.f32.mxu0 %v1086
    %1622 = vmatmul.mubr.f32.gmra.mxu0 %v794
    %v1623 = vpop.f32.mrf.mxu0
    %v1624 = vadd.f32 0.0, %v1623
    %v1625 = vpop.f32.mrf.mxu0
    %1626 = vmatprep.mubr.f32.mxu0 %v1089
    %1627 = vmatmul.mubr.f32.gmra.mxu0 %v796
    %v1628 = vpop.f32.mrf.mxu0
    %v1629 = vadd.f32 0.0, %v1628
    %v1630 = vpop.f32.mrf.mxu0
    %1631 = vmatprep.mubr.f32.mxu0 %v1092
    %1632 = vmatmul.mubr.f32.gmra.mxu0 %v798
    %v1633 = vpop.f32.mrf.mxu0
    %v1634 = vadd.f32 0.0, %v1633
    %v1635 = vpop.f32.mrf.mxu0
    %1636 = vmatprep.mubr.f32.mxu0 %v1095
    %1637 = vmatmul.mubr.f32.gmra.mxu0 %v800
    %v1638 = vpop.f32.mrf.mxu0
    %v1639 = vadd.f32 0.0, %v1638
    %v1640 = vpop.f32.mrf.mxu0
    %1641 = vmatprep.mubr.f32.mxu0 %v1098
    %1642 = vmatmul.mubr.f32.gmra.mxu0 %v802
    %v1643 = vpop.f32.mrf.mxu0
    %v1644 = vadd.f32 0.0, %v1643
    %v1645 = vpop.f32.mrf.mxu0
    %1646 = vmatprep.mubr.f32.mxu0 %v1101
    %1647 = vmatmul.mubr.f32.gmra.mxu0 %v804
    %v1648 = vpop.f32.mrf.mxu0
    %v1649 = vadd.f32 0.0, %v1648
    %v1650 = vpop.f32.mrf.mxu0
    %1651 = vmatprep.mubr.f32.mxu0 %v1104
    %1652 = vmatmul.mubr.f32.gmra.mxu0 %v806
    %v1653 = vpop.f32.mrf.mxu0
    %v1654 = vadd.f32 0.0, %v1653
    %v1655 = vpop.f32.mrf.mxu0
    %1656 = vmatprep.mubr.f32.mxu0 %v1107
    %1657 = vmatmul.mubr.f32.gmra.mxu0 %v808
    %v1658 = vpop.f32.mrf.mxu0
    %v1659 = vadd.f32 0.0, %v1658
    %v1660 = vpop.f32.mrf.mxu0
    %1661 = vmatprep.mubr.f32.mxu0 %v1110
    %1662 = vmatmul.mubr.f32.gmra.mxu0 %v810
    %v1663 = vpop.f32.mrf.mxu0
    %v1664 = vadd.f32 0.0, %v1663
    %v1665 = vpop.f32.mrf.mxu0
    %1666 = vmatprep.mubr.f32.mxu0 %v1113
    %1667 = vmatmul.mubr.f32.gmra.mxu0 %v812
    %v1668 = vpop.f32.mrf.mxu0
    %v1669 = vadd.f32 0.0, %v1668
    %v1670 = vpop.f32.mrf.mxu0
    %1671 = vmatprep.mubr.f32.mxu0 %v1116
    %1672 = vmatmul.mubr.f32.gmra.mxu0 %v814
    %v1673 = vpop.f32.mrf.mxu0
    %v1674 = vadd.f32 0.0, %v1673
    %v1675 = vpop.f32.mrf.mxu0
    %1676 = vmatprep.mubr.f32.mxu0 %v1119
    %1677 = vmatmul.mubr.f32.gmra.mxu0 %v816
    %v1678 = vpop.f32.mrf.mxu0
    %v1679 = vadd.f32 0.0, %v1678
    %v1680 = vpop.f32.mrf.mxu0
    %1681 = vmatprep.mubr.f32.mxu0 %v1122
    %1682 = vmatmul.mubr.f32.gmra.mxu0 %v818
    %v1683 = vpop.f32.mrf.mxu0
    %v1684 = vadd.f32 0.0, %v1683
    %v1685 = vpop.f32.mrf.mxu0
    %1686 = vmatprep.mubr.f32.mxu0 %v1125
    %1687 = vmatmul.mubr.f32.gmra.mxu0 %v820
    %v1688 = vpop.f32.mrf.mxu0
    %v1689 = vadd.f32 0.0, %v1688
    %v1690 = vpop.f32.mrf.mxu0
    %1691 = vmatprep.mubr.f32.mxu0 %v1128
    %1692 = vmatmul.mubr.f32.gmra.mxu0 %v822
    %v1693 = vpop.f32.mrf.mxu0
    %v1694 = vadd.f32 0.0, %v1693
    %v1695 = vpop.f32.mrf.mxu0
    %1696 = vmatprep.mubr.f32.mxu0 %v1131
    %1697 = vmatmul.mubr.f32.gmra.mxu0 %v824
    %v1698 = vpop.f32.mrf.mxu0
    %v1699 = vadd.f32 0.0, %v1698
    %v1700 = vpop.f32.mrf.mxu0
    %1701 = vmatprep.mubr.f32.mxu0 %v1134
    %1702 = vmatmul.mubr.f32.gmra.mxu0 %v826
    %v1703 = vpop.f32.mrf.mxu0
    %v1704 = vadd.f32 0.0, %v1703
    %v1705 = vpop.f32.mrf.mxu0
    %1706 = vmatprep.mubr.f32.mxu0 %v1137
    %1707 = vmatmul.mubr.f32.gmra.mxu0 %v828
    %v1708 = vpop.f32.mrf.mxu0
    %v1709 = vadd.f32 0.0, %v1708
    %v1710 = vpop.f32.mrf.mxu0
    %1711 = vmatprep.mubr.f32.mxu0 %v1140
    %1712 = vmatmul.mubr.f32.gmra.mxu0 %v830
    %v1713 = vpop.f32.mrf.mxu0
    %v1714 = vadd.f32 0.0, %v1713
    %v1715 = vpop.f32.mrf.mxu0
    %1716 = vmatprep.mubr.f32.mxu0 %v1143
    %1717 = vmatmul.mubr.f32.gmra.mxu0 %v832
    %v1718 = vpop.f32.mrf.mxu0
    %v1719 = vadd.f32 0.0, %v1718
    %v1720 = vpop.f32.mrf.mxu0
    %1721 = vmatprep.mubr.f32.mxu0 %v1146
    %1722 = vmatmul.mubr.f32.gmra.mxu0 %v834
    %v1723 = vpop.f32.mrf.mxu0
    %v1724 = vadd.f32 0.0, %v1723
    %v1725 = vpop.f32.mrf.mxu0
    %1726 = vmatprep.mubr.f32.mxu0 %v1149
    %1727 = vmatmul.mubr.f32.gmra.mxu0 %v836
    %v1728 = vpop.f32.mrf.mxu0
    %v1729 = vadd.f32 0.0, %v1728
    %v1730 = vpop.f32.mrf.mxu0
    %1731 = vmatprep.mubr.f32.mxu0 %v1152
    %1732 = vmatmul.mubr.f32.gmra.mxu0 %v838
    %v1733 = vpop.f32.mrf.mxu0
    %v1734 = vadd.f32 0.0, %v1733
    %v1735 = vpop.f32.mrf.mxu0
    %1736 = vmatprep.mubr.f32.mxu0 %v1155
    %1737 = vmatmul.mubr.f32.gmra.mxu0 %v840
    %v1738 = vpop.f32.mrf.mxu0
    %v1739 = vadd.f32 0.0, %v1738
    %v1740 = vpop.f32.mrf.mxu0
    %1741 = vmatprep.mubr.f32.mxu0 %v1158
    %1742 = vmatmul.mubr.f32.gmra.mxu0 %v842
    %v1743 = vpop.f32.mrf.mxu0
    %v1744 = vadd.f32 0.0, %v1743
    %v1745 = vpop.f32.mrf.mxu0
    %1746 = vmatprep.mubr.f32.mxu0 %v1161
    %1747 = vmatmul.mubr.f32.gmra.mxu0 %v844
    %v1748 = vpop.f32.mrf.mxu0
    %v1749 = vadd.f32 0.0, %v1748
    %v1750 = vpop.f32.mrf.mxu0
    %1751 = vmatprep.mubr.f32.mxu0 %v1164
    %1752 = vmatmul.mubr.f32.gmra.mxu0 %v846
    %v1753 = vpop.f32.mrf.mxu0
    %v1754 = vadd.f32 0.0, %v1753
    %v1755 = vpop.f32.mrf.mxu0
    %1756 = vmatprep.mubr.f32.mxu0 %v1167
    %1757 = vmatmul.mubr.f32.gmra.mxu0 %v848
    %v1758 = vpop.f32.mrf.mxu0
    %v1759 = vadd.f32 0.0, %v1758
    %v1760 = vpop.f32.mrf.mxu0
    %1761 = vmatprep.mubr.f32.mxu0 %v1170
    %1762 = vmatmul.mubr.f32.gmra.mxu0 %v850
    %v1763 = vpop.f32.mrf.mxu0
    %v1764 = vadd.f32 0.0, %v1763
    %v1765 = vpop.f32.mrf.mxu0
    %1766 = vmatprep.mubr.f32.mxu0 %v1173
    %1767 = vmatmul.mubr.f32.gmra.mxu0 %v852
    %v1768 = vpop.f32.mrf.mxu0
    %v1769 = vadd.f32 0.0, %v1768
    %v1770 = vpop.f32.mrf.mxu0
    %1771 = vmatprep.mubr.f32.mxu0 %v1176
    %1772 = vmatmul.mubr.f32.gmra.mxu0 %v854
    %v1773 = vpop.f32.mrf.mxu0
    %v1774 = vadd.f32 0.0, %v1773
    %v1775 = vpop.f32.mrf.mxu0
    %1776 = vmatprep.mubr.f32.mxu0 %v1179
    %1777 = vmatmul.mubr.f32.gmra.mxu0 %v856
    %v1778 = vpop.f32.mrf.mxu0
    %v1779 = vadd.f32 0.0, %v1778
    %v1780 = vpop.f32.mrf.mxu0
    %1781 = vmatprep.mubr.f32.mxu0 %v1182
    %1782 = vmatmul.mubr.f32.gmra.mxu0 %v858
    %v1783 = vpop.f32.mrf.mxu0
    %v1784 = vadd.f32 0.0, %v1783
    %v1785 = vpop.f32.mrf.mxu0
    %1786 = vmatprep.mubr.f32.mxu0 %v1185
    %1787 = vmatmul.mubr.f32.gmra.mxu0 %v860
    %v1788 = vpop.f32.mrf.mxu0
    %v1789 = vadd.f32 0.0, %v1788
    %v1790 = vpop.f32.mrf.mxu0
    %1791 = vmatprep.mubr.f32.mxu0 %v1188
    %1792 = vmatmul.mubr.f32.gmra.mxu0 %v862
    %v1793 = vpop.f32.mrf.mxu0
    %v1794 = vadd.f32 0.0, %v1793
    %v1795 = vpop.f32.mrf.mxu0
    %1796 = vmatprep.mubr.f32.mxu0 %v1191
    %1797 = vmatmul.mubr.f32.gmra.mxu0 %v864
    %v1798 = vpop.f32.mrf.mxu0
    %v1799 = vadd.f32 0.0, %v1798
    %v1800 = vpop.f32.mrf.mxu0
    %1801 = vmatprep.mubr.f32.mxu0 %v1194
    %1802 = vmatmul.mubr.f32.gmra.mxu0 %v866
    %v1803 = vpop.f32.mrf.mxu0
    %v1804 = vadd.f32 0.0, %v1803
    %v1805 = vpop.f32.mrf.mxu0
    %1806 = vmatprep.mubr.f32.mxu0 %v1197
    %1807 = vmatmul.mubr.f32.gmra.mxu0 %v868
    %v1808 = vpop.f32.mrf.mxu0
    %v1809 = vadd.f32 0.0, %v1808
    %v1810 = vpop.f32.mrf.mxu0
    %1811 = vmatprep.mubr.f32.mxu0 %v1200
    %1812 = vmatmul.mubr.f32.gmra.mxu0 %v870
    %v1813 = vpop.f32.mrf.mxu0
    %v1814 = vadd.f32 0.0, %v1813
    %v1815 = vpop.f32.mrf.mxu0
    %1816 = vmatprep.mubr.f32.mxu0 %v1203
    %1817 = vmatmul.mubr.f32.gmra.mxu0 %v872
    %v1818 = vpop.f32.mrf.mxu0
    %v1819 = vadd.f32 0.0, %v1818
    %v1820 = vpop.f32.mrf.mxu0
    %1821 = vmatprep.mubr.f32.mxu0 %v1206
    %1822 = vmatmul.mubr.f32.gmra.mxu0 %v874
    %v1823 = vpop.f32.mrf.mxu0
    %v1824 = vadd.f32 0.0, %v1823
    %v1825 = vpop.f32.mrf.mxu0
    %1826 = vmatprep.mubr.f32.mxu0 %v1209
    %1827 = vmatmul.mubr.f32.gmra.mxu0 %v876
    %v1828 = vpop.f32.mrf.mxu0
    %v1829 = vadd.f32 0.0, %v1828
    %v1830 = vpop.f32.mrf.mxu0
    %1831 = vmatprep.mubr.f32.mxu0 %v1212
    %1832 = vmatmul.mubr.f32.gmra.mxu0 %v878
    %v1833 = vpop.f32.mrf.mxu0
    %v1834 = vadd.f32 0.0, %v1833
    %v1835 = vpop.f32.mrf.mxu0
    %1836 = vmatprep.mubr.f32.mxu0 %v1215
    %1837 = vmatmul.mubr.f32.gmra.mxu0 %v880
    %v1838 = vpop.f32.mrf.mxu0
    %v1839 = vadd.f32 0.0, %v1838
    %v1840 = vpop.f32.mrf.mxu0
    %1841 = vmatprep.mubr.f32.mxu0 %v1218
    %1842 = vmatmul.mubr.f32.gmra.mxu0 %v882
    %v1843 = vpop.f32.mrf.mxu0
    %v1844 = vadd.f32 0.0, %v1843
    %v1845 = vpop.f32.mrf.mxu0
    %1846 = vmatprep.mubr.f32.mxu0 %v1221
    %1847 = vmatmul.mubr.f32.gmra.mxu0 %v884
    %v1848 = vpop.f32.mrf.mxu0
    %v1849 = vadd.f32 0.0, %v1848
    %v1850 = vpop.f32.mrf.mxu0
    %1851 = vdwg.mxu0
    %v1852 = vld [vmem:[%s5] sm:$0xff]
    %v1853 = vld [vmem:[%s5 + $0x8] sm:$0xff]
    %v1854 = vld [vmem:[%s5 + $0x10] sm:$0x3]
    %v1855 = vld [vmem:[%s5 + $0x18] sm:$0xff]
    %v1856 = vld [vmem:[%s5 + $0x20] sm:$0xff]
    %v1857 = vld [vmem:[%s5 + $0x28] sm:$0x3]
    %v1858 = vld [vmem:[%s5 + $0x30] sm:$0xff]
    %v1859 = vld [vmem:[%s5 + $0x38] sm:$0xff]
    %v1860 = vld [vmem:[%s5 + $0x40] sm:$0x3]
    %v1861 = vld [vmem:[%s5 + $0x48] sm:$0xff]
    %v1862 = vld [vmem:[%s5 + $0x50] sm:$0xff]
    %v1863 = vld [vmem:[%s5 + $0x58] sm:$0x3]
    %v1864 = vld [vmem:[%s5 + $0x60] sm:$0xff]
    %v1865 = vld [vmem:[%s5 + $0x68] sm:$0xff]
    %v1866 = vld [vmem:[%s5 + $0x70] sm:$0x3]
    %v1867 = vld [vmem:[%s5 + $0x78] sm:$0xff]
    %v1868 = vld [vmem:[%s5 + $0x80] sm:$0xff]
    %v1869 = vld [vmem:[%s5 + $0x88] sm:$0x3]
    %v1870 = vld [vmem:[%s5 + $0x90] sm:$0xff]
    %v1871 = vld [vmem:[%s5 + $0x98] sm:$0xff]
    %v1872 = vld [vmem:[%s5 + $0xa0] sm:$0x3]
    %v1873 = vld [vmem:[%s5 + $0xa8] sm:$0xff]
    %v1874 = vld [vmem:[%s5 + $0xb0] sm:$0xff]
    %v1875 = vld [vmem:[%s5 + $0xb8] sm:$0x3]
    %v1876 = vld [vmem:[%s5 + $0xc0] sm:$0xff]
    %v1877 = vld [vmem:[%s5 + $0xc8] sm:$0xff]
    %v1878 = vld [vmem:[%s5 + $0xd0] sm:$0x3]
    %v1879 = vld [vmem:[%s5 + $0xd8] sm:$0xff]
    %v1880 = vld [vmem:[%s5 + $0xe0] sm:$0xff]
    %v1881 = vld [vmem:[%s5 + $0xe8] sm:$0x3]
    %v1882 = vld [vmem:[%s5 + $0xf0] sm:$0xff]
    %v1883 = vld [vmem:[%s5 + $0xf8] sm:$0xff]
    %v1884 = vld [vmem:[%s5 + $0x100] sm:$0x3]
    %v1885 = vld [vmem:[%s5 + $0x108] sm:$0xff]
    %v1886 = vld [vmem:[%s5 + $0x110] sm:$0xff]
    %v1887 = vld [vmem:[%s5 + $0x118] sm:$0x3]
    %v1888 = vld [vmem:[%s5 + $0x120] sm:$0xff]
    %v1889 = vld [vmem:[%s5 + $0x128] sm:$0xff]
    %v1890 = vld [vmem:[%s5 + $0x130] sm:$0x3]
    %v1891 = vld [vmem:[%s5 + $0x138] sm:$0xff]
    %v1892 = vld [vmem:[%s5 + $0x140] sm:$0xff]
    %v1893 = vld [vmem:[%s5 + $0x148] sm:$0x3]
    %v1894 = vld [vmem:[%s5 + $0x150] sm:$0xff]
    %v1895 = vld [vmem:[%s5 + $0x158] sm:$0xff]
    %v1896 = vld [vmem:[%s5 + $0x160] sm:$0x3]
    %v1897 = vld [vmem:[%s5 + $0x168] sm:$0xff]
    %v1898 = vld [vmem:[%s5 + $0x170] sm:$0xff]
    %v1899 = vld [vmem:[%s5 + $0x178] sm:$0x3]
    %v1901 = vsel %vm307, %v1294, 0
    %v1904 = vsel %vm307, %v1299, 0
    %v1907 = vsel %vm307, %v1304, 0
    %v1910 = vsel %vm307, %v1309, 0
    %v1913 = vsel %vm307, %v1314, 0
    %v1916 = vsel %vm307, %v1319, 0
    %v1919 = vsel %vm307, %v1324, 0
    %v1922 = vsel %vm1223, %v1854, 0
    %1924 = vmatprep.subr.mxu0 0.0
    %1925 = vmatpush1.msra.mxu0 0.0
    %1926 = vmatprep.subr.mxu0 0.0
    %1927 = vmatpush1.msra.mxu0 0.0
    %1928 = vmatprep.subr.mxu0 0.0
    %1929 = vmatpush1.msra.mxu0 0.0
    %1930 = vmatprep.subr.mxu0 0.0
    %1931 = vmatpush1.msra.mxu0 0.0
    %1932 = vmatprep.subr.mxu0 0.0
    %1933 = vmatpush1.msra.mxu0 0.0
    %1934 = vmatprep.subr.mxu0 0.0
    %1935 = vmatpush1.msra.mxu0 0.0
    %1936 = vmatprep.subr.mxu0 0.0
    %1937 = vmatpush1.msra.mxu0 0.0
    %1938 = vmatprep.subr.mxu0 0.0
    %1939 = vmatpush1.msra.mxu0 0.0
    %1940 = vmatprep.subr.mxu0 0.0
    %1941 = vmatpush1.msra.mxu0 0.0
    %1942 = vmatprep.subr.mxu0 0.0
    %1943 = vmatpush1.msra.mxu0 0.0
    %1944 = vmatprep.subr.mxu0 0.0
    %1945 = vmatpush1.msra.mxu0 0.0
    %1946 = vmatprep.subr.mxu0 0.0
    %1947 = vmatpush1.msra.mxu0 0.0
    %1948 = vmatprep.subr.mxu0 0.0
    %1949 = vmatpush1.msra.mxu0 0.0
    %1950 = vmatprep.subr.mxu0 0.0
    %1951 = vmatpush1.msra.mxu0 %v1922
    %1952 = vmatprep.subr.mxu0 0.0
    %1953 = vmatpush1.msra.mxu0 %v1853
    %1954 = vmatprep.subr.mxu0 0.0
    %1955 = vmatpush1.msra.mxu0 %v1852
    %1956 = vmatprep.subr.mxu0 0.0
    %1957 = vmatpush2.msra.mxu0 0.0
    %1958 = vmatprep.subr.mxu0 0.0
    %1959 = vmatpush2.msra.mxu0 0.0
    %1960 = vmatprep.subr.mxu0 0.0
    %1961 = vmatpush2.msra.mxu0 0.0
    %1962 = vmatprep.subr.mxu0 0.0
    %1963 = vmatpush2.msra.mxu0 0.0
    %1964 = vmatprep.subr.mxu0 0.0
    %1965 = vmatpush2.msra.mxu0 0.0
    %1966 = vmatprep.subr.mxu0 0.0
    %1967 = vmatpush2.msra.mxu0 0.0
    %1968 = vmatprep.subr.mxu0 0.0
    %1969 = vmatpush2.msra.mxu0 0.0
    %1970 = vmatprep.subr.mxu0 0.0
    %1971 = vmatpush2.msra.mxu0 0.0
    %1972 = vmatprep.subr.mxu0 0.0
    %1973 = vmatpush2.msra.mxu0 0.0
    %1974 = vmatprep.subr.mxu0 0.0
    %1975 = vmatpush2.msra.mxu0 0.0
    %1976 = vmatprep.subr.mxu0 0.0
    %1977 = vmatpush2.msra.mxu0 0.0
    %1978 = vmatprep.subr.mxu0 0.0
    %1979 = vmatpush2.msra.mxu0 0.0
    %1980 = vmatprep.subr.mxu0 0.0
    %1981 = vmatpush2.msra.mxu0 0.0
    %1982 = vmatprep.subr.mxu0 0.0
    %1983 = vmatpush2.msra.mxu0 0.0
    %1984 = vmatprep.subr.mxu0 0.0
    %1985 = vmatpush2.msra.mxu0 0.0
    %1986 = vmatprep.subr.mxu0 0.0
    %1987 = vmatpush2.msra.mxu0 0.0
    %1988 = vmatprep.mubr.f32.mxu0 0.0
    %1989 = vmatmul.mubr.f32.gmra.mxu0 %v1901
    %v1990 = vpop.f32.mrf.mxu0
    %v1991 = vadd.f32 0.0, %v1990
    %v1992 = vpop.f32.mrf.mxu0
    %1993 = vmatprep.mubr.f32.mxu0 0.0
    %1994 = vmatmul.mubr.f32.gmra.mxu0 %v1904
    %v1995 = vpop.f32.mrf.mxu0
    %v1996 = vadd.f32 0.0, %v1995
    %v1997 = vpop.f32.mrf.mxu0
    %1998 = vmatprep.mubr.f32.mxu0 0.0
    %1999 = vmatmul.mubr.f32.gmra.mxu0 %v1907
    %v2000 = vpop.f32.mrf.mxu0
    %v2001 = vadd.f32 0.0, %v2000
    %v2002 = vpop.f32.mrf.mxu0
    %2003 = vmatprep.mubr.f32.mxu0 0.0
    %2004 = vmatmul.mubr.f32.gmra.mxu0 %v1910
    %v2005 = vpop.f32.mrf.mxu0
    %v2006 = vadd.f32 0.0, %v2005
    %v2007 = vpop.f32.mrf.mxu0
    %2008 = vmatprep.mubr.f32.mxu0 0.0
    %2009 = vmatmul.mubr.f32.gmra.mxu0 %v1913
    %v2010 = vpop.f32.mrf.mxu0
    %v2011 = vadd.f32 0.0, %v2010
    %v2012 = vpop.f32.mrf.mxu0
    %2013 = vmatprep.mubr.f32.mxu0 0.0
    %2014 = vmatmul.mubr.f32.gmra.mxu0 %v1916
    %v2015 = vpop.f32.mrf.mxu0
    %v2016 = vadd.f32 0.0, %v2015
    %v2017 = vpop.f32.mrf.mxu0
    %2018 = vmatprep.mubr.f32.mxu0 0.0
    %2019 = vmatmul.mubr.f32.gmra.mxu0 %v1919
    %v2020 = vpop.f32.mrf.mxu0
    %v2021 = vadd.f32 0.0, %v2020
    %v2022 = vpop.f32.mrf.mxu0
    %2023 = vdwg.mxu0
    %v2025 = vsel %vm307, %v1329, 0
    %v2028 = vsel %vm307, %v1334, 0
    %v2031 = vsel %vm307, %v1339, 0
    %v2034 = vsel %vm307, %v1344, 0
    %v2037 = vsel %vm307, %v1349, 0
    %v2040 = vsel %vm307, %v1354, 0
    %v2043 = vsel %vm307, %v1359, 0
    %v2046 = vsel %vm1223, %v1857, 0
    %2048 = vmatprep.subr.mxu0 0.0
    %2049 = vmatpush1.msra.mxu0 0.0
    %2050 = vmatprep.subr.mxu0 0.0
    %2051 = vmatpush1.msra.mxu0 0.0
    %2052 = vmatprep.subr.mxu0 0.0
    %2053 = vmatpush1.msra.mxu0 0.0
    %2054 = vmatprep.subr.mxu0 0.0
    %2055 = vmatpush1.msra.mxu0 0.0
    %2056 = vmatprep.subr.mxu0 0.0
    %2057 = vmatpush1.msra.mxu0 0.0
    %2058 = vmatprep.subr.mxu0 0.0
    %2059 = vmatpush1.msra.mxu0 0.0
    %2060 = vmatprep.subr.mxu0 0.0
    %2061 = vmatpush1.msra.mxu0 0.0
    %2062 = vmatprep.subr.mxu0 0.0
    %2063 = vmatpush1.msra.mxu0 0.0
    %2064 = vmatprep.subr.mxu0 0.0
    %2065 = vmatpush1.msra.mxu0 0.0
    %2066 = vmatprep.subr.mxu0 0.0
    %2067 = vmatpush1.msra.mxu0 0.0
    %2068 = vmatprep.subr.mxu0 0.0
    %2069 = vmatpush1.msra.mxu0 0.0
    %2070 = vmatprep.subr.mxu0 0.0
    %2071 = vmatpush1.msra.mxu0 0.0
    %2072 = vmatprep.subr.mxu0 0.0
    %2073 = vmatpush1.msra.mxu0 0.0
    %2074 = vmatprep.subr.mxu0 0.0
    %2075 = vmatpush1.msra.mxu0 %v2046
    %2076 = vmatprep.subr.mxu0 0.0
    %2077 = vmatpush1.msra.mxu0 %v1856
    %2078 = vmatprep.subr.mxu0 0.0
    %2079 = vmatpush1.msra.mxu0 %v1855
    %2080 = vmatprep.subr.mxu0 0.0
    %2081 = vmatpush2.msra.mxu0 0.0
    %2082 = vmatprep.subr.mxu0 0.0
    %2083 = vmatpush2.msra.mxu0 0.0
    %2084 = vmatprep.subr.mxu0 0.0
    %2085 = vmatpush2.msra.mxu0 0.0
    %2086 = vmatprep.subr.mxu0 0.0
    %2087 = vmatpush2.msra.mxu0 0.0
    %2088 = vmatprep.subr.mxu0 0.0
    %2089 = vmatpush2.msra.mxu0 0.0
    %2090 = vmatprep.subr.mxu0 0.0
    %2091 = vmatpush2.msra.mxu0 0.0
    %2092 = vmatprep.subr.mxu0 0.0
    %2093 = vmatpush2.msra.mxu0 0.0
    %2094 = vmatprep.subr.mxu0 0.0
    %2095 = vmatpush2.msra.mxu0 0.0
    %2096 = vmatprep.subr.mxu0 0.0
    %2097 = vmatpush2.msra.mxu0 0.0
    %2098 = vmatprep.subr.mxu0 0.0
    %2099 = vmatpush2.msra.mxu0 0.0
    %2100 = vmatprep.subr.mxu0 0.0
    %2101 = vmatpush2.msra.mxu0 0.0
    %2102 = vmatprep.subr.mxu0 0.0
    %2103 = vmatpush2.msra.mxu0 0.0
    %2104 = vmatprep.subr.mxu0 0.0
    %2105 = vmatpush2.msra.mxu0 0.0
    %2106 = vmatprep.subr.mxu0 0.0
    %2107 = vmatpush2.msra.mxu0 0.0
    %2108 = vmatprep.subr.mxu0 0.0
    %2109 = vmatpush2.msra.mxu0 0.0
    %2110 = vmatprep.subr.mxu0 0.0
    %2111 = vmatpush2.msra.mxu0 0.0
    %2112 = vmatprep.mubr.f32.mxu0 0.0
    %2113 = vmatmul.mubr.f32.gmra.mxu0 %v2025
    %v2114 = vpop.f32.mrf.mxu0
    %v2115 = vadd.f32 0.0, %v2114
    %v2116 = vpop.f32.mrf.mxu0
    %2117 = vmatprep.mubr.f32.mxu0 0.0
    %2118 = vmatmul.mubr.f32.gmra.mxu0 %v2028
    %v2119 = vpop.f32.mrf.mxu0
    %v2120 = vadd.f32 0.0, %v2119
    %v2121 = vpop.f32.mrf.mxu0
    %2122 = vmatprep.mubr.f32.mxu0 0.0
    %2123 = vmatmul.mubr.f32.gmra.mxu0 %v2031
    %v2124 = vpop.f32.mrf.mxu0
    %v2125 = vadd.f32 0.0, %v2124
    %v2126 = vpop.f32.mrf.mxu0
    %2127 = vmatprep.mubr.f32.mxu0 0.0
    %2128 = vmatmul.mubr.f32.gmra.mxu0 %v2034
    %v2129 = vpop.f32.mrf.mxu0
    %v2130 = vadd.f32 0.0, %v2129
    %v2131 = vpop.f32.mrf.mxu0
    %2132 = vmatprep.mubr.f32.mxu0 0.0
    %2133 = vmatmul.mubr.f32.gmra.mxu0 %v2037
    %v2134 = vpop.f32.mrf.mxu0
    %v2135 = vadd.f32 0.0, %v2134
    %v2136 = vpop.f32.mrf.mxu0
    %2137 = vmatprep.mubr.f32.mxu0 0.0
    %2138 = vmatmul.mubr.f32.gmra.mxu0 %v2040
    %v2139 = vpop.f32.mrf.mxu0
    %v2140 = vadd.f32 0.0, %v2139
    %v2141 = vpop.f32.mrf.mxu0
    %2142 = vmatprep.mubr.f32.mxu0 0.0
    %2143 = vmatmul.mubr.f32.gmra.mxu0 %v2043
    %v2144 = vpop.f32.mrf.mxu0
    %v2145 = vadd.f32 0.0, %v2144
    %v2146 = vpop.f32.mrf.mxu0
    %2147 = vdwg.mxu0
    %v2149 = vsel %vm307, %v1364, 0
    %v2152 = vsel %vm307, %v1369, 0
    %v2155 = vsel %vm307, %v1374, 0
    %v2158 = vsel %vm307, %v1379, 0
    %v2161 = vsel %vm307, %v1384, 0
    %v2164 = vsel %vm307, %v1389, 0
    %v2167 = vsel %vm307, %v1394, 0
    %v2170 = vsel %vm1223, %v1860, 0
    %2172 = vmatprep.subr.mxu0 0.0
    %2173 = vmatpush1.msra.mxu0 0.0
    %2174 = vmatprep.subr.mxu0 0.0
    %2175 = vmatpush1.msra.mxu0 0.0
    %2176 = vmatprep.subr.mxu0 0.0
    %2177 = vmatpush1.msra.mxu0 0.0
    %2178 = vmatprep.subr.mxu0 0.0
    %2179 = vmatpush1.msra.mxu0 0.0
    %2180 = vmatprep.subr.mxu0 0.0
    %2181 = vmatpush1.msra.mxu0 0.0
    %2182 = vmatprep.subr.mxu0 0.0
    %2183 = vmatpush1.msra.mxu0 0.0
    %2184 = vmatprep.subr.mxu0 0.0
    %2185 = vmatpush1.msra.mxu0 0.0
    %2186 = vmatprep.subr.mxu0 0.0
    %2187 = vmatpush1.msra.mxu0 0.0
    %2188 = vmatprep.subr.mxu0 0.0
    %2189 = vmatpush1.msra.mxu0 0.0
    %2190 = vmatprep.subr.mxu0 0.0
    %2191 = vmatpush1.msra.mxu0 0.0
    %2192 = vmatprep.subr.mxu0 0.0
    %2193 = vmatpush1.msra.mxu0 0.0
    %2194 = vmatprep.subr.mxu0 0.0
    %2195 = vmatpush1.msra.mxu0 0.0
    %2196 = vmatprep.subr.mxu0 0.0
    %2197 = vmatpush1.msra.mxu0 0.0
    %2198 = vmatprep.subr.mxu0 0.0
    %2199 = vmatpush1.msra.mxu0 %v2170
    %2200 = vmatprep.subr.mxu0 0.0
    %2201 = vmatpush1.msra.mxu0 %v1859
    %2202 = vmatprep.subr.mxu0 0.0
    %2203 = vmatpush1.msra.mxu0 %v1858
    %2204 = vmatprep.subr.mxu0 0.0
    %2205 = vmatpush2.msra.mxu0 0.0
    %2206 = vmatprep.subr.mxu0 0.0
    %2207 = vmatpush2.msra.mxu0 0.0
    %2208 = vmatprep.subr.mxu0 0.0
    %2209 = vmatpush2.msra.mxu0 0.0
    %2210 = vmatprep.subr.mxu0 0.0
    %2211 = vmatpush2.msra.mxu0 0.0
    %2212 = vmatprep.subr.mxu0 0.0
    %2213 = vmatpush2.msra.mxu0 0.0
    %2214 = vmatprep.subr.mxu0 0.0
    %2215 = vmatpush2.msra.mxu0 0.0
    %2216 = vmatprep.subr.mxu0 0.0
    %2217 = vmatpush2.msra.mxu0 0.0
    %2218 = vmatprep.subr.mxu0 0.0
    %2219 = vmatpush2.msra.mxu0 0.0
    %2220 = vmatprep.subr.mxu0 0.0
    %2221 = vmatpush2.msra.mxu0 0.0
    %2222 = vmatprep.subr.mxu0 0.0
    %2223 = vmatpush2.msra.mxu0 0.0
    %2224 = vmatprep.subr.mxu0 0.0
    %2225 = vmatpush2.msra.mxu0 0.0
    %2226 = vmatprep.subr.mxu0 0.0
    %2227 = vmatpush2.msra.mxu0 0.0
    %2228 = vmatprep.subr.mxu0 0.0
    %2229 = vmatpush2.msra.mxu0 0.0
    %2230 = vmatprep.subr.mxu0 0.0
    %2231 = vmatpush2.msra.mxu0 0.0
    %2232 = vmatprep.subr.mxu0 0.0
    %2233 = vmatpush2.msra.mxu0 0.0
    %2234 = vmatprep.subr.mxu0 0.0
    %2235 = vmatpush2.msra.mxu0 0.0
    %2236 = vmatprep.mubr.f32.mxu0 0.0
    %2237 = vmatmul.mubr.f32.gmra.mxu0 %v2149
    %v2238 = vpop.f32.mrf.mxu0
    %v2239 = vadd.f32 0.0, %v2238
    %v2240 = vpop.f32.mrf.mxu0
    %2241 = vmatprep.mubr.f32.mxu0 0.0
    %2242 = vmatmul.mubr.f32.gmra.mxu0 %v2152
    %v2243 = vpop.f32.mrf.mxu0
    %v2244 = vadd.f32 0.0, %v2243
    %v2245 = vpop.f32.mrf.mxu0
    %2246 = vmatprep.mubr.f32.mxu0 0.0
    %2247 = vmatmul.mubr.f32.gmra.mxu0 %v2155
    %v2248 = vpop.f32.mrf.mxu0
    %v2249 = vadd.f32 0.0, %v2248
    %v2250 = vpop.f32.mrf.mxu0
    %2251 = vmatprep.mubr.f32.mxu0 0.0
    %2252 = vmatmul.mubr.f32.gmra.mxu0 %v2158
    %v2253 = vpop.f32.mrf.mxu0
    %v2254 = vadd.f32 0.0, %v2253
    %v2255 = vpop.f32.mrf.mxu0
    %2256 = vmatprep.mubr.f32.mxu0 0.0
    %2257 = vmatmul.mubr.f32.gmra.mxu0 %v2161
    %v2258 = vpop.f32.mrf.mxu0
    %v2259 = vadd.f32 0.0, %v2258
    %v2260 = vpop.f32.mrf.mxu0
    %2261 = vmatprep.mubr.f32.mxu0 0.0
    %2262 = vmatmul.mubr.f32.gmra.mxu0 %v2164
    %v2263 = vpop.f32.mrf.mxu0
    %v2264 = vadd.f32 0.0, %v2263
    %v2265 = vpop.f32.mrf.mxu0
    %2266 = vmatprep.mubr.f32.mxu0 0.0
    %2267 = vmatmul.mubr.f32.gmra.mxu0 %v2167
    %v2268 = vpop.f32.mrf.mxu0
    %v2269 = vadd.f32 0.0, %v2268
    %v2270 = vpop.f32.mrf.mxu0
    %2271 = vdwg.mxu0
    %v2273 = vsel %vm307, %v1399, 0
    %v2276 = vsel %vm307, %v1404, 0
    %v2279 = vsel %vm307, %v1409, 0
    %v2282 = vsel %vm307, %v1414, 0
    %v2285 = vsel %vm307, %v1419, 0
    %v2288 = vsel %vm307, %v1424, 0
    %v2291 = vsel %vm307, %v1429, 0
    %v2294 = vsel %vm1223, %v1863, 0
    %2296 = vmatprep.subr.mxu0 0.0
    %2297 = vmatpush1.msra.mxu0 0.0
    %2298 = vmatprep.subr.mxu0 0.0
    %2299 = vmatpush1.msra.mxu0 0.0
    %2300 = vmatprep.subr.mxu0 0.0
    %2301 = vmatpush1.msra.mxu0 0.0
    %2302 = vmatprep.subr.mxu0 0.0
    %2303 = vmatpush1.msra.mxu0 0.0
    %2304 = vmatprep.subr.mxu0 0.0
    %2305 = vmatpush1.msra.mxu0 0.0
    %2306 = vmatprep.subr.mxu0 0.0
    %2307 = vmatpush1.msra.mxu0 0.0
    %2308 = vmatprep.subr.mxu0 0.0
    %2309 = vmatpush1.msra.mxu0 0.0
    %2310 = vmatprep.subr.mxu0 0.0
    %2311 = vmatpush1.msra.mxu0 0.0
    %2312 = vmatprep.subr.mxu0 0.0
    %2313 = vmatpush1.msra.mxu0 0.0
    %2314 = vmatprep.subr.mxu0 0.0
    %2315 = vmatpush1.msra.mxu0 0.0
    %2316 = vmatprep.subr.mxu0 0.0
    %2317 = vmatpush1.msra.mxu0 0.0
    %2318 = vmatprep.subr.mxu0 0.0
    %2319 = vmatpush1.msra.mxu0 0.0
    %2320 = vmatprep.subr.mxu0 0.0
    %2321 = vmatpush1.msra.mxu0 0.0
    %2322 = vmatprep.subr.mxu0 0.0
    %2323 = vmatpush1.msra.mxu0 %v2294
    %2324 = vmatprep.subr.mxu0 0.0
    %2325 = vmatpush1.msra.mxu0 %v1862
    %2326 = vmatprep.subr.mxu0 0.0
    %2327 = vmatpush1.msra.mxu0 %v1861
    %2328 = vmatprep.subr.mxu0 0.0
    %2329 = vmatpush2.msra.mxu0 0.0
    %2330 = vmatprep.subr.mxu0 0.0
    %2331 = vmatpush2.msra.mxu0 0.0
    %2332 = vmatprep.subr.mxu0 0.0
    %2333 = vmatpush2.msra.mxu0 0.0
    %2334 = vmatprep.subr.mxu0 0.0
    %2335 = vmatpush2.msra.mxu0 0.0
    %2336 = vmatprep.subr.mxu0 0.0
    %2337 = vmatpush2.msra.mxu0 0.0
    %2338 = vmatprep.subr.mxu0 0.0
    %2339 = vmatpush2.msra.mxu0 0.0
    %2340 = vmatprep.subr.mxu0 0.0
    %2341 = vmatpush2.msra.mxu0 0.0
    %2342 = vmatprep.subr.mxu0 0.0
    %2343 = vmatpush2.msra.mxu0 0.0
    %2344 = vmatprep.subr.mxu0 0.0
    %2345 = vmatpush2.msra.mxu0 0.0
    %2346 = vmatprep.subr.mxu0 0.0
    %2347 = vmatpush2.msra.mxu0 0.0
    %2348 = vmatprep.subr.mxu0 0.0
    %2349 = vmatpush2.msra.mxu0 0.0
    %2350 = vmatprep.subr.mxu0 0.0
    %2351 = vmatpush2.msra.mxu0 0.0
    %2352 = vmatprep.subr.mxu0 0.0
    %2353 = vmatpush2.msra.mxu0 0.0
    %2354 = vmatprep.subr.mxu0 0.0
    %2355 = vmatpush2.msra.mxu0 0.0
    %2356 = vmatprep.subr.mxu0 0.0
    %2357 = vmatpush2.msra.mxu0 0.0
    %2358 = vmatprep.subr.mxu0 0.0
    %2359 = vmatpush2.msra.mxu0 0.0
    %2360 = vmatprep.mubr.f32.mxu0 0.0
    %2361 = vmatmul.mubr.f32.gmra.mxu0 %v2273
    %v2362 = vpop.f32.mrf.mxu0
    %v2363 = vadd.f32 0.0, %v2362
    %v2364 = vpop.f32.mrf.mxu0
    %2365 = vmatprep.mubr.f32.mxu0 0.0
    %2366 = vmatmul.mubr.f32.gmra.mxu0 %v2276
    %v2367 = vpop.f32.mrf.mxu0
    %v2368 = vadd.f32 0.0, %v2367
    %v2369 = vpop.f32.mrf.mxu0
    %2370 = vmatprep.mubr.f32.mxu0 0.0
    %2371 = vmatmul.mubr.f32.gmra.mxu0 %v2279
    %v2372 = vpop.f32.mrf.mxu0
    %v2373 = vadd.f32 0.0, %v2372
    %v2374 = vpop.f32.mrf.mxu0
    %2375 = vmatprep.mubr.f32.mxu0 0.0
    %2376 = vmatmul.mubr.f32.gmra.mxu0 %v2282
    %v2377 = vpop.f32.mrf.mxu0
    %v2378 = vadd.f32 0.0, %v2377
    %v2379 = vpop.f32.mrf.mxu0
    %2380 = vmatprep.mubr.f32.mxu0 0.0
    %2381 = vmatmul.mubr.f32.gmra.mxu0 %v2285
    %v2382 = vpop.f32.mrf.mxu0
    %v2383 = vadd.f32 0.0, %v2382
    %v2384 = vpop.f32.mrf.mxu0
    %2385 = vmatprep.mubr.f32.mxu0 0.0
    %2386 = vmatmul.mubr.f32.gmra.mxu0 %v2288
    %v2387 = vpop.f32.mrf.mxu0
    %v2388 = vadd.f32 0.0, %v2387
    %v2389 = vpop.f32.mrf.mxu0
    %2390 = vmatprep.mubr.f32.mxu0 0.0
    %2391 = vmatmul.mubr.f32.gmra.mxu0 %v2291
    %v2392 = vpop.f32.mrf.mxu0
    %v2393 = vadd.f32 0.0, %v2392
    %v2394 = vpop.f32.mrf.mxu0
    %2395 = vdwg.mxu0
    %v2397 = vsel %vm307, %v1434, 0
    %v2400 = vsel %vm307, %v1439, 0
    %v2403 = vsel %vm307, %v1444, 0
    %v2406 = vsel %vm307, %v1449, 0
    %v2409 = vsel %vm307, %v1454, 0
    %v2412 = vsel %vm307, %v1459, 0
    %v2415 = vsel %vm307, %v1464, 0
    %v2418 = vsel %vm1223, %v1866, 0
    %2420 = vmatprep.subr.mxu0 0.0
    %2421 = vmatpush1.msra.mxu0 0.0
    %2422 = vmatprep.subr.mxu0 0.0
    %2423 = vmatpush1.msra.mxu0 0.0
    %2424 = vmatprep.subr.mxu0 0.0
    %2425 = vmatpush1.msra.mxu0 0.0
    %2426 = vmatprep.subr.mxu0 0.0
    %2427 = vmatpush1.msra.mxu0 0.0
    %2428 = vmatprep.subr.mxu0 0.0
    %2429 = vmatpush1.msra.mxu0 0.0
    %2430 = vmatprep.subr.mxu0 0.0
    %2431 = vmatpush1.msra.mxu0 0.0
    %2432 = vmatprep.subr.mxu0 0.0
    %2433 = vmatpush1.msra.mxu0 0.0
    %2434 = vmatprep.subr.mxu0 0.0
    %2435 = vmatpush1.msra.mxu0 0.0
    %2436 = vmatprep.subr.mxu0 0.0
    %2437 = vmatpush1.msra.mxu0 0.0
    %2438 = vmatprep.subr.mxu0 0.0
    %2439 = vmatpush1.msra.mxu0 0.0
    %2440 = vmatprep.subr.mxu0 0.0
    %2441 = vmatpush1.msra.mxu0 0.0
    %2442 = vmatprep.subr.mxu0 0.0
    %2443 = vmatpush1.msra.mxu0 0.0
    %2444 = vmatprep.subr.mxu0 0.0
    %2445 = vmatpush1.msra.mxu0 0.0
    %2446 = vmatprep.subr.mxu0 0.0
    %2447 = vmatpush1.msra.mxu0 %v2418
    %2448 = vmatprep.subr.mxu0 0.0
    %2449 = vmatpush1.msra.mxu0 %v1865
    %2450 = vmatprep.subr.mxu0 0.0
    %2451 = vmatpush1.msra.mxu0 %v1864
    %2452 = vmatprep.subr.mxu0 0.0
    %2453 = vmatpush2.msra.mxu0 0.0
    %2454 = vmatprep.subr.mxu0 0.0
    %2455 = vmatpush2.msra.mxu0 0.0
    %2456 = vmatprep.subr.mxu0 0.0
    %2457 = vmatpush2.msra.mxu0 0.0
    %2458 = vmatprep.subr.mxu0 0.0
    %2459 = vmatpush2.msra.mxu0 0.0
    %2460 = vmatprep.subr.mxu0 0.0
    %2461 = vmatpush2.msra.mxu0 0.0
    %2462 = vmatprep.subr.mxu0 0.0
    %2463 = vmatpush2.msra.mxu0 0.0
    %2464 = vmatprep.subr.mxu0 0.0
    %2465 = vmatpush2.msra.mxu0 0.0
    %2466 = vmatprep.subr.mxu0 0.0
    %2467 = vmatpush2.msra.mxu0 0.0
    %2468 = vmatprep.subr.mxu0 0.0
    %2469 = vmatpush2.msra.mxu0 0.0
    %2470 = vmatprep.subr.mxu0 0.0
    %2471 = vmatpush2.msra.mxu0 0.0
    %2472 = vmatprep.subr.mxu0 0.0
    %2473 = vmatpush2.msra.mxu0 0.0
    %2474 = vmatprep.subr.mxu0 0.0
    %2475 = vmatpush2.msra.mxu0 0.0
    %2476 = vmatprep.subr.mxu0 0.0
    %2477 = vmatpush2.msra.mxu0 0.0
    %2478 = vmatprep.subr.mxu0 0.0
    %2479 = vmatpush2.msra.mxu0 0.0
    %2480 = vmatprep.subr.mxu0 0.0
    %2481 = vmatpush2.msra.mxu0 0.0
    %2482 = vmatprep.subr.mxu0 0.0
    %2483 = vmatpush2.msra.mxu0 0.0
    %2484 = vmatprep.mubr.f32.mxu0 0.0
    %2485 = vmatmul.mubr.f32.gmra.mxu0 %v2397
    %v2486 = vpop.f32.mrf.mxu0
    %v2487 = vadd.f32 0.0, %v2486
    %v2488 = vpop.f32.mrf.mxu0
    %2489 = vmatprep.mubr.f32.mxu0 0.0
    %2490 = vmatmul.mubr.f32.gmra.mxu0 %v2400
    %v2491 = vpop.f32.mrf.mxu0
    %v2492 = vadd.f32 0.0, %v2491
    %v2493 = vpop.f32.mrf.mxu0
    %2494 = vmatprep.mubr.f32.mxu0 0.0
    %2495 = vmatmul.mubr.f32.gmra.mxu0 %v2403
    %v2496 = vpop.f32.mrf.mxu0
    %v2497 = vadd.f32 0.0, %v2496
    %v2498 = vpop.f32.mrf.mxu0
    %2499 = vmatprep.mubr.f32.mxu0 0.0
    %2500 = vmatmul.mubr.f32.gmra.mxu0 %v2406
    %v2501 = vpop.f32.mrf.mxu0
    %v2502 = vadd.f32 0.0, %v2501
    %v2503 = vpop.f32.mrf.mxu0
    %2504 = vmatprep.mubr.f32.mxu0 0.0
    %2505 = vmatmul.mubr.f32.gmra.mxu0 %v2409
    %v2506 = vpop.f32.mrf.mxu0
    %v2507 = vadd.f32 0.0, %v2506
    %v2508 = vpop.f32.mrf.mxu0
    %2509 = vmatprep.mubr.f32.mxu0 0.0
    %2510 = vmatmul.mubr.f32.gmra.mxu0 %v2412
    %v2511 = vpop.f32.mrf.mxu0
    %v2512 = vadd.f32 0.0, %v2511
    %v2513 = vpop.f32.mrf.mxu0
    %2514 = vmatprep.mubr.f32.mxu0 0.0
    %2515 = vmatmul.mubr.f32.gmra.mxu0 %v2415
    %v2516 = vpop.f32.mrf.mxu0
    %v2517 = vadd.f32 0.0, %v2516
    %v2518 = vpop.f32.mrf.mxu0
    %2519 = vdwg.mxu0
    %v2521 = vsel %vm307, %v1469, 0
    %v2524 = vsel %vm307, %v1474, 0
    %v2527 = vsel %vm307, %v1479, 0
    %v2530 = vsel %vm307, %v1484, 0
    %v2533 = vsel %vm307, %v1489, 0
    %v2536 = vsel %vm307, %v1494, 0
    %v2539 = vsel %vm307, %v1499, 0
    %v2542 = vsel %vm1223, %v1869, 0
    %2544 = vmatprep.subr.mxu0 0.0
    %2545 = vmatpush1.msra.mxu0 0.0
    %2546 = vmatprep.subr.mxu0 0.0
    %2547 = vmatpush1.msra.mxu0 0.0
    %2548 = vmatprep.subr.mxu0 0.0
    %2549 = vmatpush1.msra.mxu0 0.0
    %2550 = vmatprep.subr.mxu0 0.0
    %2551 = vmatpush1.msra.mxu0 0.0
    %2552 = vmatprep.subr.mxu0 0.0
    %2553 = vmatpush1.msra.mxu0 0.0
    %2554 = vmatprep.subr.mxu0 0.0
    %2555 = vmatpush1.msra.mxu0 0.0
    %2556 = vmatprep.subr.mxu0 0.0
    %2557 = vmatpush1.msra.mxu0 0.0
    %2558 = vmatprep.subr.mxu0 0.0
    %2559 = vmatpush1.msra.mxu0 0.0
    %2560 = vmatprep.subr.mxu0 0.0
    %2561 = vmatpush1.msra.mxu0 0.0
    %2562 = vmatprep.subr.mxu0 0.0
    %2563 = vmatpush1.msra.mxu0 0.0
    %2564 = vmatprep.subr.mxu0 0.0
    %2565 = vmatpush1.msra.mxu0 0.0
    %2566 = vmatprep.subr.mxu0 0.0
    %2567 = vmatpush1.msra.mxu0 0.0
    %2568 = vmatprep.subr.mxu0 0.0
    %2569 = vmatpush1.msra.mxu0 0.0
    %2570 = vmatprep.subr.mxu0 0.0
    %2571 = vmatpush1.msra.mxu0 %v2542
    %2572 = vmatprep.subr.mxu0 0.0
    %2573 = vmatpush1.msra.mxu0 %v1868
    %2574 = vmatprep.subr.mxu0 0.0
    %2575 = vmatpush1.msra.mxu0 %v1867
    %2576 = vmatprep.subr.mxu0 0.0
    %2577 = vmatpush2.msra.mxu0 0.0
    %2578 = vmatprep.subr.mxu0 0.0
    %2579 = vmatpush2.msra.mxu0 0.0
    %2580 = vmatprep.subr.mxu0 0.0
    %2581 = vmatpush2.msra.mxu0 0.0
    %2582 = vmatprep.subr.mxu0 0.0
    %2583 = vmatpush2.msra.mxu0 0.0
    %2584 = vmatprep.subr.mxu0 0.0
    %2585 = vmatpush2.msra.mxu0 0.0
    %2586 = vmatprep.subr.mxu0 0.0
    %2587 = vmatpush2.msra.mxu0 0.0
    %2588 = vmatprep.subr.mxu0 0.0
    %2589 = vmatpush2.msra.mxu0 0.0
    %2590 = vmatprep.subr.mxu0 0.0
    %2591 = vmatpush2.msra.mxu0 0.0
    %2592 = vmatprep.subr.mxu0 0.0
    %2593 = vmatpush2.msra.mxu0 0.0
    %2594 = vmatprep.subr.mxu0 0.0
    %2595 = vmatpush2.msra.mxu0 0.0
    %2596 = vmatprep.subr.mxu0 0.0
    %2597 = vmatpush2.msra.mxu0 0.0
    %2598 = vmatprep.subr.mxu0 0.0
    %2599 = vmatpush2.msra.mxu0 0.0
    %2600 = vmatprep.subr.mxu0 0.0
    %2601 = vmatpush2.msra.mxu0 0.0
    %2602 = vmatprep.subr.mxu0 0.0
    %2603 = vmatpush2.msra.mxu0 0.0
    %2604 = vmatprep.subr.mxu0 0.0
    %2605 = vmatpush2.msra.mxu0 0.0
    %2606 = vmatprep.subr.mxu0 0.0
    %2607 = vmatpush2.msra.mxu0 0.0
    %2608 = vmatprep.mubr.f32.mxu0 0.0
    %2609 = vmatmul.mubr.f32.gmra.mxu0 %v2521
    %v2610 = vpop.f32.mrf.mxu0
    %v2611 = vadd.f32 0.0, %v2610
    %v2612 = vpop.f32.mrf.mxu0
    %2613 = vmatprep.mubr.f32.mxu0 0.0
    %2614 = vmatmul.mubr.f32.gmra.mxu0 %v2524
    %v2615 = vpop.f32.mrf.mxu0
    %v2616 = vadd.f32 0.0, %v2615
    %v2617 = vpop.f32.mrf.mxu0
    %2618 = vmatprep.mubr.f32.mxu0 0.0
    %2619 = vmatmul.mubr.f32.gmra.mxu0 %v2527
    %v2620 = vpop.f32.mrf.mxu0
    %v2621 = vadd.f32 0.0, %v2620
    %v2622 = vpop.f32.mrf.mxu0
    %2623 = vmatprep.mubr.f32.mxu0 0.0
    %2624 = vmatmul.mubr.f32.gmra.mxu0 %v2530
    %v2625 = vpop.f32.mrf.mxu0
    %v2626 = vadd.f32 0.0, %v2625
    %v2627 = vpop.f32.mrf.mxu0
    %2628 = vmatprep.mubr.f32.mxu0 0.0
    %2629 = vmatmul.mubr.f32.gmra.mxu0 %v2533
    %v2630 = vpop.f32.mrf.mxu0
    %v2631 = vadd.f32 0.0, %v2630
    %v2632 = vpop.f32.mrf.mxu0
    %2633 = vmatprep.mubr.f32.mxu0 0.0
    %2634 = vmatmul.mubr.f32.gmra.mxu0 %v2536
    %v2635 = vpop.f32.mrf.mxu0
    %v2636 = vadd.f32 0.0, %v2635
    %v2637 = vpop.f32.mrf.mxu0
    %2638 = vmatprep.mubr.f32.mxu0 0.0
    %2639 = vmatmul.mubr.f32.gmra.mxu0 %v2539
    %v2640 = vpop.f32.mrf.mxu0
    %v2641 = vadd.f32 0.0, %v2640
    %v2642 = vpop.f32.mrf.mxu0
    %2643 = vdwg.mxu0
    %v2645 = vsel %vm307, %v1504, 0
    %v2648 = vsel %vm307, %v1509, 0
    %v2651 = vsel %vm307, %v1514, 0
    %v2654 = vsel %vm307, %v1519, 0
    %v2657 = vsel %vm307, %v1524, 0
    %v2660 = vsel %vm307, %v1529, 0
    %v2663 = vsel %vm307, %v1534, 0
    %v2666 = vsel %vm1223, %v1872, 0
    %2668 = vmatprep.subr.mxu0 0.0
    %2669 = vmatpush1.msra.mxu0 0.0
    %2670 = vmatprep.subr.mxu0 0.0
    %2671 = vmatpush1.msra.mxu0 0.0
    %2672 = vmatprep.subr.mxu0 0.0
    %2673 = vmatpush1.msra.mxu0 0.0
    %2674 = vmatprep.subr.mxu0 0.0
    %2675 = vmatpush1.msra.mxu0 0.0
    %2676 = vmatprep.subr.mxu0 0.0
    %2677 = vmatpush1.msra.mxu0 0.0
    %2678 = vmatprep.subr.mxu0 0.0
    %2679 = vmatpush1.msra.mxu0 0.0
    %2680 = vmatprep.subr.mxu0 0.0
    %2681 = vmatpush1.msra.mxu0 0.0
    %2682 = vmatprep.subr.mxu0 0.0
    %2683 = vmatpush1.msra.mxu0 0.0
    %2684 = vmatprep.subr.mxu0 0.0
    %2685 = vmatpush1.msra.mxu0 0.0
    %2686 = vmatprep.subr.mxu0 0.0
    %2687 = vmatpush1.msra.mxu0 0.0
    %2688 = vmatprep.subr.mxu0 0.0
    %2689 = vmatpush1.msra.mxu0 0.0
    %2690 = vmatprep.subr.mxu0 0.0
    %2691 = vmatpush1.msra.mxu0 0.0
    %2692 = vmatprep.subr.mxu0 0.0
    %2693 = vmatpush1.msra.mxu0 0.0
    %2694 = vmatprep.subr.mxu0 0.0
    %2695 = vmatpush1.msra.mxu0 %v2666
    %2696 = vmatprep.subr.mxu0 0.0
    %2697 = vmatpush1.msra.mxu0 %v1871
    %2698 = vmatprep.subr.mxu0 0.0
    %2699 = vmatpush1.msra.mxu0 %v1870
    %2700 = vmatprep.subr.mxu0 0.0
    %2701 = vmatpush2.msra.mxu0 0.0
    %2702 = vmatprep.subr.mxu0 0.0
    %2703 = vmatpush2.msra.mxu0 0.0
    %2704 = vmatprep.subr.mxu0 0.0
    %2705 = vmatpush2.msra.mxu0 0.0
    %2706 = vmatprep.subr.mxu0 0.0
    %2707 = vmatpush2.msra.mxu0 0.0
    %2708 = vmatprep.subr.mxu0 0.0
    %2709 = vmatpush2.msra.mxu0 0.0
    %2710 = vmatprep.subr.mxu0 0.0
    %2711 = vmatpush2.msra.mxu0 0.0
    %2712 = vmatprep.subr.mxu0 0.0
    %2713 = vmatpush2.msra.mxu0 0.0
    %2714 = vmatprep.subr.mxu0 0.0
    %2715 = vmatpush2.msra.mxu0 0.0
    %2716 = vmatprep.subr.mxu0 0.0
    %2717 = vmatpush2.msra.mxu0 0.0
    %2718 = vmatprep.subr.mxu0 0.0
    %2719 = vmatpush2.msra.mxu0 0.0
    %2720 = vmatprep.subr.mxu0 0.0
    %2721 = vmatpush2.msra.mxu0 0.0
    %2722 = vmatprep.subr.mxu0 0.0
    %2723 = vmatpush2.msra.mxu0 0.0
    %2724 = vmatprep.subr.mxu0 0.0
    %2725 = vmatpush2.msra.mxu0 0.0
    %2726 = vmatprep.subr.mxu0 0.0
    %2727 = vmatpush2.msra.mxu0 0.0
    %2728 = vmatprep.subr.mxu0 0.0
    %2729 = vmatpush2.msra.mxu0 0.0
    %2730 = vmatprep.subr.mxu0 0.0
    %2731 = vmatpush2.msra.mxu0 0.0
    %2732 = vmatprep.mubr.f32.mxu0 0.0
    %2733 = vmatmul.mubr.f32.gmra.mxu0 %v2645
    %v2734 = vpop.f32.mrf.mxu0
    %v2735 = vadd.f32 0.0, %v2734
    %v2736 = vpop.f32.mrf.mxu0
    %2737 = vmatprep.mubr.f32.mxu0 0.0
    %2738 = vmatmul.mubr.f32.gmra.mxu0 %v2648
    %v2739 = vpop.f32.mrf.mxu0
    %v2740 = vadd.f32 0.0, %v2739
    %v2741 = vpop.f32.mrf.mxu0
    %2742 = vmatprep.mubr.f32.mxu0 0.0
    %2743 = vmatmul.mubr.f32.gmra.mxu0 %v2651
    %v2744 = vpop.f32.mrf.mxu0
    %v2745 = vadd.f32 0.0, %v2744
    %v2746 = vpop.f32.mrf.mxu0
    %2747 = vmatprep.mubr.f32.mxu0 0.0
    %2748 = vmatmul.mubr.f32.gmra.mxu0 %v2654
    %v2749 = vpop.f32.mrf.mxu0
    %v2750 = vadd.f32 0.0, %v2749
    %v2751 = vpop.f32.mrf.mxu0
    %2752 = vmatprep.mubr.f32.mxu0 0.0
    %2753 = vmatmul.mubr.f32.gmra.mxu0 %v2657
    %v2754 = vpop.f32.mrf.mxu0
    %v2755 = vadd.f32 0.0, %v2754
    %v2756 = vpop.f32.mrf.mxu0
    %2757 = vmatprep.mubr.f32.mxu0 0.0
    %2758 = vmatmul.mubr.f32.gmra.mxu0 %v2660
    %v2759 = vpop.f32.mrf.mxu0
    %v2760 = vadd.f32 0.0, %v2759
    %v2761 = vpop.f32.mrf.mxu0
    %2762 = vmatprep.mubr.f32.mxu0 0.0
    %2763 = vmatmul.mubr.f32.gmra.mxu0 %v2663
    %v2764 = vpop.f32.mrf.mxu0
    %v2765 = vadd.f32 0.0, %v2764
    %v2766 = vpop.f32.mrf.mxu0
    %2767 = vdwg.mxu0
    %v2769 = vsel %vm307, %v1539, 0
    %v2772 = vsel %vm307, %v1544, 0
    %v2775 = vsel %vm307, %v1549, 0
    %v2778 = vsel %vm307, %v1554, 0
    %v2781 = vsel %vm307, %v1559, 0
    %v2784 = vsel %vm307, %v1564, 0
    %v2787 = vsel %vm307, %v1569, 0
    %v2790 = vsel %vm1223, %v1875, 0
    %2792 = vmatprep.subr.mxu0 0.0
    %2793 = vmatpush1.msra.mxu0 0.0
    %2794 = vmatprep.subr.mxu0 0.0
    %2795 = vmatpush1.msra.mxu0 0.0
    %2796 = vmatprep.subr.mxu0 0.0
    %2797 = vmatpush1.msra.mxu0 0.0
    %2798 = vmatprep.subr.mxu0 0.0
    %2799 = vmatpush1.msra.mxu0 0.0
    %2800 = vmatprep.subr.mxu0 0.0
    %2801 = vmatpush1.msra.mxu0 0.0
    %2802 = vmatprep.subr.mxu0 0.0
    %2803 = vmatpush1.msra.mxu0 0.0
    %2804 = vmatprep.subr.mxu0 0.0
    %2805 = vmatpush1.msra.mxu0 0.0
    %2806 = vmatprep.subr.mxu0 0.0
    %2807 = vmatpush1.msra.mxu0 0.0
    %2808 = vmatprep.subr.mxu0 0.0
    %2809 = vmatpush1.msra.mxu0 0.0
    %2810 = vmatprep.subr.mxu0 0.0
    %2811 = vmatpush1.msra.mxu0 0.0
    %2812 = vmatprep.subr.mxu0 0.0
    %2813 = vmatpush1.msra.mxu0 0.0
    %2814 = vmatprep.subr.mxu0 0.0
    %2815 = vmatpush1.msra.mxu0 0.0
    %2816 = vmatprep.subr.mxu0 0.0
    %2817 = vmatpush1.msra.mxu0 0.0
    %2818 = vmatprep.subr.mxu0 0.0
    %2819 = vmatpush1.msra.mxu0 %v2790
    %2820 = vmatprep.subr.mxu0 0.0
    %2821 = vmatpush1.msra.mxu0 %v1874
    %2822 = vmatprep.subr.mxu0 0.0
    %2823 = vmatpush1.msra.mxu0 %v1873
    %2824 = vmatprep.subr.mxu0 0.0
    %2825 = vmatpush2.msra.mxu0 0.0
    %2826 = vmatprep.subr.mxu0 0.0
    %2827 = vmatpush2.msra.mxu0 0.0
    %2828 = vmatprep.subr.mxu0 0.0
    %2829 = vmatpush2.msra.mxu0 0.0
    %2830 = vmatprep.subr.mxu0 0.0
    %2831 = vmatpush2.msra.mxu0 0.0
    %2832 = vmatprep.subr.mxu0 0.0
    %2833 = vmatpush2.msra.mxu0 0.0
    %2834 = vmatprep.subr.mxu0 0.0
    %2835 = vmatpush2.msra.mxu0 0.0
    %2836 = vmatprep.subr.mxu0 0.0
    %2837 = vmatpush2.msra.mxu0 0.0
    %2838 = vmatprep.subr.mxu0 0.0
    %2839 = vmatpush2.msra.mxu0 0.0
    %2840 = vmatprep.subr.mxu0 0.0
    %2841 = vmatpush2.msra.mxu0 0.0
    %2842 = vmatprep.subr.mxu0 0.0
    %2843 = vmatpush2.msra.mxu0 0.0
    %2844 = vmatprep.subr.mxu0 0.0
    %2845 = vmatpush2.msra.mxu0 0.0
    %2846 = vmatprep.subr.mxu0 0.0
    %2847 = vmatpush2.msra.mxu0 0.0
    %2848 = vmatprep.subr.mxu0 0.0
    %2849 = vmatpush2.msra.mxu0 0.0
    %2850 = vmatprep.subr.mxu0 0.0
    %2851 = vmatpush2.msra.mxu0 0.0
    %2852 = vmatprep.subr.mxu0 0.0
    %2853 = vmatpush2.msra.mxu0 0.0
    %2854 = vmatprep.subr.mxu0 0.0
    %2855 = vmatpush2.msra.mxu0 0.0
    %2856 = vmatprep.mubr.f32.mxu0 0.0
    %2857 = vmatmul.mubr.f32.gmra.mxu0 %v2769
    %v2858 = vpop.f32.mrf.mxu0
    %v2859 = vadd.f32 0.0, %v2858
    %v2860 = vpop.f32.mrf.mxu0
    %2861 = vmatprep.mubr.f32.mxu0 0.0
    %2862 = vmatmul.mubr.f32.gmra.mxu0 %v2772
    %v2863 = vpop.f32.mrf.mxu0
    %v2864 = vadd.f32 0.0, %v2863
    %v2865 = vpop.f32.mrf.mxu0
    %2866 = vmatprep.mubr.f32.mxu0 0.0
    %2867 = vmatmul.mubr.f32.gmra.mxu0 %v2775
    %v2868 = vpop.f32.mrf.mxu0
    %v2869 = vadd.f32 0.0, %v2868
    %v2870 = vpop.f32.mrf.mxu0
    %2871 = vmatprep.mubr.f32.mxu0 0.0
    %2872 = vmatmul.mubr.f32.gmra.mxu0 %v2778
    %v2873 = vpop.f32.mrf.mxu0
    %v2874 = vadd.f32 0.0, %v2873
    %v2875 = vpop.f32.mrf.mxu0
    %2876 = vmatprep.mubr.f32.mxu0 0.0
    %2877 = vmatmul.mubr.f32.gmra.mxu0 %v2781
    %v2878 = vpop.f32.mrf.mxu0
    %v2879 = vadd.f32 0.0, %v2878
    %v2880 = vpop.f32.mrf.mxu0
    %2881 = vmatprep.mubr.f32.mxu0 0.0
    %2882 = vmatmul.mubr.f32.gmra.mxu0 %v2784
    %v2883 = vpop.f32.mrf.mxu0
    %v2884 = vadd.f32 0.0, %v2883
    %v2885 = vpop.f32.mrf.mxu0
    %2886 = vmatprep.mubr.f32.mxu0 0.0
    %2887 = vmatmul.mubr.f32.gmra.mxu0 %v2787
    %v2888 = vpop.f32.mrf.mxu0
    %v2889 = vadd.f32 0.0, %v2888
    %v2890 = vpop.f32.mrf.mxu0
    %2891 = vdwg.mxu0
    %v2893 = vsel %vm307, %v1574, 0
    %v2896 = vsel %vm307, %v1579, 0
    %v2899 = vsel %vm307, %v1584, 0
    %v2902 = vsel %vm307, %v1589, 0
    %v2905 = vsel %vm307, %v1594, 0
    %v2908 = vsel %vm307, %v1599, 0
    %v2911 = vsel %vm307, %v1604, 0
    %v2914 = vsel %vm1223, %v1878, 0
    %2916 = vmatprep.subr.mxu0 0.0
    %2917 = vmatpush1.msra.mxu0 0.0
    %2918 = vmatprep.subr.mxu0 0.0
    %2919 = vmatpush1.msra.mxu0 0.0
    %2920 = vmatprep.subr.mxu0 0.0
    %2921 = vmatpush1.msra.mxu0 0.0
    %2922 = vmatprep.subr.mxu0 0.0
    %2923 = vmatpush1.msra.mxu0 0.0
    %2924 = vmatprep.subr.mxu0 0.0
    %2925 = vmatpush1.msra.mxu0 0.0
    %2926 = vmatprep.subr.mxu0 0.0
    %2927 = vmatpush1.msra.mxu0 0.0
    %2928 = vmatprep.subr.mxu0 0.0
    %2929 = vmatpush1.msra.mxu0 0.0
    %2930 = vmatprep.subr.mxu0 0.0
    %2931 = vmatpush1.msra.mxu0 0.0
    %2932 = vmatprep.subr.mxu0 0.0
    %2933 = vmatpush1.msra.mxu0 0.0
    %2934 = vmatprep.subr.mxu0 0.0
    %2935 = vmatpush1.msra.mxu0 0.0
    %2936 = vmatprep.subr.mxu0 0.0
    %2937 = vmatpush1.msra.mxu0 0.0
    %2938 = vmatprep.subr.mxu0 0.0
    %2939 = vmatpush1.msra.mxu0 0.0
    %2940 = vmatprep.subr.mxu0 0.0
    %2941 = vmatpush1.msra.mxu0 0.0
    %2942 = vmatprep.subr.mxu0 0.0
    %2943 = vmatpush1.msra.mxu0 %v2914
    %2944 = vmatprep.subr.mxu0 0.0
    %2945 = vmatpush1.msra.mxu0 %v1877
    %2946 = vmatprep.subr.mxu0 0.0
    %2947 = vmatpush1.msra.mxu0 %v1876
    %2948 = vmatprep.subr.mxu0 0.0
    %2949 = vmatpush2.msra.mxu0 0.0
    %2950 = vmatprep.subr.mxu0 0.0
    %2951 = vmatpush2.msra.mxu0 0.0
    %2952 = vmatprep.subr.mxu0 0.0
    %2953 = vmatpush2.msra.mxu0 0.0
    %2954 = vmatprep.subr.mxu0 0.0
    %2955 = vmatpush2.msra.mxu0 0.0
    %2956 = vmatprep.subr.mxu0 0.0
    %2957 = vmatpush2.msra.mxu0 0.0
    %2958 = vmatprep.subr.mxu0 0.0
    %2959 = vmatpush2.msra.mxu0 0.0
    %2960 = vmatprep.subr.mxu0 0.0
    %2961 = vmatpush2.msra.mxu0 0.0
    %2962 = vmatprep.subr.mxu0 0.0
    %2963 = vmatpush2.msra.mxu0 0.0
    %2964 = vmatprep.subr.mxu0 0.0
    %2965 = vmatpush2.msra.mxu0 0.0
    %2966 = vmatprep.subr.mxu0 0.0
    %2967 = vmatpush2.msra.mxu0 0.0
    %2968 = vmatprep.subr.mxu0 0.0
    %2969 = vmatpush2.msra.mxu0 0.0
    %2970 = vmatprep.subr.mxu0 0.0
    %2971 = vmatpush2.msra.mxu0 0.0
    %2972 = vmatprep.subr.mxu0 0.0
    %2973 = vmatpush2.msra.mxu0 0.0
    %2974 = vmatprep.subr.mxu0 0.0
    %2975 = vmatpush2.msra.mxu0 0.0
    %2976 = vmatprep.subr.mxu0 0.0
    %2977 = vmatpush2.msra.mxu0 0.0
    %2978 = vmatprep.subr.mxu0 0.0
    %2979 = vmatpush2.msra.mxu0 0.0
    %2980 = vmatprep.mubr.f32.mxu0 0.0
    %2981 = vmatmul.mubr.f32.gmra.mxu0 %v2893
    %v2982 = vpop.f32.mrf.mxu0
    %v2983 = vadd.f32 0.0, %v2982
    %v2984 = vpop.f32.mrf.mxu0
    %2985 = vmatprep.mubr.f32.mxu0 0.0
    %2986 = vmatmul.mubr.f32.gmra.mxu0 %v2896
    %v2987 = vpop.f32.mrf.mxu0
    %v2988 = vadd.f32 0.0, %v2987
    %v2989 = vpop.f32.mrf.mxu0
    %2990 = vmatprep.mubr.f32.mxu0 0.0
    %2991 = vmatmul.mubr.f32.gmra.mxu0 %v2899
    %v2992 = vpop.f32.mrf.mxu0
    %v2993 = vadd.f32 0.0, %v2992
    %v2994 = vpop.f32.mrf.mxu0
    %2995 = vmatprep.mubr.f32.mxu0 0.0
    %2996 = vmatmul.mubr.f32.gmra.mxu0 %v2902
    %v2997 = vpop.f32.mrf.mxu0
    %v2998 = vadd.f32 0.0, %v2997
    %v2999 = vpop.f32.mrf.mxu0
    %3000 = vmatprep.mubr.f32.mxu0 0.0
    %3001 = vmatmul.mubr.f32.gmra.mxu0 %v2905
    %v3002 = vpop.f32.mrf.mxu0
    %v3003 = vadd.f32 0.0, %v3002
    %v3004 = vpop.f32.mrf.mxu0
    %3005 = vmatprep.mubr.f32.mxu0 0.0
    %3006 = vmatmul.mubr.f32.gmra.mxu0 %v2908
    %v3007 = vpop.f32.mrf.mxu0
    %v3008 = vadd.f32 0.0, %v3007
    %v3009 = vpop.f32.mrf.mxu0
    %3010 = vmatprep.mubr.f32.mxu0 0.0
    %3011 = vmatmul.mubr.f32.gmra.mxu0 %v2911
    %v3012 = vpop.f32.mrf.mxu0
    %v3013 = vadd.f32 0.0, %v3012
    %v3014 = vpop.f32.mrf.mxu0
    %3015 = vdwg.mxu0
    %v3017 = vsel %vm307, %v1609, 0
    %v3020 = vsel %vm307, %v1614, 0
    %v3023 = vsel %vm307, %v1619, 0
    %v3026 = vsel %vm307, %v1624, 0
    %v3029 = vsel %vm307, %v1629, 0
    %v3032 = vsel %vm307, %v1634, 0
    %v3035 = vsel %vm307, %v1639, 0
    %v3038 = vsel %vm1223, %v1881, 0
    %3040 = vmatprep.subr.mxu0 0.0
    %3041 = vmatpush1.msra.mxu0 0.0
    %3042 = vmatprep.subr.mxu0 0.0
    %3043 = vmatpush1.msra.mxu0 0.0
    %3044 = vmatprep.subr.mxu0 0.0
    %3045 = vmatpush1.msra.mxu0 0.0
    %3046 = vmatprep.subr.mxu0 0.0
    %3047 = vmatpush1.msra.mxu0 0.0
    %3048 = vmatprep.subr.mxu0 0.0
    %3049 = vmatpush1.msra.mxu0 0.0
    %3050 = vmatprep.subr.mxu0 0.0
    %3051 = vmatpush1.msra.mxu0 0.0
    %3052 = vmatprep.subr.mxu0 0.0
    %3053 = vmatpush1.msra.mxu0 0.0
    %3054 = vmatprep.subr.mxu0 0.0
    %3055 = vmatpush1.msra.mxu0 0.0
    %3056 = vmatprep.subr.mxu0 0.0
    %3057 = vmatpush1.msra.mxu0 0.0
    %3058 = vmatprep.subr.mxu0 0.0
    %3059 = vmatpush1.msra.mxu0 0.0
    %3060 = vmatprep.subr.mxu0 0.0
    %3061 = vmatpush1.msra.mxu0 0.0
    %3062 = vmatprep.subr.mxu0 0.0
    %3063 = vmatpush1.msra.mxu0 0.0
    %3064 = vmatprep.subr.mxu0 0.0
    %3065 = vmatpush1.msra.mxu0 0.0
    %3066 = vmatprep.subr.mxu0 0.0
    %3067 = vmatpush1.msra.mxu0 %v3038
    %3068 = vmatprep.subr.mxu0 0.0
    %3069 = vmatpush1.msra.mxu0 %v1880
    %3070 = vmatprep.subr.mxu0 0.0
    %3071 = vmatpush1.msra.mxu0 %v1879
    %3072 = vmatprep.subr.mxu0 0.0
    %3073 = vmatpush2.msra.mxu0 0.0
    %3074 = vmatprep.subr.mxu0 0.0
    %3075 = vmatpush2.msra.mxu0 0.0
    %3076 = vmatprep.subr.mxu0 0.0
    %3077 = vmatpush2.msra.mxu0 0.0
    %3078 = vmatprep.subr.mxu0 0.0
    %3079 = vmatpush2.msra.mxu0 0.0
    %3080 = vmatprep.subr.mxu0 0.0
    %3081 = vmatpush2.msra.mxu0 0.0
    %3082 = vmatprep.subr.mxu0 0.0
    %3083 = vmatpush2.msra.mxu0 0.0
    %3084 = vmatprep.subr.mxu0 0.0
    %3085 = vmatpush2.msra.mxu0 0.0
    %3086 = vmatprep.subr.mxu0 0.0
    %3087 = vmatpush2.msra.mxu0 0.0
    %3088 = vmatprep.subr.mxu0 0.0
    %3089 = vmatpush2.msra.mxu0 0.0
    %3090 = vmatprep.subr.mxu0 0.0
    %3091 = vmatpush2.msra.mxu0 0.0
    %3092 = vmatprep.subr.mxu0 0.0
    %3093 = vmatpush2.msra.mxu0 0.0
    %3094 = vmatprep.subr.mxu0 0.0
    %3095 = vmatpush2.msra.mxu0 0.0
    %3096 = vmatprep.subr.mxu0 0.0
    %3097 = vmatpush2.msra.mxu0 0.0
    %3098 = vmatprep.subr.mxu0 0.0
    %3099 = vmatpush2.msra.mxu0 0.0
    %3100 = vmatprep.subr.mxu0 0.0
    %3101 = vmatpush2.msra.mxu0 0.0
    %3102 = vmatprep.subr.mxu0 0.0
    %3103 = vmatpush2.msra.mxu0 0.0
    %3104 = vmatprep.mubr.f32.mxu0 0.0
    %3105 = vmatmul.mubr.f32.gmra.mxu0 %v3017
    %v3106 = vpop.f32.mrf.mxu0
    %v3107 = vadd.f32 0.0, %v3106
    %v3108 = vpop.f32.mrf.mxu0
    %3109 = vmatprep.mubr.f32.mxu0 0.0
    %3110 = vmatmul.mubr.f32.gmra.mxu0 %v3020
    %v3111 = vpop.f32.mrf.mxu0
    %v3112 = vadd.f32 0.0, %v3111
    %v3113 = vpop.f32.mrf.mxu0
    %3114 = vmatprep.mubr.f32.mxu0 0.0
    %3115 = vmatmul.mubr.f32.gmra.mxu0 %v3023
    %v3116 = vpop.f32.mrf.mxu0
    %v3117 = vadd.f32 0.0, %v3116
    %v3118 = vpop.f32.mrf.mxu0
    %3119 = vmatprep.mubr.f32.mxu0 0.0
    %3120 = vmatmul.mubr.f32.gmra.mxu0 %v3026
    %v3121 = vpop.f32.mrf.mxu0
    %v3122 = vadd.f32 0.0, %v3121
    %v3123 = vpop.f32.mrf.mxu0
    %3124 = vmatprep.mubr.f32.mxu0 0.0
    %3125 = vmatmul.mubr.f32.gmra.mxu0 %v3029
    %v3126 = vpop.f32.mrf.mxu0
    %v3127 = vadd.f32 0.0, %v3126
    %v3128 = vpop.f32.mrf.mxu0
    %3129 = vmatprep.mubr.f32.mxu0 0.0
    %3130 = vmatmul.mubr.f32.gmra.mxu0 %v3032
    %v3131 = vpop.f32.mrf.mxu0
    %v3132 = vadd.f32 0.0, %v3131
    %v3133 = vpop.f32.mrf.mxu0
    %3134 = vmatprep.mubr.f32.mxu0 0.0
    %3135 = vmatmul.mubr.f32.gmra.mxu0 %v3035
    %v3136 = vpop.f32.mrf.mxu0
    %v3137 = vadd.f32 0.0, %v3136
    %v3138 = vpop.f32.mrf.mxu0
    %3139 = vdwg.mxu0
    %v3141 = vsel %vm307, %v1644, 0
    %v3144 = vsel %vm307, %v1649, 0
    %v3147 = vsel %vm307, %v1654, 0
    %v3150 = vsel %vm307, %v1659, 0
    %v3153 = vsel %vm307, %v1664, 0
    %v3156 = vsel %vm307, %v1669, 0
    %v3159 = vsel %vm307, %v1674, 0
    %v3162 = vsel %vm1223, %v1884, 0
    %3164 = vmatprep.subr.mxu0 0.0
    %3165 = vmatpush1.msra.mxu0 0.0
    %3166 = vmatprep.subr.mxu0 0.0
    %3167 = vmatpush1.msra.mxu0 0.0
    %3168 = vmatprep.subr.mxu0 0.0
    %3169 = vmatpush1.msra.mxu0 0.0
    %3170 = vmatprep.subr.mxu0 0.0
    %3171 = vmatpush1.msra.mxu0 0.0
    %3172 = vmatprep.subr.mxu0 0.0
    %3173 = vmatpush1.msra.mxu0 0.0
    %3174 = vmatprep.subr.mxu0 0.0
    %3175 = vmatpush1.msra.mxu0 0.0
    %3176 = vmatprep.subr.mxu0 0.0
    %3177 = vmatpush1.msra.mxu0 0.0
    %3178 = vmatprep.subr.mxu0 0.0
    %3179 = vmatpush1.msra.mxu0 0.0
    %3180 = vmatprep.subr.mxu0 0.0
    %3181 = vmatpush1.msra.mxu0 0.0
    %3182 = vmatprep.subr.mxu0 0.0
    %3183 = vmatpush1.msra.mxu0 0.0
    %3184 = vmatprep.subr.mxu0 0.0
    %3185 = vmatpush1.msra.mxu0 0.0
    %3186 = vmatprep.subr.mxu0 0.0
    %3187 = vmatpush1.msra.mxu0 0.0
    %3188 = vmatprep.subr.mxu0 0.0
    %3189 = vmatpush1.msra.mxu0 0.0
    %3190 = vmatprep.subr.mxu0 0.0
    %3191 = vmatpush1.msra.mxu0 %v3162
    %3192 = vmatprep.subr.mxu0 0.0
    %3193 = vmatpush1.msra.mxu0 %v1883
    %3194 = vmatprep.subr.mxu0 0.0
    %3195 = vmatpush1.msra.mxu0 %v1882
    %3196 = vmatprep.subr.mxu0 0.0
    %3197 = vmatpush2.msra.mxu0 0.0
    %3198 = vmatprep.subr.mxu0 0.0
    %3199 = vmatpush2.msra.mxu0 0.0
    %3200 = vmatprep.subr.mxu0 0.0
    %3201 = vmatpush2.msra.mxu0 0.0
    %3202 = vmatprep.subr.mxu0 0.0
    %3203 = vmatpush2.msra.mxu0 0.0
    %3204 = vmatprep.subr.mxu0 0.0
    %3205 = vmatpush2.msra.mxu0 0.0
    %3206 = vmatprep.subr.mxu0 0.0
    %3207 = vmatpush2.msra.mxu0 0.0
    %3208 = vmatprep.subr.mxu0 0.0
    %3209 = vmatpush2.msra.mxu0 0.0
    %3210 = vmatprep.subr.mxu0 0.0
    %3211 = vmatpush2.msra.mxu0 0.0
    %3212 = vmatprep.subr.mxu0 0.0
    %3213 = vmatpush2.msra.mxu0 0.0
    %3214 = vmatprep.subr.mxu0 0.0
    %3215 = vmatpush2.msra.mxu0 0.0
    %3216 = vmatprep.subr.mxu0 0.0
    %3217 = vmatpush2.msra.mxu0 0.0
    %3218 = vmatprep.subr.mxu0 0.0
    %3219 = vmatpush2.msra.mxu0 0.0
    %3220 = vmatprep.subr.mxu0 0.0
    %3221 = vmatpush2.msra.mxu0 0.0
    %3222 = vmatprep.subr.mxu0 0.0
    %3223 = vmatpush2.msra.mxu0 0.0
    %3224 = vmatprep.subr.mxu0 0.0
    %3225 = vmatpush2.msra.mxu0 0.0
    %3226 = vmatprep.subr.mxu0 0.0
    %3227 = vmatpush2.msra.mxu0 0.0
    %3228 = vmatprep.mubr.f32.mxu0 0.0
    %3229 = vmatmul.mubr.f32.gmra.mxu0 %v3141
    %v3230 = vpop.f32.mrf.mxu0
    %v3231 = vadd.f32 0.0, %v3230
    %v3232 = vpop.f32.mrf.mxu0
    %3233 = vmatprep.mubr.f32.mxu0 0.0
    %3234 = vmatmul.mubr.f32.gmra.mxu0 %v3144
    %v3235 = vpop.f32.mrf.mxu0
    %v3236 = vadd.f32 0.0, %v3235
    %v3237 = vpop.f32.mrf.mxu0
    %3238 = vmatprep.mubr.f32.mxu0 0.0
    %3239 = vmatmul.mubr.f32.gmra.mxu0 %v3147
    %v3240 = vpop.f32.mrf.mxu0
    %v3241 = vadd.f32 0.0, %v3240
    %v3242 = vpop.f32.mrf.mxu0
    %3243 = vmatprep.mubr.f32.mxu0 0.0
    %3244 = vmatmul.mubr.f32.gmra.mxu0 %v3150
    %v3245 = vpop.f32.mrf.mxu0
    %v3246 = vadd.f32 0.0, %v3245
    %v3247 = vpop.f32.mrf.mxu0
    %3248 = vmatprep.mubr.f32.mxu0 0.0
    %3249 = vmatmul.mubr.f32.gmra.mxu0 %v3153
    %v3250 = vpop.f32.mrf.mxu0
    %v3251 = vadd.f32 0.0, %v3250
    %v3252 = vpop.f32.mrf.mxu0
    %3253 = vmatprep.mubr.f32.mxu0 0.0
    %3254 = vmatmul.mubr.f32.gmra.mxu0 %v3156
    %v3255 = vpop.f32.mrf.mxu0
    %v3256 = vadd.f32 0.0, %v3255
    %v3257 = vpop.f32.mrf.mxu0
    %3258 = vmatprep.mubr.f32.mxu0 0.0
    %3259 = vmatmul.mubr.f32.gmra.mxu0 %v3159
    %v3260 = vpop.f32.mrf.mxu0
    %v3261 = vadd.f32 0.0, %v3260
    %v3262 = vpop.f32.mrf.mxu0
    %3263 = vdwg.mxu0
    %v3265 = vsel %vm307, %v1679, 0
    %v3268 = vsel %vm307, %v1684, 0
    %v3271 = vsel %vm307, %v1689, 0
    %v3274 = vsel %vm307, %v1694, 0
    %v3277 = vsel %vm307, %v1699, 0
    %v3280 = vsel %vm307, %v1704, 0
    %v3283 = vsel %vm307, %v1709, 0
    %v3286 = vsel %vm1223, %v1887, 0
    %3288 = vmatprep.subr.mxu0 0.0
    %3289 = vmatpush1.msra.mxu0 0.0
    %3290 = vmatprep.subr.mxu0 0.0
    %3291 = vmatpush1.msra.mxu0 0.0
    %3292 = vmatprep.subr.mxu0 0.0
    %3293 = vmatpush1.msra.mxu0 0.0
    %3294 = vmatprep.subr.mxu0 0.0
    %3295 = vmatpush1.msra.mxu0 0.0
    %3296 = vmatprep.subr.mxu0 0.0
    %3297 = vmatpush1.msra.mxu0 0.0
    %3298 = vmatprep.subr.mxu0 0.0
    %3299 = vmatpush1.msra.mxu0 0.0
    %3300 = vmatprep.subr.mxu0 0.0
    %3301 = vmatpush1.msra.mxu0 0.0
    %3302 = vmatprep.subr.mxu0 0.0
    %3303 = vmatpush1.msra.mxu0 0.0
    %3304 = vmatprep.subr.mxu0 0.0
    %3305 = vmatpush1.msra.mxu0 0.0
    %3306 = vmatprep.subr.mxu0 0.0
    %3307 = vmatpush1.msra.mxu0 0.0
    %3308 = vmatprep.subr.mxu0 0.0
    %3309 = vmatpush1.msra.mxu0 0.0
    %3310 = vmatprep.subr.mxu0 0.0
    %3311 = vmatpush1.msra.mxu0 0.0
    %3312 = vmatprep.subr.mxu0 0.0
    %3313 = vmatpush1.msra.mxu0 0.0
    %3314 = vmatprep.subr.mxu0 0.0
    %3315 = vmatpush1.msra.mxu0 %v3286
    %3316 = vmatprep.subr.mxu0 0.0
    %3317 = vmatpush1.msra.mxu0 %v1886
    %3318 = vmatprep.subr.mxu0 0.0
    %3319 = vmatpush1.msra.mxu0 %v1885
    %3320 = vmatprep.subr.mxu0 0.0
    %3321 = vmatpush2.msra.mxu0 0.0
    %3322 = vmatprep.subr.mxu0 0.0
    %3323 = vmatpush2.msra.mxu0 0.0
    %3324 = vmatprep.subr.mxu0 0.0
    %3325 = vmatpush2.msra.mxu0 0.0
    %3326 = vmatprep.subr.mxu0 0.0
    %3327 = vmatpush2.msra.mxu0 0.0
    %3328 = vmatprep.subr.mxu0 0.0
    %3329 = vmatpush2.msra.mxu0 0.0
    %3330 = vmatprep.subr.mxu0 0.0
    %3331 = vmatpush2.msra.mxu0 0.0
    %3332 = vmatprep.subr.mxu0 0.0
    %3333 = vmatpush2.msra.mxu0 0.0
    %3334 = vmatprep.subr.mxu0 0.0
    %3335 = vmatpush2.msra.mxu0 0.0
    %3336 = vmatprep.subr.mxu0 0.0
    %3337 = vmatpush2.msra.mxu0 0.0
    %3338 = vmatprep.subr.mxu0 0.0
    %3339 = vmatpush2.msra.mxu0 0.0
    %3340 = vmatprep.subr.mxu0 0.0
    %3341 = vmatpush2.msra.mxu0 0.0
    %3342 = vmatprep.subr.mxu0 0.0
    %3343 = vmatpush2.msra.mxu0 0.0
    %3344 = vmatprep.subr.mxu0 0.0
    %3345 = vmatpush2.msra.mxu0 0.0
    %3346 = vmatprep.subr.mxu0 0.0
    %3347 = vmatpush2.msra.mxu0 0.0
    %3348 = vmatprep.subr.mxu0 0.0
    %3349 = vmatpush2.msra.mxu0 0.0
    %3350 = vmatprep.subr.mxu0 0.0
    %3351 = vmatpush2.msra.mxu0 0.0
    %3352 = vmatprep.mubr.f32.mxu0 0.0
    %3353 = vmatmul.mubr.f32.gmra.mxu0 %v3265
    %v3354 = vpop.f32.mrf.mxu0
    %v3355 = vadd.f32 0.0, %v3354
    %v3356 = vpop.f32.mrf.mxu0
    %3357 = vmatprep.mubr.f32.mxu0 0.0
    %3358 = vmatmul.mubr.f32.gmra.mxu0 %v3268
    %v3359 = vpop.f32.mrf.mxu0
    %v3360 = vadd.f32 0.0, %v3359
    %v3361 = vpop.f32.mrf.mxu0
    %3362 = vmatprep.mubr.f32.mxu0 0.0
    %3363 = vmatmul.mubr.f32.gmra.mxu0 %v3271
    %v3364 = vpop.f32.mrf.mxu0
    %v3365 = vadd.f32 0.0, %v3364
    %v3366 = vpop.f32.mrf.mxu0
    %3367 = vmatprep.mubr.f32.mxu0 0.0
    %3368 = vmatmul.mubr.f32.gmra.mxu0 %v3274
    %v3369 = vpop.f32.mrf.mxu0
    %v3370 = vadd.f32 0.0, %v3369
    %v3371 = vpop.f32.mrf.mxu0
    %3372 = vmatprep.mubr.f32.mxu0 0.0
    %3373 = vmatmul.mubr.f32.gmra.mxu0 %v3277
    %v3374 = vpop.f32.mrf.mxu0
    %v3375 = vadd.f32 0.0, %v3374
    %v3376 = vpop.f32.mrf.mxu0
    %3377 = vmatprep.mubr.f32.mxu0 0.0
    %3378 = vmatmul.mubr.f32.gmra.mxu0 %v3280
    %v3379 = vpop.f32.mrf.mxu0
    %v3380 = vadd.f32 0.0, %v3379
    %v3381 = vpop.f32.mrf.mxu0
    %3382 = vmatprep.mubr.f32.mxu0 0.0
    %3383 = vmatmul.mubr.f32.gmra.mxu0 %v3283
    %v3384 = vpop.f32.mrf.mxu0
    %v3385 = vadd.f32 0.0, %v3384
    %v3386 = vpop.f32.mrf.mxu0
    %3387 = vdwg.mxu0
    %v3389 = vsel %vm307, %v1714, 0
    %v3392 = vsel %vm307, %v1719, 0
    %v3395 = vsel %vm307, %v1724, 0
    %v3398 = vsel %vm307, %v1729, 0
    %v3401 = vsel %vm307, %v1734, 0
    %v3404 = vsel %vm307, %v1739, 0
    %v3407 = vsel %vm307, %v1744, 0
    %v3410 = vsel %vm1223, %v1890, 0
    %3412 = vmatprep.subr.mxu0 0.0
    %3413 = vmatpush1.msra.mxu0 0.0
    %3414 = vmatprep.subr.mxu0 0.0
    %3415 = vmatpush1.msra.mxu0 0.0
    %3416 = vmatprep.subr.mxu0 0.0
    %3417 = vmatpush1.msra.mxu0 0.0
    %3418 = vmatprep.subr.mxu0 0.0
    %3419 = vmatpush1.msra.mxu0 0.0
    %3420 = vmatprep.subr.mxu0 0.0
    %3421 = vmatpush1.msra.mxu0 0.0
    %3422 = vmatprep.subr.mxu0 0.0
    %3423 = vmatpush1.msra.mxu0 0.0
    %3424 = vmatprep.subr.mxu0 0.0
    %3425 = vmatpush1.msra.mxu0 0.0
    %3426 = vmatprep.subr.mxu0 0.0
    %3427 = vmatpush1.msra.mxu0 0.0
    %3428 = vmatprep.subr.mxu0 0.0
    %3429 = vmatpush1.msra.mxu0 0.0
    %3430 = vmatprep.subr.mxu0 0.0
    %3431 = vmatpush1.msra.mxu0 0.0
    %3432 = vmatprep.subr.mxu0 0.0
    %3433 = vmatpush1.msra.mxu0 0.0
    %3434 = vmatprep.subr.mxu0 0.0
    %3435 = vmatpush1.msra.mxu0 0.0
    %3436 = vmatprep.subr.mxu0 0.0
    %3437 = vmatpush1.msra.mxu0 0.0
    %3438 = vmatprep.subr.mxu0 0.0
    %3439 = vmatpush1.msra.mxu0 %v3410
    %3440 = vmatprep.subr.mxu0 0.0
    %3441 = vmatpush1.msra.mxu0 %v1889
    %3442 = vmatprep.subr.mxu0 0.0
    %3443 = vmatpush1.msra.mxu0 %v1888
    %3444 = vmatprep.subr.mxu0 0.0
    %3445 = vmatpush2.msra.mxu0 0.0
    %3446 = vmatprep.subr.mxu0 0.0
    %3447 = vmatpush2.msra.mxu0 0.0
    %3448 = vmatprep.subr.mxu0 0.0
    %3449 = vmatpush2.msra.mxu0 0.0
    %3450 = vmatprep.subr.mxu0 0.0
    %3451 = vmatpush2.msra.mxu0 0.0
    %3452 = vmatprep.subr.mxu0 0.0
    %3453 = vmatpush2.msra.mxu0 0.0
    %3454 = vmatprep.subr.mxu0 0.0
    %3455 = vmatpush2.msra.mxu0 0.0
    %3456 = vmatprep.subr.mxu0 0.0
    %3457 = vmatpush2.msra.mxu0 0.0
    %3458 = vmatprep.subr.mxu0 0.0
    %3459 = vmatpush2.msra.mxu0 0.0
    %3460 = vmatprep.subr.mxu0 0.0
    %3461 = vmatpush2.msra.mxu0 0.0
    %3462 = vmatprep.subr.mxu0 0.0
    %3463 = vmatpush2.msra.mxu0 0.0
    %3464 = vmatprep.subr.mxu0 0.0
    %3465 = vmatpush2.msra.mxu0 0.0
    %3466 = vmatprep.subr.mxu0 0.0
    %3467 = vmatpush2.msra.mxu0 0.0
    %3468 = vmatprep.subr.mxu0 0.0
    %3469 = vmatpush2.msra.mxu0 0.0
    %3470 = vmatprep.subr.mxu0 0.0
    %3471 = vmatpush2.msra.mxu0 0.0
    %3472 = vmatprep.subr.mxu0 0.0
    %3473 = vmatpush2.msra.mxu0 0.0
    %3474 = vmatprep.subr.mxu0 0.0
    %3475 = vmatpush2.msra.mxu0 0.0
    %3476 = vmatprep.mubr.f32.mxu0 0.0
    %3477 = vmatmul.mubr.f32.gmra.mxu0 %v3389
    %v3478 = vpop.f32.mrf.mxu0
    %v3479 = vadd.f32 0.0, %v3478
    %v3480 = vpop.f32.mrf.mxu0
    %3481 = vmatprep.mubr.f32.mxu0 0.0
    %3482 = vmatmul.mubr.f32.gmra.mxu0 %v3392
    %v3483 = vpop.f32.mrf.mxu0
    %v3484 = vadd.f32 0.0, %v3483
    %v3485 = vpop.f32.mrf.mxu0
    %3486 = vmatprep.mubr.f32.mxu0 0.0
    %3487 = vmatmul.mubr.f32.gmra.mxu0 %v3395
    %v3488 = vpop.f32.mrf.mxu0
    %v3489 = vadd.f32 0.0, %v3488
    %v3490 = vpop.f32.mrf.mxu0
    %3491 = vmatprep.mubr.f32.mxu0 0.0
    %3492 = vmatmul.mubr.f32.gmra.mxu0 %v3398
    %v3493 = vpop.f32.mrf.mxu0
    %v3494 = vadd.f32 0.0, %v3493
    %v3495 = vpop.f32.mrf.mxu0
    %3496 = vmatprep.mubr.f32.mxu0 0.0
    %3497 = vmatmul.mubr.f32.gmra.mxu0 %v3401
    %v3498 = vpop.f32.mrf.mxu0
    %v3499 = vadd.f32 0.0, %v3498
    %v3500 = vpop.f32.mrf.mxu0
    %3501 = vmatprep.mubr.f32.mxu0 0.0
    %3502 = vmatmul.mubr.f32.gmra.mxu0 %v3404
    %v3503 = vpop.f32.mrf.mxu0
    %v3504 = vadd.f32 0.0, %v3503
    %v3505 = vpop.f32.mrf.mxu0
    %3506 = vmatprep.mubr.f32.mxu0 0.0
    %3507 = vmatmul.mubr.f32.gmra.mxu0 %v3407
    %v3508 = vpop.f32.mrf.mxu0
    %v3509 = vadd.f32 0.0, %v3508
    %v3510 = vpop.f32.mrf.mxu0
    %3511 = vdwg.mxu0
    %v3513 = vsel %vm307, %v1749, 0
    %v3516 = vsel %vm307, %v1754, 0
    %v3519 = vsel %vm307, %v1759, 0
    %v3522 = vsel %vm307, %v1764, 0
    %v3525 = vsel %vm307, %v1769, 0
    %v3528 = vsel %vm307, %v1774, 0
    %v3531 = vsel %vm307, %v1779, 0
    %v3534 = vsel %vm1223, %v1893, 0
    %3536 = vmatprep.subr.mxu0 0.0
    %3537 = vmatpush1.msra.mxu0 0.0
    %3538 = vmatprep.subr.mxu0 0.0
    %3539 = vmatpush1.msra.mxu0 0.0
    %3540 = vmatprep.subr.mxu0 0.0
    %3541 = vmatpush1.msra.mxu0 0.0
    %3542 = vmatprep.subr.mxu0 0.0
    %3543 = vmatpush1.msra.mxu0 0.0
    %3544 = vmatprep.subr.mxu0 0.0
    %3545 = vmatpush1.msra.mxu0 0.0
    %3546 = vmatprep.subr.mxu0 0.0
    %3547 = vmatpush1.msra.mxu0 0.0
    %3548 = vmatprep.subr.mxu0 0.0
    %3549 = vmatpush1.msra.mxu0 0.0
    %3550 = vmatprep.subr.mxu0 0.0
    %3551 = vmatpush1.msra.mxu0 0.0
    %3552 = vmatprep.subr.mxu0 0.0
    %3553 = vmatpush1.msra.mxu0 0.0
    %3554 = vmatprep.subr.mxu0 0.0
    %3555 = vmatpush1.msra.mxu0 0.0
    %3556 = vmatprep.subr.mxu0 0.0
    %3557 = vmatpush1.msra.mxu0 0.0
    %3558 = vmatprep.subr.mxu0 0.0
    %3559 = vmatpush1.msra.mxu0 0.0
    %3560 = vmatprep.subr.mxu0 0.0
    %3561 = vmatpush1.msra.mxu0 0.0
    %3562 = vmatprep.subr.mxu0 0.0
    %3563 = vmatpush1.msra.mxu0 %v3534
    %3564 = vmatprep.subr.mxu0 0.0
    %3565 = vmatpush1.msra.mxu0 %v1892
    %3566 = vmatprep.subr.mxu0 0.0
    %3567 = vmatpush1.msra.mxu0 %v1891
    %3568 = vmatprep.subr.mxu0 0.0
    %3569 = vmatpush2.msra.mxu0 0.0
    %3570 = vmatprep.subr.mxu0 0.0
    %3571 = vmatpush2.msra.mxu0 0.0
    %3572 = vmatprep.subr.mxu0 0.0
    %3573 = vmatpush2.msra.mxu0 0.0
    %3574 = vmatprep.subr.mxu0 0.0
    %3575 = vmatpush2.msra.mxu0 0.0
    %3576 = vmatprep.subr.mxu0 0.0
    %3577 = vmatpush2.msra.mxu0 0.0
    %3578 = vmatprep.subr.mxu0 0.0
    %3579 = vmatpush2.msra.mxu0 0.0
    %3580 = vmatprep.subr.mxu0 0.0
    %3581 = vmatpush2.msra.mxu0 0.0
    %3582 = vmatprep.subr.mxu0 0.0
    %3583 = vmatpush2.msra.mxu0 0.0
    %3584 = vmatprep.subr.mxu0 0.0
    %3585 = vmatpush2.msra.mxu0 0.0
    %3586 = vmatprep.subr.mxu0 0.0
    %3587 = vmatpush2.msra.mxu0 0.0
    %3588 = vmatprep.subr.mxu0 0.0
    %3589 = vmatpush2.msra.mxu0 0.0
    %3590 = vmatprep.subr.mxu0 0.0
    %3591 = vmatpush2.msra.mxu0 0.0
    %3592 = vmatprep.subr.mxu0 0.0
    %3593 = vmatpush2.msra.mxu0 0.0
    %3594 = vmatprep.subr.mxu0 0.0
    %3595 = vmatpush2.msra.mxu0 0.0
    %3596 = vmatprep.subr.mxu0 0.0
    %3597 = vmatpush2.msra.mxu0 0.0
    %3598 = vmatprep.subr.mxu0 0.0
    %3599 = vmatpush2.msra.mxu0 0.0
    %3600 = vmatprep.mubr.f32.mxu0 0.0
    %3601 = vmatmul.mubr.f32.gmra.mxu0 %v3513
    %v3602 = vpop.f32.mrf.mxu0
    %v3603 = vadd.f32 0.0, %v3602
    %v3604 = vpop.f32.mrf.mxu0
    %3605 = vmatprep.mubr.f32.mxu0 0.0
    %3606 = vmatmul.mubr.f32.gmra.mxu0 %v3516
    %v3607 = vpop.f32.mrf.mxu0
    %v3608 = vadd.f32 0.0, %v3607
    %v3609 = vpop.f32.mrf.mxu0
    %3610 = vmatprep.mubr.f32.mxu0 0.0
    %3611 = vmatmul.mubr.f32.gmra.mxu0 %v3519
    %v3612 = vpop.f32.mrf.mxu0
    %v3613 = vadd.f32 0.0, %v3612
    %v3614 = vpop.f32.mrf.mxu0
    %3615 = vmatprep.mubr.f32.mxu0 0.0
    %3616 = vmatmul.mubr.f32.gmra.mxu0 %v3522
    %v3617 = vpop.f32.mrf.mxu0
    %v3618 = vadd.f32 0.0, %v3617
    %v3619 = vpop.f32.mrf.mxu0
    %3620 = vmatprep.mubr.f32.mxu0 0.0
    %3621 = vmatmul.mubr.f32.gmra.mxu0 %v3525
    %v3622 = vpop.f32.mrf.mxu0
    %v3623 = vadd.f32 0.0, %v3622
    %v3624 = vpop.f32.mrf.mxu0
    %3625 = vmatprep.mubr.f32.mxu0 0.0
    %3626 = vmatmul.mubr.f32.gmra.mxu0 %v3528
    %v3627 = vpop.f32.mrf.mxu0
    %v3628 = vadd.f32 0.0, %v3627
    %v3629 = vpop.f32.mrf.mxu0
    %3630 = vmatprep.mubr.f32.mxu0 0.0
    %3631 = vmatmul.mubr.f32.gmra.mxu0 %v3531
    %v3632 = vpop.f32.mrf.mxu0
    %v3633 = vadd.f32 0.0, %v3632
    %v3634 = vpop.f32.mrf.mxu0
    %3635 = vdwg.mxu0
    %v3637 = vsel %vm307, %v1784, 0
    %v3640 = vsel %vm307, %v1789, 0
    %v3643 = vsel %vm307, %v1794, 0
    %v3646 = vsel %vm307, %v1799, 0
    %v3649 = vsel %vm307, %v1804, 0
    %v3652 = vsel %vm307, %v1809, 0
    %v3655 = vsel %vm307, %v1814, 0
    %v3658 = vsel %vm1223, %v1896, 0
    %3660 = vmatprep.subr.mxu0 0.0
    %3661 = vmatpush1.msra.mxu0 0.0
    %3662 = vmatprep.subr.mxu0 0.0
    %3663 = vmatpush1.msra.mxu0 0.0
    %3664 = vmatprep.subr.mxu0 0.0
    %3665 = vmatpush1.msra.mxu0 0.0
    %3666 = vmatprep.subr.mxu0 0.0
    %3667 = vmatpush1.msra.mxu0 0.0
    %3668 = vmatprep.subr.mxu0 0.0
    %3669 = vmatpush1.msra.mxu0 0.0
    %3670 = vmatprep.subr.mxu0 0.0
    %3671 = vmatpush1.msra.mxu0 0.0
    %3672 = vmatprep.subr.mxu0 0.0
    %3673 = vmatpush1.msra.mxu0 0.0
    %3674 = vmatprep.subr.mxu0 0.0
    %3675 = vmatpush1.msra.mxu0 0.0
    %3676 = vmatprep.subr.mxu0 0.0
    %3677 = vmatpush1.msra.mxu0 0.0
    %3678 = vmatprep.subr.mxu0 0.0
    %3679 = vmatpush1.msra.mxu0 0.0
    %3680 = vmatprep.subr.mxu0 0.0
    %3681 = vmatpush1.msra.mxu0 0.0
    %3682 = vmatprep.subr.mxu0 0.0
    %3683 = vmatpush1.msra.mxu0 0.0
    %3684 = vmatprep.subr.mxu0 0.0
    %3685 = vmatpush1.msra.mxu0 0.0
    %3686 = vmatprep.subr.mxu0 0.0
    %3687 = vmatpush1.msra.mxu0 %v3658
    %3688 = vmatprep.subr.mxu0 0.0
    %3689 = vmatpush1.msra.mxu0 %v1895
    %3690 = vmatprep.subr.mxu0 0.0
    %3691 = vmatpush1.msra.mxu0 %v1894
    %3692 = vmatprep.subr.mxu0 0.0
    %3693 = vmatpush2.msra.mxu0 0.0
    %3694 = vmatprep.subr.mxu0 0.0
    %3695 = vmatpush2.msra.mxu0 0.0
    %3696 = vmatprep.subr.mxu0 0.0
    %3697 = vmatpush2.msra.mxu0 0.0
    %3698 = vmatprep.subr.mxu0 0.0
    %3699 = vmatpush2.msra.mxu0 0.0
    %3700 = vmatprep.subr.mxu0 0.0
    %3701 = vmatpush2.msra.mxu0 0.0
    %3702 = vmatprep.subr.mxu0 0.0
    %3703 = vmatpush2.msra.mxu0 0.0
    %3704 = vmatprep.subr.mxu0 0.0
    %3705 = vmatpush2.msra.mxu0 0.0
    %3706 = vmatprep.subr.mxu0 0.0
    %3707 = vmatpush2.msra.mxu0 0.0
    %3708 = vmatprep.subr.mxu0 0.0
    %3709 = vmatpush2.msra.mxu0 0.0
    %3710 = vmatprep.subr.mxu0 0.0
    %3711 = vmatpush2.msra.mxu0 0.0
    %3712 = vmatprep.subr.mxu0 0.0
    %3713 = vmatpush2.msra.mxu0 0.0
    %3714 = vmatprep.subr.mxu0 0.0
    %3715 = vmatpush2.msra.mxu0 0.0
    %3716 = vmatprep.subr.mxu0 0.0
    %3717 = vmatpush2.msra.mxu0 0.0
    %3718 = vmatprep.subr.mxu0 0.0
    %3719 = vmatpush2.msra.mxu0 0.0
    %3720 = vmatprep.subr.mxu0 0.0
    %3721 = vmatpush2.msra.mxu0 0.0
    %3722 = vmatprep.subr.mxu0 0.0
    %3723 = vmatpush2.msra.mxu0 0.0
    %3724 = vmatprep.mubr.f32.mxu0 0.0
    %3725 = vmatmul.mubr.f32.gmra.mxu0 %v3637
    %v3726 = vpop.f32.mrf.mxu0
    %v3727 = vadd.f32 0.0, %v3726
    %v3728 = vpop.f32.mrf.mxu0
    %3729 = vmatprep.mubr.f32.mxu0 0.0
    %3730 = vmatmul.mubr.f32.gmra.mxu0 %v3640
    %v3731 = vpop.f32.mrf.mxu0
    %v3732 = vadd.f32 0.0, %v3731
    %v3733 = vpop.f32.mrf.mxu0
    %3734 = vmatprep.mubr.f32.mxu0 0.0
    %3735 = vmatmul.mubr.f32.gmra.mxu0 %v3643
    %v3736 = vpop.f32.mrf.mxu0
    %v3737 = vadd.f32 0.0, %v3736
    %v3738 = vpop.f32.mrf.mxu0
    %3739 = vmatprep.mubr.f32.mxu0 0.0
    %3740 = vmatmul.mubr.f32.gmra.mxu0 %v3646
    %v3741 = vpop.f32.mrf.mxu0
    %v3742 = vadd.f32 0.0, %v3741
    %v3743 = vpop.f32.mrf.mxu0
    %3744 = vmatprep.mubr.f32.mxu0 0.0
    %3745 = vmatmul.mubr.f32.gmra.mxu0 %v3649
    %v3746 = vpop.f32.mrf.mxu0
    %v3747 = vadd.f32 0.0, %v3746
    %v3748 = vpop.f32.mrf.mxu0
    %3749 = vmatprep.mubr.f32.mxu0 0.0
    %3750 = vmatmul.mubr.f32.gmra.mxu0 %v3652
    %v3751 = vpop.f32.mrf.mxu0
    %v3752 = vadd.f32 0.0, %v3751
    %v3753 = vpop.f32.mrf.mxu0
    %3754 = vmatprep.mubr.f32.mxu0 0.0
    %3755 = vmatmul.mubr.f32.gmra.mxu0 %v3655
    %v3756 = vpop.f32.mrf.mxu0
    %v3757 = vadd.f32 0.0, %v3756
    %v3758 = vpop.f32.mrf.mxu0
    %3759 = vdwg.mxu0
    %v3761 = vsel %vm307, %v1819, 0
    %v3764 = vsel %vm307, %v1824, 0
    %v3767 = vsel %vm307, %v1829, 0
    %v3770 = vsel %vm307, %v1834, 0
    %v3773 = vsel %vm307, %v1839, 0
    %v3776 = vsel %vm307, %v1844, 0
    %v3779 = vsel %vm307, %v1849, 0
    %v3782 = vsel %vm1223, %v1899, 0
    %3784 = vmatprep.subr.mxu0 0.0
    %3785 = vmatpush1.msra.mxu0 0.0
    %3786 = vmatprep.subr.mxu0 0.0
    %3787 = vmatpush1.msra.mxu0 0.0
    %3788 = vmatprep.subr.mxu0 0.0
    %3789 = vmatpush1.msra.mxu0 0.0
    %3790 = vmatprep.subr.mxu0 0.0
    %3791 = vmatpush1.msra.mxu0 0.0
    %3792 = vmatprep.subr.mxu0 0.0
    %3793 = vmatpush1.msra.mxu0 0.0
    %3794 = vmatprep.subr.mxu0 0.0
    %3795 = vmatpush1.msra.mxu0 0.0
    %3796 = vmatprep.subr.mxu0 0.0
    %3797 = vmatpush1.msra.mxu0 0.0
    %3798 = vmatprep.subr.mxu0 0.0
    %3799 = vmatpush1.msra.mxu0 0.0
    %3800 = vmatprep.subr.mxu0 0.0
    %3801 = vmatpush1.msra.mxu0 0.0
    %3802 = vmatprep.subr.mxu0 0.0
    %3803 = vmatpush1.msra.mxu0 0.0
    %3804 = vmatprep.subr.mxu0 0.0
    %3805 = vmatpush1.msra.mxu0 0.0
    %3806 = vmatprep.subr.mxu0 0.0
    %3807 = vmatpush1.msra.mxu0 0.0
    %3808 = vmatprep.subr.mxu0 0.0
    %3809 = vmatpush1.msra.mxu0 0.0
    %3810 = vmatprep.subr.mxu0 0.0
    %3811 = vmatpush1.msra.mxu0 %v3782
    %3812 = vmatprep.subr.mxu0 0.0
    %3813 = vmatpush1.msra.mxu0 %v1898
    %3814 = vmatprep.subr.mxu0 0.0
    %3815 = vmatpush1.msra.mxu0 %v1897
    %3816 = vmatprep.subr.mxu0 0.0
    %3817 = vmatpush2.msra.mxu0 0.0
    %3818 = vmatprep.subr.mxu0 0.0
    %3819 = vmatpush2.msra.mxu0 0.0
    %3820 = vmatprep.subr.mxu0 0.0
    %3821 = vmatpush2.msra.mxu0 0.0
    %3822 = vmatprep.subr.mxu0 0.0
    %3823 = vmatpush2.msra.mxu0 0.0
    %3824 = vmatprep.subr.mxu0 0.0
    %3825 = vmatpush2.msra.mxu0 0.0
    %3826 = vmatprep.subr.mxu0 0.0
    %3827 = vmatpush2.msra.mxu0 0.0
    %3828 = vmatprep.subr.mxu0 0.0
    %3829 = vmatpush2.msra.mxu0 0.0
    %3830 = vmatprep.subr.mxu0 0.0
    %3831 = vmatpush2.msra.mxu0 0.0
    %3832 = vmatprep.subr.mxu0 0.0
    %3833 = vmatpush2.msra.mxu0 0.0
    %3834 = vmatprep.subr.mxu0 0.0
    %3835 = vmatpush2.msra.mxu0 0.0
    %3836 = vmatprep.subr.mxu0 0.0
    %3837 = vmatpush2.msra.mxu0 0.0
    %3838 = vmatprep.subr.mxu0 0.0
    %3839 = vmatpush2.msra.mxu0 0.0
    %3840 = vmatprep.subr.mxu0 0.0
    %3841 = vmatpush2.msra.mxu0 0.0
    %3842 = vmatprep.subr.mxu0 0.0
    %3843 = vmatpush2.msra.mxu0 0.0
    %3844 = vmatprep.subr.mxu0 0.0
    %3845 = vmatpush2.msra.mxu0 0.0
    %3846 = vmatprep.subr.mxu0 0.0
    %3847 = vmatpush2.msra.mxu0 0.0
    %3848 = vmatprep.mubr.f32.mxu0 0.0
    %3849 = vmatmul.mubr.f32.gmra.mxu0 %v3761
    %v3850 = vpop.f32.mrf.mxu0
    %v3851 = vadd.f32 0.0, %v3850
    %v3852 = vpop.f32.mrf.mxu0
    %3853 = vmatprep.mubr.f32.mxu0 0.0
    %3854 = vmatmul.mubr.f32.gmra.mxu0 %v3764
    %v3855 = vpop.f32.mrf.mxu0
    %v3856 = vadd.f32 0.0, %v3855
    %v3857 = vpop.f32.mrf.mxu0
    %3858 = vmatprep.mubr.f32.mxu0 0.0
    %3859 = vmatmul.mubr.f32.gmra.mxu0 %v3767
    %v3860 = vpop.f32.mrf.mxu0
    %v3861 = vadd.f32 0.0, %v3860
    %v3862 = vpop.f32.mrf.mxu0
    %3863 = vmatprep.mubr.f32.mxu0 0.0
    %3864 = vmatmul.mubr.f32.gmra.mxu0 %v3770
    %v3865 = vpop.f32.mrf.mxu0
    %v3866 = vadd.f32 0.0, %v3865
    %v3867 = vpop.f32.mrf.mxu0
    %3868 = vmatprep.mubr.f32.mxu0 0.0
    %3869 = vmatmul.mubr.f32.gmra.mxu0 %v3773
    %v3870 = vpop.f32.mrf.mxu0
    %v3871 = vadd.f32 0.0, %v3870
    %v3872 = vpop.f32.mrf.mxu0
    %3873 = vmatprep.mubr.f32.mxu0 0.0
    %3874 = vmatmul.mubr.f32.gmra.mxu0 %v3776
    %v3875 = vpop.f32.mrf.mxu0
    %v3876 = vadd.f32 0.0, %v3875
    %v3877 = vpop.f32.mrf.mxu0
    %3878 = vmatprep.mubr.f32.mxu0 0.0
    %3879 = vmatmul.mubr.f32.gmra.mxu0 %v3779
    %v3880 = vpop.f32.mrf.mxu0
    %v3881 = vadd.f32 0.0, %v3880
    %v3882 = vpop.f32.mrf.mxu0
    %3883 = vdwg.mxu0
    %vm3884 = vcmask 293888
    %v3885 = vsel %vm3884, %v1991, 0.0
    %v3886 = vsel %vm3884, %v2115, 0.0
    %v3887 = vadd.f32 %v3885, %v3886
    %v3888 = vsel %vm3884, %v2239, 0.0
    %v3889 = vadd.f32 %v3887, %v3888
    %v3890 = vsel %vm3884, %v2363, 0.0
    %v3891 = vadd.f32 %v3889, %v3890
    %v3892 = vsel %vm3884, %v2487, 0.0
    %v3893 = vadd.f32 %v3891, %v3892
    %v3894 = vsel %vm3884, %v2611, 0.0
    %v3895 = vadd.f32 %v3893, %v3894
    %v3896 = vsel %vm3884, %v2735, 0.0
    %v3897 = vadd.f32 %v3895, %v3896
    %v3898 = vsel %vm3884, %v2859, 0.0
    %v3899 = vadd.f32 %v3897, %v3898
    %v3900 = vsel %vm3884, %v2983, 0.0
    %v3901 = vadd.f32 %v3899, %v3900
    %v3902 = vsel %vm3884, %v3107, 0.0
    %v3903 = vadd.f32 %v3901, %v3902
    %v3904 = vsel %vm3884, %v3231, 0.0
    %v3905 = vadd.f32 %v3903, %v3904
    %v3906 = vsel %vm3884, %v3355, 0.0
    %v3907 = vadd.f32 %v3905, %v3906
    %v3908 = vsel %vm3884, %v3479, 0.0
    %v3909 = vadd.f32 %v3907, %v3908
    %v3910 = vsel %vm3884, %v3603, 0.0
    %v3911 = vadd.f32 %v3909, %v3910
    %v3912 = vsel %vm3884, %v3727, 0.0
    %v3913 = vadd.f32 %v3911, %v3912
    %v3914 = vsel %vm3884, %v3851, 0.0
    %v3915 = vadd.f32 %v3913, %v3914
    %v3916 = vsel %vm3884, %v1996, 0.0
    %v3917 = vsel %vm3884, %v2120, 0.0
    %v3918 = vadd.f32 %v3916, %v3917
    %v3919 = vsel %vm3884, %v2244, 0.0
    %v3920 = vadd.f32 %v3918, %v3919
    %v3921 = vsel %vm3884, %v2368, 0.0
    %v3922 = vadd.f32 %v3920, %v3921
    %v3923 = vsel %vm3884, %v2492, 0.0
    %v3924 = vadd.f32 %v3922, %v3923
    %v3925 = vsel %vm3884, %v2616, 0.0
    %v3926 = vadd.f32 %v3924, %v3925
    %v3927 = vsel %vm3884, %v2740, 0.0
    %v3928 = vadd.f32 %v3926, %v3927
    %v3929 = vsel %vm3884, %v2864, 0.0
    %v3930 = vadd.f32 %v3928, %v3929
    %v3931 = vsel %vm3884, %v2988, 0.0
    %v3932 = vadd.f32 %v3930, %v3931
    %v3933 = vsel %vm3884, %v3112, 0.0
    %v3934 = vadd.f32 %v3932, %v3933
    %v3935 = vsel %vm3884, %v3236, 0.0
    %v3936 = vadd.f32 %v3934, %v3935
    %v3937 = vsel %vm3884, %v3360, 0.0
    %v3938 = vadd.f32 %v3936, %v3937
    %v3939 = vsel %vm3884, %v3484, 0.0
    %v3940 = vadd.f32 %v3938, %v3939
    %v3941 = vsel %vm3884, %v3608, 0.0
    %v3942 = vadd.f32 %v3940, %v3941
    %v3943 = vsel %vm3884, %v3732, 0.0
    %v3944 = vadd.f32 %v3942, %v3943
    %v3945 = vsel %vm3884, %v3856, 0.0
    %v3946 = vadd.f32 %v3944, %v3945
    %v3947 = vsel %vm3884, %v2001, 0.0
    %v3948 = vsel %vm3884, %v2125, 0.0
    %v3949 = vadd.f32 %v3947, %v3948
    %v3950 = vsel %vm3884, %v2249, 0.0
    %v3951 = vadd.f32 %v3949, %v3950
    %v3952 = vsel %vm3884, %v2373, 0.0
    %v3953 = vadd.f32 %v3951, %v3952
    %v3954 = vsel %vm3884, %v2497, 0.0
    %v3955 = vadd.f32 %v3953, %v3954
    %v3956 = vsel %vm3884, %v2621, 0.0
    %v3957 = vadd.f32 %v3955, %v3956
    %v3958 = vsel %vm3884, %v2745, 0.0
    %v3959 = vadd.f32 %v3957, %v3958
    %v3960 = vsel %vm3884, %v2869, 0.0
    %v3961 = vadd.f32 %v3959, %v3960
    %v3962 = vsel %vm3884, %v2993, 0.0
    %v3963 = vadd.f32 %v3961, %v3962
    %v3964 = vsel %vm3884, %v3117, 0.0
    %v3965 = vadd.f32 %v3963, %v3964
    %v3966 = vsel %vm3884, %v3241, 0.0
    %v3967 = vadd.f32 %v3965, %v3966
    %v3968 = vsel %vm3884, %v3365, 0.0
    %v3969 = vadd.f32 %v3967, %v3968
    %v3970 = vsel %vm3884, %v3489, 0.0
    %v3971 = vadd.f32 %v3969, %v3970
    %v3972 = vsel %vm3884, %v3613, 0.0
    %v3973 = vadd.f32 %v3971, %v3972
    %v3974 = vsel %vm3884, %v3737, 0.0
    %v3975 = vadd.f32 %v3973, %v3974
    %v3976 = vsel %vm3884, %v3861, 0.0
    %v3977 = vadd.f32 %v3975, %v3976
    %v3978 = vsel %vm3884, %v2006, 0.0
    %v3979 = vsel %vm3884, %v2130, 0.0
    %v3980 = vadd.f32 %v3978, %v3979
    %v3981 = vsel %vm3884, %v2254, 0.0
    %v3982 = vadd.f32 %v3980, %v3981
    %v3983 = vsel %vm3884, %v2378, 0.0
    %v3984 = vadd.f32 %v3982, %v3983
    %v3985 = vsel %vm3884, %v2502, 0.0
    %v3986 = vadd.f32 %v3984, %v3985
    %v3987 = vsel %vm3884, %v2626, 0.0
    %v3988 = vadd.f32 %v3986, %v3987
    %v3989 = vsel %vm3884, %v2750, 0.0
    %v3990 = vadd.f32 %v3988, %v3989
    %v3991 = vsel %vm3884, %v2874, 0.0
    %v3992 = vadd.f32 %v3990, %v3991
    %v3993 = vsel %vm3884, %v2998, 0.0
    %v3994 = vadd.f32 %v3992, %v3993
    %v3995 = vsel %vm3884, %v3122, 0.0
    %v3996 = vadd.f32 %v3994, %v3995
    %v3997 = vsel %vm3884, %v3246, 0.0
    %v3998 = vadd.f32 %v3996, %v3997
    %v3999 = vsel %vm3884, %v3370, 0.0
    %v4000 = vadd.f32 %v3998, %v3999
    %v4001 = vsel %vm3884, %v3494, 0.0
    %v4002 = vadd.f32 %v4000, %v4001
    %v4003 = vsel %vm3884, %v3618, 0.0
    %v4004 = vadd.f32 %v4002, %v4003
    %v4005 = vsel %vm3884, %v3742, 0.0
    %v4006 = vadd.f32 %v4004, %v4005
    %v4007 = vsel %vm3884, %v3866, 0.0
    %v4008 = vadd.f32 %v4006, %v4007
    %v4009 = vsel %vm3884, %v2011, 0.0
    %v4010 = vsel %vm3884, %v2135, 0.0
    %v4011 = vadd.f32 %v4009, %v4010
    %v4012 = vsel %vm3884, %v2259, 0.0
    %v4013 = vadd.f32 %v4011, %v4012
    %v4014 = vsel %vm3884, %v2383, 0.0
    %v4015 = vadd.f32 %v4013, %v4014
    %v4016 = vsel %vm3884, %v2507, 0.0
    %v4017 = vadd.f32 %v4015, %v4016
    %v4018 = vsel %vm3884, %v2631, 0.0
    %v4019 = vadd.f32 %v4017, %v4018
    %v4020 = vsel %vm3884, %v2755, 0.0
    %v4021 = vadd.f32 %v4019, %v4020
    %v4022 = vsel %vm3884, %v2879, 0.0
    %v4023 = vadd.f32 %v4021, %v4022
    %v4024 = vsel %vm3884, %v3003, 0.0
    %v4025 = vadd.f32 %v4023, %v4024
    %v4026 = vsel %vm3884, %v3127, 0.0
    %v4027 = vadd.f32 %v4025, %v4026
    %v4028 = vsel %vm3884, %v3251, 0.0
    %v4029 = vadd.f32 %v4027, %v4028
    %v4030 = vsel %vm3884, %v3375, 0.0
    %v4031 = vadd.f32 %v4029, %v4030
    %v4032 = vsel %vm3884, %v3499, 0.0
    %v4033 = vadd.f32 %v4031, %v4032
    %v4034 = vsel %vm3884, %v3623, 0.0
    %v4035 = vadd.f32 %v4033, %v4034
    %v4036 = vsel %vm3884, %v3747, 0.0
    %v4037 = vadd.f32 %v4035, %v4036
    %v4038 = vsel %vm3884, %v3871, 0.0
    %v4039 = vadd.f32 %v4037, %v4038
    %v4040 = vsel %vm3884, %v2016, 0.0
    %v4041 = vsel %vm3884, %v2140, 0.0
    %v4042 = vadd.f32 %v4040, %v4041
    %v4043 = vsel %vm3884, %v2264, 0.0
    %v4044 = vadd.f32 %v4042, %v4043
    %v4045 = vsel %vm3884, %v2388, 0.0
    %v4046 = vadd.f32 %v4044, %v4045
    %v4047 = vsel %vm3884, %v2512, 0.0
    %v4048 = vadd.f32 %v4046, %v4047
    %v4049 = vsel %vm3884, %v2636, 0.0
    %v4050 = vadd.f32 %v4048, %v4049
    %v4051 = vsel %vm3884, %v2760, 0.0
    %v4052 = vadd.f32 %v4050, %v4051
    %v4053 = vsel %vm3884, %v2884, 0.0
    %v4054 = vadd.f32 %v4052, %v4053
    %v4055 = vsel %vm3884, %v3008, 0.0
    %v4056 = vadd.f32 %v4054, %v4055
    %v4057 = vsel %vm3884, %v3132, 0.0
    %v4058 = vadd.f32 %v4056, %v4057
    %v4059 = vsel %vm3884, %v3256, 0.0
    %v4060 = vadd.f32 %v4058, %v4059
    %v4061 = vsel %vm3884, %v3380, 0.0
    %v4062 = vadd.f32 %v4060, %v4061
    %v4063 = vsel %vm3884, %v3504, 0.0
    %v4064 = vadd.f32 %v4062, %v4063
    %v4065 = vsel %vm3884, %v3628, 0.0
    %v4066 = vadd.f32 %v4064, %v4065
    %v4067 = vsel %vm3884, %v3752, 0.0
    %v4068 = vadd.f32 %v4066, %v4067
    %v4069 = vsel %vm3884, %v3876, 0.0
    %v4070 = vadd.f32 %v4068, %v4069
    %v4071 = vsel %vm3884, %v2021, 0.0
    %v4072 = vsel %vm3884, %v2145, 0.0
    %v4073 = vadd.f32 %v4071, %v4072
    %v4074 = vsel %vm3884, %v2269, 0.0
    %v4075 = vadd.f32 %v4073, %v4074
    %v4076 = vsel %vm3884, %v2393, 0.0
    %v4077 = vadd.f32 %v4075, %v4076
    %v4078 = vsel %vm3884, %v2517, 0.0
    %v4079 = vadd.f32 %v4077, %v4078
    %v4080 = vsel %vm3884, %v2641, 0.0
    %v4081 = vadd.f32 %v4079, %v4080
    %v4082 = vsel %vm3884, %v2765, 0.0
    %v4083 = vadd.f32 %v4081, %v4082
    %v4084 = vsel %vm3884, %v2889, 0.0
    %v4085 = vadd.f32 %v4083, %v4084
    %v4086 = vsel %vm3884, %v3013, 0.0
    %v4087 = vadd.f32 %v4085, %v4086
    %v4088 = vsel %vm3884, %v3137, 0.0
    %v4089 = vadd.f32 %v4087, %v4088
    %v4090 = vsel %vm3884, %v3261, 0.0
    %v4091 = vadd.f32 %v4089, %v4090
    %v4092 = vsel %vm3884, %v3385, 0.0
    %v4093 = vadd.f32 %v4091, %v4092
    %v4094 = vsel %vm3884, %v3509, 0.0
    %v4095 = vadd.f32 %v4093, %v4094
    %v4096 = vsel %vm3884, %v3633, 0.0
    %v4097 = vadd.f32 %v4095, %v4096
    %v4098 = vsel %vm3884, %v3757, 0.0
    %v4099 = vadd.f32 %v4097, %v4098
    %v4100 = vsel %vm3884, %v3881, 0.0
    %v4101 = vadd.f32 %v4099, %v4100
    %v4102 = vld [vmem:[%s6] sm:$0x1]
    %v4103 = vld [vmem:[%s7] sm:$0x1]
    %v4104 = vsel %vm3884, %v3915, 0.0
    %v4105 = vsel %vm3884, %v3946, 0.0
    %v4106 = vadd.f32 %v4104, %v4105
    %v4107 = vsel %vm3884, %v3977, 0.0
    %v4108 = vadd.f32 %v4106, %v4107
    %v4109 = vsel %vm3884, %v4008, 0.0
    %v4110 = vadd.f32 %v4108, %v4109
    %v4111 = vsel %vm3884, %v4039, 0.0
    %v4112 = vadd.f32 %v4110, %v4111
    %v4113 = vsel %vm3884, %v4070, 0.0
    %v4114 = vadd.f32 %v4112, %v4113
    %v4115 = vsel %vm3884, %v4101, 0.0
    %v4116 = vadd.f32 %v4114, %v4115
    %v4117 = vrot.slane %v4116, 4
    %v4118 = vadd.f32 %v4116, %v4117
    %v4119 = vrot.slane %v4118, 2
    %v4120 = vadd.f32 %v4118, %v4119
    %v4121 = vrot.slane %v4120, 1
    %v4122 = vadd.f32 %v4120, %v4121
    %v4123 = vmul.f32 %v4122, 0.02
    %v4124 = vmul.f32 %v3915, %v3915
    %v4125 = vmul.f32 %v3946, %v3946
    %v4126 = vmul.f32 %v3977, %v3977
    %v4127 = vmul.f32 %v4008, %v4008
    %v4128 = vmul.f32 %v4039, %v4039
    %v4129 = vmul.f32 %v4070, %v4070
    %v4130 = vmul.f32 %v4101, %v4101
    %v4131 = vsel %vm3884, %v4124, 0.0
    %v4132 = vsel %vm3884, %v4125, 0.0
    %v4133 = vadd.f32 %v4131, %v4132
    %v4134 = vsel %vm3884, %v4126, 0.0
    %v4135 = vadd.f32 %v4133, %v4134
    %v4136 = vsel %vm3884, %v4127, 0.0
    %v4137 = vadd.f32 %v4135, %v4136
    %v4138 = vsel %vm3884, %v4128, 0.0
    %v4139 = vadd.f32 %v4137, %v4138
    %v4140 = vsel %vm3884, %v4129, 0.0
    %v4141 = vadd.f32 %v4139, %v4140
    %v4142 = vsel %vm3884, %v4130, 0.0
    %v4143 = vadd.f32 %v4141, %v4142
    %v4144 = vrot.slane %v4143, 4
    %v4145 = vadd.f32 %v4143, %v4144
    %v4146 = vrot.slane %v4145, 2
    %v4147 = vadd.f32 %v4145, %v4146
    %v4148 = vrot.slane %v4147, 1
    %v4149 = vadd.f32 %v4147, %v4148
    %v4150 = vmul.f32 %v4149, 0.02
    %v4151 = vmul.f32 %v4123, %v4123
    %v4152 = vsub.f32 %v4150, %v4151
    %v4153 = vadd.f32 %v4152, 1e-05
    %v4154 = vrsqrt.pop %v4153
    %v4155 = vmul.f32 %v4102, %v4154
    %v4156 = vmul.f32 %v4123, %v4155
    %v4157 = vsub.f32 %v4103, %v4156
    %v4159 = vlaneseq
    %v4160 = vshrl.u32 %v4159, 7
    %v4161 = vsub.s32 0, %v4160
    %v4162 = vrot.slane %v4155, %v4161
    %v4164 = vmul.f32 %v3915, %v4162
    %v4165 = vmul.f32 %v3946, %v4162
    %v4166 = vmul.f32 %v3977, %v4162
    %v4167 = vmul.f32 %v4008, %v4162
    %v4168 = vmul.f32 %v4039, %v4162
    %v4169 = vmul.f32 %v4070, %v4162
    %v4170 = vmul.f32 %v4101, %v4162
    %v4172 = vlaneseq
    %v4173 = vshrl.u32 %v4172, 7
    %v4174 = vsub.s32 0, %v4173
    %v4175 = vrot.slane %v4157, %v4174
    %v4177 = vadd.f32 %v4164, %v4175
    %v4178 = vadd.f32 %v4165, %v4175
    %v4179 = vadd.f32 %v4166, %v4175
    %v4180 = vadd.f32 %v4167, %v4175
    %v4181 = vadd.f32 %v4168, %v4175
    %v4182 = vadd.f32 %v4169, %v4175
    %v4183 = vadd.f32 %v4170, %v4175
    %vm4184 = vcmp.ge.f32.partialorder %v4177, 0.0
    %vm4185 = vcmp.ge.f32.partialorder %v4178, 0.0
    %vm4186 = vcmp.ge.f32.partialorder %v4179, 0.0
    %vm4187 = vcmp.ge.f32.partialorder %v4180, 0.0
    %vm4188 = vcmp.ge.f32.partialorder %v4181, 0.0
    %vm4189 = vcmp.ge.f32.partialorder %v4182, 0.0
    %vm4190 = vcmp.ge.f32.partialorder %v4183, 0.0
    %v4191 = vmul.f32 %v4177, 0.01
    %v4192 = vmul.f32 %v4178, 0.01
    %v4193 = vmul.f32 %v4179, 0.01
    %v4194 = vmul.f32 %v4180, 0.01
    %v4195 = vmul.f32 %v4181, 0.01
    %v4196 = vmul.f32 %v4182, 0.01
    %v4197 = vmul.f32 %v4183, 0.01
    %v4198 = vsel %vm4184, %v4177, %v4191
    %v4199 = vsel %vm4185, %v4178, %v4192
    %v4200 = vsel %vm4186, %v4179, %v4193
    %v4201 = vsel %vm4187, %v4180, %v4194
    %v4202 = vsel %vm4188, %v4181, %v4195
    %v4203 = vsel %vm4189, %v4182, %v4196
    %v4204 = vsel %vm4190, %v4183, %v4197
    %v4205 = vld [vmem:[%s8] sm:$0xf]
    %v4206 = vld [vmem:[%s8 + $0x4] sm:$0xf]
    %v4207 = vld [vmem:[%s8 + $0x8] sm:$0xf]
    %v4208 = vld [vmem:[%s8 + $0xc] sm:$0xf]
    %v4209 = vld [vmem:[%s8 + $0x10] sm:$0xf]
    %v4210 = vld [vmem:[%s8 + $0x14] sm:$0xf]
    %v4211 = vld [vmem:[%s8 + $0x18] sm:$0xf]
    %v4212 = vld [vmem:[%s8 + $0x1c] sm:$0xf]
    %v4213 = vld [vmem:[%s8 + $0x20] sm:$0xf]
    %v4214 = vld [vmem:[%s8 + $0x24] sm:$0xf]
    %v4215 = vld [vmem:[%s8 + $0x28] sm:$0xf]
    %v4216 = vld [vmem:[%s8 + $0x2c] sm:$0xf]
    %v4217 = vld [vmem:[%s8 + $0x30] sm:$0xf]
    %v4218 = vld [vmem:[%s8 + $0x34] sm:$0xf]
    %v4219 = vld [vmem:[%s8 + $0x38] sm:$0xf]
    %v4220 = vld [vmem:[%s8 + $0x3c] sm:$0xf]
    %v4221 = vld [vmem:[%s8 + $0x40] sm:$0xf]
    %v4222 = vld [vmem:[%s8 + $0x44] sm:$0xf]
    %v4223 = vld [vmem:[%s8 + $0x48] sm:$0xf]
    %v4224 = vld [vmem:[%s8 + $0x4c] sm:$0xf]
    %v4225 = vld [vmem:[%s8 + $0x50] sm:$0xf]
    %v4226 = vld [vmem:[%s8 + $0x54] sm:$0xf]
    %v4227 = vld [vmem:[%s8 + $0x58] sm:$0xf]
    %v4228 = vld [vmem:[%s8 + $0x5c] sm:$0xf]
    %v4229 = vld [vmem:[%s8 + $0x60] sm:$0xf]
    %v4230 = vld [vmem:[%s8 + $0x64] sm:$0xf]
    %v4231 = vld [vmem:[%s8 + $0x68] sm:$0xf]
    %v4232 = vld [vmem:[%s8 + $0x6c] sm:$0xf]
    %v4233 = vld [vmem:[%s8 + $0x70] sm:$0xf]
    %v4234 = vld [vmem:[%s8 + $0x74] sm:$0xf]
    %v4235 = vld [vmem:[%s8 + $0x78] sm:$0xf]
    %v4236 = vld [vmem:[%s8 + $0x7c] sm:$0xf]
    %v4237 = vld [vmem:[%s8 + $0x80] sm:$0xf]
    %v4238 = vld [vmem:[%s8 + $0x84] sm:$0xf]
    %v4239 = vld [vmem:[%s8 + $0x88] sm:$0xf]
    %v4240 = vld [vmem:[%s8 + $0x8c] sm:$0xf]
    %v4241 = vld [vmem:[%s8 + $0x90] sm:$0xf]
    %v4242 = vld [vmem:[%s8 + $0x94] sm:$0xf]
    %v4243 = vld [vmem:[%s8 + $0x98] sm:$0xf]
    %v4244 = vld [vmem:[%s8 + $0x9c] sm:$0xf]
    %v4245 = vld [vmem:[%s8 + $0xa0] sm:$0xf]
    %v4246 = vld [vmem:[%s8 + $0xa4] sm:$0xf]
    %v4247 = vld [vmem:[%s8 + $0xa8] sm:$0xf]
    %v4248 = vld [vmem:[%s8 + $0xac] sm:$0xf]
    %v4249 = vld [vmem:[%s8 + $0xb0] sm:$0xf]
    %v4250 = vld [vmem:[%s8 + $0xb4] sm:$0xf]
    %v4251 = vld [vmem:[%s8 + $0xb8] sm:$0xf]
    %v4252 = vld [vmem:[%s8 + $0xbc] sm:$0xf]
    %v4253 = vld [vmem:[%s8 + $0xc0] sm:$0xf]
    %v4254 = vld [vmem:[%s8 + $0xc4] sm:$0xf]
    %v4255 = vld [vmem:[%s8 + $0xc8] sm:$0xf]
    %v4256 = vld [vmem:[%s8 + $0xcc] sm:$0xf]
    %v4257 = vld [vmem:[%s8 + $0xd0] sm:$0xf]
    %v4258 = vld [vmem:[%s8 + $0xd4] sm:$0xf]
    %v4259 = vld [vmem:[%s8 + $0xd8] sm:$0xf]
    %v4260 = vld [vmem:[%s8 + $0xdc] sm:$0xf]
    %v4261 = vld [vmem:[%s8 + $0xe0] sm:$0xf]
    %v4262 = vld [vmem:[%s8 + $0xe4] sm:$0xf]
    %v4263 = vld [vmem:[%s8 + $0xe8] sm:$0xf]
    %v4264 = vld [vmem:[%s8 + $0xec] sm:$0xf]
    %v4265 = vld [vmem:[%s8 + $0xf0] sm:$0xf]
    %v4266 = vld [vmem:[%s8 + $0xf4] sm:$0xf]
    %v4267 = vld [vmem:[%s8 + $0xf8] sm:$0xf]
    %v4268 = vld [vmem:[%s8 + $0xfc] sm:$0xf]
    %v4269 = vunpack.c.l.bf16 %v4205
    %v4270 = vunpack.c.l.bf16 %v4206
    %v4271 = vunpack.c.l.bf16 %v4207
    %v4272 = vunpack.c.l.bf16 %v4208
    %v4273 = vunpack.c.l.bf16 %v4209
    %v4274 = vunpack.c.l.bf16 %v4210
    %v4275 = vunpack.c.l.bf16 %v4211
    %v4276 = vunpack.c.l.bf16 %v4212
    %v4277 = vunpack.c.l.bf16 %v4213
    %v4278 = vunpack.c.l.bf16 %v4214
    %v4279 = vunpack.c.l.bf16 %v4215
    %v4280 = vunpack.c.l.bf16 %v4216
    %v4281 = vunpack.c.l.bf16 %v4217
    %v4282 = vunpack.c.l.bf16 %v4218
    %v4283 = vunpack.c.l.bf16 %v4219
    %v4284 = vunpack.c.l.bf16 %v4220
    %v4285 = vunpack.c.l.bf16 %v4221
    %v4286 = vunpack.c.l.bf16 %v4222
    %v4287 = vunpack.c.l.bf16 %v4223
    %v4288 = vunpack.c.l.bf16 %v4224
    %v4289 = vunpack.c.l.bf16 %v4225
    %v4290 = vunpack.c.l.bf16 %v4226
    %v4291 = vunpack.c.l.bf16 %v4227
    %v4292 = vunpack.c.l.bf16 %v4228
    %v4293 = vunpack.c.l.bf16 %v4229
    %v4294 = vunpack.c.l.bf16 %v4230
    %v4295 = vunpack.c.l.bf16 %v4231
    %v4296 = vunpack.c.l.bf16 %v4232
    %v4297 = vunpack.c.l.bf16 %v4233
    %v4298 = vunpack.c.l.bf16 %v4234
    %v4299 = vunpack.c.l.bf16 %v4235
    %v4300 = vunpack.c.l.bf16 %v4236
    %v4301 = vunpack.c.l.bf16 %v4237
    %v4302 = vunpack.c.l.bf16 %v4238
    %v4303 = vunpack.c.l.bf16 %v4239
    %v4304 = vunpack.c.l.bf16 %v4240
    %v4305 = vunpack.c.l.bf16 %v4241
    %v4306 = vunpack.c.l.bf16 %v4242
    %v4307 = vunpack.c.l.bf16 %v4243
    %v4308 = vunpack.c.l.bf16 %v4244
    %v4309 = vunpack.c.l.bf16 %v4245
    %v4310 = vunpack.c.l.bf16 %v4246
    %v4311 = vunpack.c.l.bf16 %v4247
    %v4312 = vunpack.c.l.bf16 %v4248
    %v4313 = vunpack.c.l.bf16 %v4249
    %v4314 = vunpack.c.l.bf16 %v4250
    %v4315 = vunpack.c.l.bf16 %v4251
    %v4316 = vunpack.c.l.bf16 %v4252
    %v4317 = vunpack.c.l.bf16 %v4253
    %v4318 = vunpack.c.l.bf16 %v4254
    %v4319 = vunpack.c.l.bf16 %v4255
    %v4320 = vunpack.c.l.bf16 %v4256
    %v4321 = vunpack.c.l.bf16 %v4257
    %v4322 = vunpack.c.l.bf16 %v4258
    %v4323 = vunpack.c.l.bf16 %v4259
    %v4324 = vunpack.c.l.bf16 %v4260
    %v4325 = vunpack.c.l.bf16 %v4261
    %v4326 = vunpack.c.l.bf16 %v4262
    %v4327 = vunpack.c.l.bf16 %v4263
    %v4328 = vunpack.c.l.bf16 %v4264
    %v4329 = vunpack.c.l.bf16 %v4265
    %v4330 = vunpack.c.l.bf16 %v4266
    %v4331 = vunpack.c.l.bf16 %v4267
    %v4332 = vunpack.c.l.bf16 %v4268
    %vm4333 = vcmask 457728
    %v4335 = vsel %vm4333, %v4269, 0
    %v4338 = vsel %vm4333, %v4270, 0
    %v4341 = vsel %vm4333, %v4271, 0
    %v4344 = vsel %vm4333, %v4272, 0
    %v4347 = vsel %vm4333, %v4273, 0
    %v4350 = vsel %vm4333, %v4274, 0
    %v4353 = vsel %vm4333, %v4275, 0
    %v4356 = vsel %vm4333, %v4276, 0
    %v4359 = vsel %vm4333, %v4277, 0
    %v4362 = vsel %vm4333, %v4278, 0
    %v4365 = vsel %vm4333, %v4279, 0
    %v4368 = vsel %vm4333, %v4280, 0
    %v4371 = vsel %vm4333, %v4281, 0
    %v4374 = vsel %vm4333, %v4282, 0
    %v4377 = vsel %vm4333, %v4283, 0
    %v4380 = vsel %vm4333, %v4284, 0
    %v4383 = vsel %vm4333, %v4285, 0
    %v4386 = vsel %vm4333, %v4286, 0
    %v4389 = vsel %vm4333, %v4287, 0
    %v4392 = vsel %vm4333, %v4288, 0
    %v4395 = vsel %vm4333, %v4289, 0
    %v4398 = vsel %vm4333, %v4290, 0
    %v4401 = vsel %vm4333, %v4291, 0
    %v4404 = vsel %vm4333, %v4292, 0
    %v4407 = vsel %vm4333, %v4293, 0
    %v4410 = vsel %vm4333, %v4294, 0
    %v4413 = vsel %vm4333, %v4295, 0
    %v4416 = vsel %vm4333, %v4296, 0
    %v4419 = vsel %vm4333, %v4297, 0
    %v4422 = vsel %vm4333, %v4298, 0
    %v4425 = vsel %vm4333, %v4299, 0
    %v4428 = vsel %vm4333, %v4300, 0
    %v4431 = vsel %vm4333, %v4301, 0
    %v4434 = vsel %vm4333, %v4302, 0
    %v4437 = vsel %vm4333, %v4303, 0
    %v4440 = vsel %vm4333, %v4304, 0
    %v4443 = vsel %vm4333, %v4305, 0
    %v4446 = vsel %vm4333, %v4306, 0
    %v4449 = vsel %vm4333, %v4307, 0
    %v4452 = vsel %vm4333, %v4308, 0
    %v4455 = vsel %vm4333, %v4309, 0
    %v4458 = vsel %vm4333, %v4310, 0
    %v4461 = vsel %vm4333, %v4311, 0
    %v4464 = vsel %vm4333, %v4312, 0
    %v4467 = vsel %vm4333, %v4313, 0
    %v4470 = vsel %vm4333, %v4314, 0
    %v4473 = vsel %vm4333, %v4315, 0
    %v4476 = vsel %vm4333, %v4316, 0
    %v4479 = vsel %vm4333, %v4317, 0
    %v4482 = vsel %vm4333, %v4318, 0
    %v4485 = vsel %vm4333, %v4319, 0
    %v4488 = vsel %vm4333, %v4320, 0
    %v4491 = vsel %vm4333, %v4321, 0
    %v4494 = vsel %vm4333, %v4322, 0
    %v4497 = vsel %vm4333, %v4323, 0
    %v4500 = vsel %vm4333, %v4324, 0
    %v4503 = vsel %vm4333, %v4325, 0
    %v4506 = vsel %vm4333, %v4326, 0
    %v4509 = vsel %vm4333, %v4327, 0
    %v4512 = vsel %vm4333, %v4328, 0
    %v4515 = vsel %vm4333, %v4329, 0
    %v4518 = vsel %vm4333, %v4330, 0
    %v4521 = vsel %vm4333, %v4331, 0
    %v4524 = vsel %vm4333, %v4332, 0
    %4526 = vmatprep.subr.mxu0 0.0
    %4527 = vmatpush1.msra.mxu0 0.0
    %4528 = vmatprep.subr.mxu0 0.0
    %4529 = vmatpush1.msra.mxu0 0.0
    %4530 = vmatprep.subr.mxu0 0.0
    %4531 = vmatpush1.msra.mxu0 0.0
    %4532 = vmatprep.subr.mxu0 0.0
    %4533 = vmatpush1.msra.mxu0 0.0
    %4534 = vmatprep.subr.mxu0 0.0
    %4535 = vmatpush1.msra.mxu0 0.0
    %4536 = vmatprep.subr.mxu0 0.0
    %4537 = vmatpush1.msra.mxu0 0.0
    %4538 = vmatprep.subr.mxu0 0.0
    %4539 = vmatpush1.msra.mxu0 0.0
    %4540 = vmatprep.subr.mxu0 0.0
    %4541 = vmatpush1.msra.mxu0 0.0
    %4542 = vmatprep.subr.mxu0 0.0
    %4543 = vmatpush1.msra.mxu0 0.0
    %4544 = vmatprep.subr.mxu0 0.0
    %4545 = vmatpush1.msra.mxu0 %v4204
    %4546 = vmatprep.subr.mxu0 0.0
    %4547 = vmatpush1.msra.mxu0 %v4203
    %4548 = vmatprep.subr.mxu0 0.0
    %4549 = vmatpush1.msra.mxu0 %v4202
    %4550 = vmatprep.subr.mxu0 0.0
    %4551 = vmatpush1.msra.mxu0 %v4201
    %4552 = vmatprep.subr.mxu0 0.0
    %4553 = vmatpush1.msra.mxu0 %v4200
    %4554 = vmatprep.subr.mxu0 0.0
    %4555 = vmatpush1.msra.mxu0 %v4199
    %4556 = vmatprep.subr.mxu0 0.0
    %4557 = vmatpush1.msra.mxu0 %v4198
    %4558 = vmatprep.subr.mxu0 0.0
    %4559 = vmatpush2.msra.mxu0 0.0
    %4560 = vmatprep.subr.mxu0 0.0
    %4561 = vmatpush2.msra.mxu0 0.0
    %4562 = vmatprep.subr.mxu0 0.0
    %4563 = vmatpush2.msra.mxu0 0.0
    %4564 = vmatprep.subr.mxu0 0.0
    %4565 = vmatpush2.msra.mxu0 0.0
    %4566 = vmatprep.subr.mxu0 0.0
    %4567 = vmatpush2.msra.mxu0 0.0
    %4568 = vmatprep.subr.mxu0 0.0
    %4569 = vmatpush2.msra.mxu0 0.0
    %4570 = vmatprep.subr.mxu0 0.0
    %4571 = vmatpush2.msra.mxu0 0.0
    %4572 = vmatprep.subr.mxu0 0.0
    %4573 = vmatpush2.msra.mxu0 0.0
    %4574 = vmatprep.subr.mxu0 0.0
    %4575 = vmatpush2.msra.mxu0 0.0
    %4576 = vmatprep.subr.mxu0 0.0
    %4577 = vmatpush2.msra.mxu0 0.0
    %4578 = vmatprep.subr.mxu0 0.0
    %4579 = vmatpush2.msra.mxu0 0.0
    %4580 = vmatprep.subr.mxu0 0.0
    %4581 = vmatpush2.msra.mxu0 0.0
    %4582 = vmatprep.subr.mxu0 0.0
    %4583 = vmatpush2.msra.mxu0 0.0
    %4584 = vmatprep.subr.mxu0 0.0
    %4585 = vmatpush2.msra.mxu0 0.0
    %4586 = vmatprep.subr.mxu0 0.0
    %4587 = vmatpush2.msra.mxu0 0.0
    %4588 = vmatprep.subr.mxu0 0.0
    %4589 = vmatpush2.msra.mxu0 0.0
    %4590 = vmatprep.mubr.f32.mxu0 0.0
    %4591 = vmatmul.mubr.f32.gmra.mxu0 %v4335
    %v4592 = vpop.f32.mrf.mxu0
    %v4593 = vadd.f32 0.0, %v4592
    %v4594 = vpop.f32.mrf.mxu0
    %4595 = vmatprep.mubr.f32.mxu0 0.0
    %4596 = vmatmul.mubr.f32.gmra.mxu0 %v4338
    %v4597 = vpop.f32.mrf.mxu0
    %v4598 = vadd.f32 0.0, %v4597
    %v4599 = vpop.f32.mrf.mxu0
    %4600 = vmatprep.mubr.f32.mxu0 0.0
    %4601 = vmatmul.mubr.f32.gmra.mxu0 %v4341
    %v4602 = vpop.f32.mrf.mxu0
    %v4603 = vadd.f32 0.0, %v4602
    %v4604 = vpop.f32.mrf.mxu0
    %4605 = vmatprep.mubr.f32.mxu0 0.0
    %4606 = vmatmul.mubr.f32.gmra.mxu0 %v4344
    %v4607 = vpop.f32.mrf.mxu0
    %v4608 = vadd.f32 0.0, %v4607
    %v4609 = vpop.f32.mrf.mxu0
    %4610 = vmatprep.mubr.f32.mxu0 0.0
    %4611 = vmatmul.mubr.f32.gmra.mxu0 %v4347
    %v4612 = vpop.f32.mrf.mxu0
    %v4613 = vadd.f32 0.0, %v4612
    %v4614 = vpop.f32.mrf.mxu0
    %4615 = vmatprep.mubr.f32.mxu0 0.0
    %4616 = vmatmul.mubr.f32.gmra.mxu0 %v4350
    %v4617 = vpop.f32.mrf.mxu0
    %v4618 = vadd.f32 0.0, %v4617
    %v4619 = vpop.f32.mrf.mxu0
    %4620 = vmatprep.mubr.f32.mxu0 0.0
    %4621 = vmatmul.mubr.f32.gmra.mxu0 %v4353
    %v4622 = vpop.f32.mrf.mxu0
    %v4623 = vadd.f32 0.0, %v4622
    %v4624 = vpop.f32.mrf.mxu0
    %4625 = vmatprep.mubr.f32.mxu0 0.0
    %4626 = vmatmul.mubr.f32.gmra.mxu0 %v4356
    %v4627 = vpop.f32.mrf.mxu0
    %v4628 = vadd.f32 0.0, %v4627
    %v4629 = vpop.f32.mrf.mxu0
    %4630 = vmatprep.mubr.f32.mxu0 0.0
    %4631 = vmatmul.mubr.f32.gmra.mxu0 %v4359
    %v4632 = vpop.f32.mrf.mxu0
    %v4633 = vadd.f32 0.0, %v4632
    %v4634 = vpop.f32.mrf.mxu0
    %4635 = vmatprep.mubr.f32.mxu0 0.0
    %4636 = vmatmul.mubr.f32.gmra.mxu0 %v4362
    %v4637 = vpop.f32.mrf.mxu0
    %v4638 = vadd.f32 0.0, %v4637
    %v4639 = vpop.f32.mrf.mxu0
    %4640 = vmatprep.mubr.f32.mxu0 0.0
    %4641 = vmatmul.mubr.f32.gmra.mxu0 %v4365
    %v4642 = vpop.f32.mrf.mxu0
    %v4643 = vadd.f32 0.0, %v4642
    %v4644 = vpop.f32.mrf.mxu0
    %4645 = vmatprep.mubr.f32.mxu0 0.0
    %4646 = vmatmul.mubr.f32.gmra.mxu0 %v4368
    %v4647 = vpop.f32.mrf.mxu0
    %v4648 = vadd.f32 0.0, %v4647
    %v4649 = vpop.f32.mrf.mxu0
    %4650 = vmatprep.mubr.f32.mxu0 0.0
    %4651 = vmatmul.mubr.f32.gmra.mxu0 %v4371
    %v4652 = vpop.f32.mrf.mxu0
    %v4653 = vadd.f32 0.0, %v4652
    %v4654 = vpop.f32.mrf.mxu0
    %4655 = vmatprep.mubr.f32.mxu0 0.0
    %4656 = vmatmul.mubr.f32.gmra.mxu0 %v4374
    %v4657 = vpop.f32.mrf.mxu0
    %v4658 = vadd.f32 0.0, %v4657
    %v4659 = vpop.f32.mrf.mxu0
    %4660 = vmatprep.mubr.f32.mxu0 0.0
    %4661 = vmatmul.mubr.f32.gmra.mxu0 %v4377
    %v4662 = vpop.f32.mrf.mxu0
    %v4663 = vadd.f32 0.0, %v4662
    %v4664 = vpop.f32.mrf.mxu0
    %4665 = vmatprep.mubr.f32.mxu0 0.0
    %4666 = vmatmul.mubr.f32.gmra.mxu0 %v4380
    %v4667 = vpop.f32.mrf.mxu0
    %v4668 = vadd.f32 0.0, %v4667
    %v4669 = vpop.f32.mrf.mxu0
    %4670 = vmatprep.mubr.f32.mxu0 0.0
    %4671 = vmatmul.mubr.f32.gmra.mxu0 %v4383
    %v4672 = vpop.f32.mrf.mxu0
    %v4673 = vadd.f32 0.0, %v4672
    %v4674 = vpop.f32.mrf.mxu0
    %4675 = vmatprep.mubr.f32.mxu0 0.0
    %4676 = vmatmul.mubr.f32.gmra.mxu0 %v4386
    %v4677 = vpop.f32.mrf.mxu0
    %v4678 = vadd.f32 0.0, %v4677
    %v4679 = vpop.f32.mrf.mxu0
    %4680 = vmatprep.mubr.f32.mxu0 0.0
    %4681 = vmatmul.mubr.f32.gmra.mxu0 %v4389
    %v4682 = vpop.f32.mrf.mxu0
    %v4683 = vadd.f32 0.0, %v4682
    %v4684 = vpop.f32.mrf.mxu0
    %4685 = vmatprep.mubr.f32.mxu0 0.0
    %4686 = vmatmul.mubr.f32.gmra.mxu0 %v4392
    %v4687 = vpop.f32.mrf.mxu0
    %v4688 = vadd.f32 0.0, %v4687
    %v4689 = vpop.f32.mrf.mxu0
    %4690 = vmatprep.mubr.f32.mxu0 0.0
    %4691 = vmatmul.mubr.f32.gmra.mxu0 %v4395
    %v4692 = vpop.f32.mrf.mxu0
    %v4693 = vadd.f32 0.0, %v4692
    %v4694 = vpop.f32.mrf.mxu0
    %4695 = vmatprep.mubr.f32.mxu0 0.0
    %4696 = vmatmul.mubr.f32.gmra.mxu0 %v4398
    %v4697 = vpop.f32.mrf.mxu0
    %v4698 = vadd.f32 0.0, %v4697
    %v4699 = vpop.f32.mrf.mxu0
    %4700 = vmatprep.mubr.f32.mxu0 0.0
    %4701 = vmatmul.mubr.f32.gmra.mxu0 %v4401
    %v4702 = vpop.f32.mrf.mxu0
    %v4703 = vadd.f32 0.0, %v4702
    %v4704 = vpop.f32.mrf.mxu0
    %4705 = vmatprep.mubr.f32.mxu0 0.0
    %4706 = vmatmul.mubr.f32.gmra.mxu0 %v4404
    %v4707 = vpop.f32.mrf.mxu0
    %v4708 = vadd.f32 0.0, %v4707
    %v4709 = vpop.f32.mrf.mxu0
    %4710 = vmatprep.mubr.f32.mxu0 0.0
    %4711 = vmatmul.mubr.f32.gmra.mxu0 %v4407
    %v4712 = vpop.f32.mrf.mxu0
    %v4713 = vadd.f32 0.0, %v4712
    %v4714 = vpop.f32.mrf.mxu0
    %4715 = vmatprep.mubr.f32.mxu0 0.0
    %4716 = vmatmul.mubr.f32.gmra.mxu0 %v4410
    %v4717 = vpop.f32.mrf.mxu0
    %v4718 = vadd.f32 0.0, %v4717
    %v4719 = vpop.f32.mrf.mxu0
    %4720 = vmatprep.mubr.f32.mxu0 0.0
    %4721 = vmatmul.mubr.f32.gmra.mxu0 %v4413
    %v4722 = vpop.f32.mrf.mxu0
    %v4723 = vadd.f32 0.0, %v4722
    %v4724 = vpop.f32.mrf.mxu0
    %4725 = vmatprep.mubr.f32.mxu0 0.0
    %4726 = vmatmul.mubr.f32.gmra.mxu0 %v4416
    %v4727 = vpop.f32.mrf.mxu0
    %v4728 = vadd.f32 0.0, %v4727
    %v4729 = vpop.f32.mrf.mxu0
    %4730 = vmatprep.mubr.f32.mxu0 0.0
    %4731 = vmatmul.mubr.f32.gmra.mxu0 %v4419
    %v4732 = vpop.f32.mrf.mxu0
    %v4733 = vadd.f32 0.0, %v4732
    %v4734 = vpop.f32.mrf.mxu0
    %4735 = vmatprep.mubr.f32.mxu0 0.0
    %4736 = vmatmul.mubr.f32.gmra.mxu0 %v4422
    %v4737 = vpop.f32.mrf.mxu0
    %v4738 = vadd.f32 0.0, %v4737
    %v4739 = vpop.f32.mrf.mxu0
    %4740 = vmatprep.mubr.f32.mxu0 0.0
    %4741 = vmatmul.mubr.f32.gmra.mxu0 %v4425
    %v4742 = vpop.f32.mrf.mxu0
    %v4743 = vadd.f32 0.0, %v4742
    %v4744 = vpop.f32.mrf.mxu0
    %4745 = vmatprep.mubr.f32.mxu0 0.0
    %4746 = vmatmul.mubr.f32.gmra.mxu0 %v4428
    %v4747 = vpop.f32.mrf.mxu0
    %v4748 = vadd.f32 0.0, %v4747
    %v4749 = vpop.f32.mrf.mxu0
    %4750 = vmatprep.mubr.f32.mxu0 0.0
    %4751 = vmatmul.mubr.f32.gmra.mxu0 %v4431
    %v4752 = vpop.f32.mrf.mxu0
    %v4753 = vadd.f32 0.0, %v4752
    %v4754 = vpop.f32.mrf.mxu0
    %4755 = vmatprep.mubr.f32.mxu0 0.0
    %4756 = vmatmul.mubr.f32.gmra.mxu0 %v4434
    %v4757 = vpop.f32.mrf.mxu0
    %v4758 = vadd.f32 0.0, %v4757
    %v4759 = vpop.f32.mrf.mxu0
    %4760 = vmatprep.mubr.f32.mxu0 0.0
    %4761 = vmatmul.mubr.f32.gmra.mxu0 %v4437
    %v4762 = vpop.f32.mrf.mxu0
    %v4763 = vadd.f32 0.0, %v4762
    %v4764 = vpop.f32.mrf.mxu0
    %4765 = vmatprep.mubr.f32.mxu0 0.0
    %4766 = vmatmul.mubr.f32.gmra.mxu0 %v4440
    %v4767 = vpop.f32.mrf.mxu0
    %v4768 = vadd.f32 0.0, %v4767
    %v4769 = vpop.f32.mrf.mxu0
    %4770 = vmatprep.mubr.f32.mxu0 0.0
    %4771 = vmatmul.mubr.f32.gmra.mxu0 %v4443
    %v4772 = vpop.f32.mrf.mxu0
    %v4773 = vadd.f32 0.0, %v4772
    %v4774 = vpop.f32.mrf.mxu0
    %4775 = vmatprep.mubr.f32.mxu0 0.0
    %4776 = vmatmul.mubr.f32.gmra.mxu0 %v4446
    %v4777 = vpop.f32.mrf.mxu0
    %v4778 = vadd.f32 0.0, %v4777
    %v4779 = vpop.f32.mrf.mxu0
    %4780 = vmatprep.mubr.f32.mxu0 0.0
    %4781 = vmatmul.mubr.f32.gmra.mxu0 %v4449
    %v4782 = vpop.f32.mrf.mxu0
    %v4783 = vadd.f32 0.0, %v4782
    %v4784 = vpop.f32.mrf.mxu0
    %4785 = vmatprep.mubr.f32.mxu0 0.0
    %4786 = vmatmul.mubr.f32.gmra.mxu0 %v4452
    %v4787 = vpop.f32.mrf.mxu0
    %v4788 = vadd.f32 0.0, %v4787
    %v4789 = vpop.f32.mrf.mxu0
    %4790 = vmatprep.mubr.f32.mxu0 0.0
    %4791 = vmatmul.mubr.f32.gmra.mxu0 %v4455
    %v4792 = vpop.f32.mrf.mxu0
    %v4793 = vadd.f32 0.0, %v4792
    %v4794 = vpop.f32.mrf.mxu0
    %4795 = vmatprep.mubr.f32.mxu0 0.0
    %4796 = vmatmul.mubr.f32.gmra.mxu0 %v4458
    %v4797 = vpop.f32.mrf.mxu0
    %v4798 = vadd.f32 0.0, %v4797
    %v4799 = vpop.f32.mrf.mxu0
    %4800 = vmatprep.mubr.f32.mxu0 0.0
    %4801 = vmatmul.mubr.f32.gmra.mxu0 %v4461
    %v4802 = vpop.f32.mrf.mxu0
    %v4803 = vadd.f32 0.0, %v4802
    %v4804 = vpop.f32.mrf.mxu0
    %4805 = vmatprep.mubr.f32.mxu0 0.0
    %4806 = vmatmul.mubr.f32.gmra.mxu0 %v4464
    %v4807 = vpop.f32.mrf.mxu0
    %v4808 = vadd.f32 0.0, %v4807
    %v4809 = vpop.f32.mrf.mxu0
    %4810 = vmatprep.mubr.f32.mxu0 0.0
    %4811 = vmatmul.mubr.f32.gmra.mxu0 %v4467
    %v4812 = vpop.f32.mrf.mxu0
    %v4813 = vadd.f32 0.0, %v4812
    %v4814 = vpop.f32.mrf.mxu0
    %4815 = vmatprep.mubr.f32.mxu0 0.0
    %4816 = vmatmul.mubr.f32.gmra.mxu0 %v4470
    %v4817 = vpop.f32.mrf.mxu0
    %v4818 = vadd.f32 0.0, %v4817
    %v4819 = vpop.f32.mrf.mxu0
    %4820 = vmatprep.mubr.f32.mxu0 0.0
    %4821 = vmatmul.mubr.f32.gmra.mxu0 %v4473
    %v4822 = vpop.f32.mrf.mxu0
    %v4823 = vadd.f32 0.0, %v4822
    %v4824 = vpop.f32.mrf.mxu0
    %4825 = vmatprep.mubr.f32.mxu0 0.0
    %4826 = vmatmul.mubr.f32.gmra.mxu0 %v4476
    %v4827 = vpop.f32.mrf.mxu0
    %v4828 = vadd.f32 0.0, %v4827
    %v4829 = vpop.f32.mrf.mxu0
    %4830 = vmatprep.mubr.f32.mxu0 0.0
    %4831 = vmatmul.mubr.f32.gmra.mxu0 %v4479
    %v4832 = vpop.f32.mrf.mxu0
    %v4833 = vadd.f32 0.0, %v4832
    %v4834 = vpop.f32.mrf.mxu0
    %4835 = vmatprep.mubr.f32.mxu0 0.0
    %4836 = vmatmul.mubr.f32.gmra.mxu0 %v4482
    %v4837 = vpop.f32.mrf.mxu0
    %v4838 = vadd.f32 0.0, %v4837
    %v4839 = vpop.f32.mrf.mxu0
    %4840 = vmatprep.mubr.f32.mxu0 0.0
    %4841 = vmatmul.mubr.f32.gmra.mxu0 %v4485
    %v4842 = vpop.f32.mrf.mxu0
    %v4843 = vadd.f32 0.0, %v4842
    %v4844 = vpop.f32.mrf.mxu0
    %4845 = vmatprep.mubr.f32.mxu0 0.0
    %4846 = vmatmul.mubr.f32.gmra.mxu0 %v4488
    %v4847 = vpop.f32.mrf.mxu0
    %v4848 = vadd.f32 0.0, %v4847
    %v4849 = vpop.f32.mrf.mxu0
    %4850 = vmatprep.mubr.f32.mxu0 0.0
    %4851 = vmatmul.mubr.f32.gmra.mxu0 %v4491
    %v4852 = vpop.f32.mrf.mxu0
    %v4853 = vadd.f32 0.0, %v4852
    %v4854 = vpop.f32.mrf.mxu0
    %4855 = vmatprep.mubr.f32.mxu0 0.0
    %4856 = vmatmul.mubr.f32.gmra.mxu0 %v4494
    %v4857 = vpop.f32.mrf.mxu0
    %v4858 = vadd.f32 0.0, %v4857
    %v4859 = vpop.f32.mrf.mxu0
    %4860 = vmatprep.mubr.f32.mxu0 0.0
    %4861 = vmatmul.mubr.f32.gmra.mxu0 %v4497
    %v4862 = vpop.f32.mrf.mxu0
    %v4863 = vadd.f32 0.0, %v4862
    %v4864 = vpop.f32.mrf.mxu0
    %4865 = vmatprep.mubr.f32.mxu0 0.0
    %4866 = vmatmul.mubr.f32.gmra.mxu0 %v4500
    %v4867 = vpop.f32.mrf.mxu0
    %v4868 = vadd.f32 0.0, %v4867
    %v4869 = vpop.f32.mrf.mxu0
    %4870 = vmatprep.mubr.f32.mxu0 0.0
    %4871 = vmatmul.mubr.f32.gmra.mxu0 %v4503
    %v4872 = vpop.f32.mrf.mxu0
    %v4873 = vadd.f32 0.0, %v4872
    %v4874 = vpop.f32.mrf.mxu0
    %4875 = vmatprep.mubr.f32.mxu0 0.0
    %4876 = vmatmul.mubr.f32.gmra.mxu0 %v4506
    %v4877 = vpop.f32.mrf.mxu0
    %v4878 = vadd.f32 0.0, %v4877
    %v4879 = vpop.f32.mrf.mxu0
    %4880 = vmatprep.mubr.f32.mxu0 0.0
    %4881 = vmatmul.mubr.f32.gmra.mxu0 %v4509
    %v4882 = vpop.f32.mrf.mxu0
    %v4883 = vadd.f32 0.0, %v4882
    %v4884 = vpop.f32.mrf.mxu0
    %4885 = vmatprep.mubr.f32.mxu0 0.0
    %4886 = vmatmul.mubr.f32.gmra.mxu0 %v4512
    %v4887 = vpop.f32.mrf.mxu0
    %v4888 = vadd.f32 0.0, %v4887
    %v4889 = vpop.f32.mrf.mxu0
    %4890 = vmatprep.mubr.f32.mxu0 0.0
    %4891 = vmatmul.mubr.f32.gmra.mxu0 %v4515
    %v4892 = vpop.f32.mrf.mxu0
    %v4893 = vadd.f32 0.0, %v4892
    %v4894 = vpop.f32.mrf.mxu0
    %4895 = vmatprep.mubr.f32.mxu0 0.0
    %4896 = vmatmul.mubr.f32.gmra.mxu0 %v4518
    %v4897 = vpop.f32.mrf.mxu0
    %v4898 = vadd.f32 0.0, %v4897
    %v4899 = vpop.f32.mrf.mxu0
    %4900 = vmatprep.mubr.f32.mxu0 0.0
    %4901 = vmatmul.mubr.f32.gmra.mxu0 %v4521
    %v4902 = vpop.f32.mrf.mxu0
    %v4903 = vadd.f32 0.0, %v4902
    %v4904 = vpop.f32.mrf.mxu0
    %4905 = vmatprep.mubr.f32.mxu0 0.0
    %4906 = vmatmul.mubr.f32.gmra.mxu0 %v4524
    %v4907 = vpop.f32.mrf.mxu0
    %v4908 = vadd.f32 0.0, %v4907
    %v4909 = vpop.f32.mrf.mxu0
    %4910 = vdwg.mxu0
    %v4911 = vld [vmem:[%s9] sm:$0xff]
    %v4912 = vld [vmem:[%s9 + $0x8] sm:$0xff]
    %v4913 = vld [vmem:[%s9 + $0x10] sm:$0xff]
    %v4914 = vld [vmem:[%s9 + $0x18] sm:$0xff]
    %v4915 = vld [vmem:[%s9 + $0x20] sm:$0xf]
    %v4916 = vld [vmem:[%s9 + $0x28] sm:$0xff]
    %v4917 = vld [vmem:[%s9 + $0x30] sm:$0xff]
    %v4918 = vld [vmem:[%s9 + $0x38] sm:$0xff]
    %v4919 = vld [vmem:[%s9 + $0x40] sm:$0xff]
    %v4920 = vld [vmem:[%s9 + $0x48] sm:$0xf]
    %v4921 = vld [vmem:[%s9 + $0x50] sm:$0xff]
    %v4922 = vld [vmem:[%s9 + $0x58] sm:$0xff]
    %v4923 = vld [vmem:[%s9 + $0x60] sm:$0xff]
    %v4924 = vld [vmem:[%s9 + $0x68] sm:$0xff]
    %v4925 = vld [vmem:[%s9 + $0x70] sm:$0xf]
    %v4926 = vld [vmem:[%s9 + $0x78] sm:$0xff]
    %v4927 = vld [vmem:[%s9 + $0x80] sm:$0xff]
    %v4928 = vld [vmem:[%s9 + $0x88] sm:$0xff]
    %v4929 = vld [vmem:[%s9 + $0x90] sm:$0xff]
    %v4930 = vld [vmem:[%s9 + $0x98] sm:$0xf]
    %v4931 = vld [vmem:[%s9 + $0xa0] sm:$0xff]
    %v4932 = vld [vmem:[%s9 + $0xa8] sm:$0xff]
    %v4933 = vld [vmem:[%s9 + $0xb0] sm:$0xff]
    %v4934 = vld [vmem:[%s9 + $0xb8] sm:$0xff]
    %v4935 = vld [vmem:[%s9 + $0xc0] sm:$0xf]
    %v4936 = vld [vmem:[%s9 + $0xc8] sm:$0xff]
    %v4937 = vld [vmem:[%s9 + $0xd0] sm:$0xff]
    %v4938 = vld [vmem:[%s9 + $0xd8] sm:$0xff]
    %v4939 = vld [vmem:[%s9 + $0xe0] sm:$0xff]
    %v4940 = vld [vmem:[%s9 + $0xe8] sm:$0xf]
    %v4941 = vld [vmem:[%s9 + $0xf0] sm:$0xff]
    %v4942 = vld [vmem:[%s9 + $0xf8] sm:$0xff]
    %v4943 = vld [vmem:[%s9 + $0x100] sm:$0xff]
    %v4944 = vld [vmem:[%s9 + $0x108] sm:$0xff]
    %v4945 = vld [vmem:[%s9 + $0x110] sm:$0xf]
    %v4946 = vld [vmem:[%s9 + $0x118] sm:$0xff]
    %v4947 = vld [vmem:[%s9 + $0x120] sm:$0xff]
    %v4948 = vld [vmem:[%s9 + $0x128] sm:$0xff]
    %v4949 = vld [vmem:[%s9 + $0x130] sm:$0xff]
    %v4950 = vld [vmem:[%s9 + $0x138] sm:$0xf]
    %v4951 = vld [vmem:[%s9 + $0x140] sm:$0xff]
    %v4952 = vld [vmem:[%s9 + $0x148] sm:$0xff]
    %v4953 = vld [vmem:[%s9 + $0x150] sm:$0xff]
    %v4954 = vld [vmem:[%s9 + $0x158] sm:$0xff]
    %v4955 = vld [vmem:[%s9 + $0x160] sm:$0xf]
    %v4956 = vld [vmem:[%s9 + $0x168] sm:$0xff]
    %v4957 = vld [vmem:[%s9 + $0x170] sm:$0xff]
    %v4958 = vld [vmem:[%s9 + $0x178] sm:$0xff]
    %v4959 = vld [vmem:[%s9 + $0x180] sm:$0xff]
    %v4960 = vld [vmem:[%s9 + $0x188] sm:$0xf]
    %v4961 = vld [vmem:[%s9 + $0x190] sm:$0xff]
    %v4962 = vld [vmem:[%s9 + $0x198] sm:$0xff]
    %v4963 = vld [vmem:[%s9 + $0x1a0] sm:$0xff]
    %v4964 = vld [vmem:[%s9 + $0x1a8] sm:$0xff]
    %v4965 = vld [vmem:[%s9 + $0x1b0] sm:$0xf]
    %v4966 = vld [vmem:[%s9 + $0x1b8] sm:$0xff]
    %v4967 = vld [vmem:[%s9 + $0x1c0] sm:$0xff]
    %v4968 = vld [vmem:[%s9 + $0x1c8] sm:$0xff]
    %v4969 = vld [vmem:[%s9 + $0x1d0] sm:$0xff]
    %v4970 = vld [vmem:[%s9 + $0x1d8] sm:$0xf]
    %v4971 = vld [vmem:[%s9 + $0x1e0] sm:$0xff]
    %v4972 = vld [vmem:[%s9 + $0x1e8] sm:$0xff]
    %v4973 = vld [vmem:[%s9 + $0x1f0] sm:$0xff]
    %v4974 = vld [vmem:[%s9 + $0x1f8] sm:$0xff]
    %v4975 = vld [vmem:[%s9 + $0x200] sm:$0xf]
    %v4976 = vld [vmem:[%s9 + $0x208] sm:$0xff]
    %v4977 = vld [vmem:[%s9 + $0x210] sm:$0xff]
    %v4978 = vld [vmem:[%s9 + $0x218] sm:$0xff]
    %v4979 = vld [vmem:[%s9 + $0x220] sm:$0xff]
    %v4980 = vld [vmem:[%s9 + $0x228] sm:$0xf]
    %v4981 = vld [vmem:[%s9 + $0x230] sm:$0xff]
    %v4982 = vld [vmem:[%s9 + $0x238] sm:$0xff]
    %v4983 = vld [vmem:[%s9 + $0x240] sm:$0xff]
    %v4984 = vld [vmem:[%s9 + $0x248] sm:$0xff]
    %v4985 = vld [vmem:[%s9 + $0x250] sm:$0xf]
    %v4986 = vld [vmem:[%s9 + $0x258] sm:$0xff]
    %v4987 = vld [vmem:[%s9 + $0x260] sm:$0xff]
    %v4988 = vld [vmem:[%s9 + $0x268] sm:$0xff]
    %v4989 = vld [vmem:[%s9 + $0x270] sm:$0xff]
    %v4990 = vld [vmem:[%s9 + $0x278] sm:$0xf]
    %v4992 = vsel %vm3884, %v4593, 0
    %v4995 = vsel %vm3884, %v4598, 0
    %v4998 = vsel %vm3884, %v4603, 0
    %v5001 = vsel %vm3884, %v4608, 0
    %vm5003 = vcmask 1043456
    %v5005 = vsel %vm5003, %v4915, 0
    %5007 = vmatprep.subr.mxu0 0.0
    %5008 = vmatpush1.msra.mxu0 0.0
    %5009 = vmatprep.subr.mxu0 0.0
    %5010 = vmatpush1.msra.mxu0 0.0
    %5011 = vmatprep.subr.mxu0 0.0
    %5012 = vmatpush1.msra.mxu0 0.0
    %5013 = vmatprep.subr.mxu0 0.0
    %5014 = vmatpush1.msra.mxu0 0.0
    %5015 = vmatprep.subr.mxu0 0.0
    %5016 = vmatpush1.msra.mxu0 0.0
    %5017 = vmatprep.subr.mxu0 0.0
    %5018 = vmatpush1.msra.mxu0 0.0
    %5019 = vmatprep.subr.mxu0 0.0
    %5020 = vmatpush1.msra.mxu0 0.0
    %5021 = vmatprep.subr.mxu0 0.0
    %5022 = vmatpush1.msra.mxu0 0.0
    %5023 = vmatprep.subr.mxu0 0.0
    %5024 = vmatpush1.msra.mxu0 0.0
    %5025 = vmatprep.subr.mxu0 0.0
    %5026 = vmatpush1.msra.mxu0 0.0
    %5027 = vmatprep.subr.mxu0 0.0
    %5028 = vmatpush1.msra.mxu0 0.0
    %5029 = vmatprep.subr.mxu0 0.0
    %5030 = vmatpush1.msra.mxu0 %v5005
    %5031 = vmatprep.subr.mxu0 0.0
    %5032 = vmatpush1.msra.mxu0 %v4914
    %5033 = vmatprep.subr.mxu0 0.0
    %5034 = vmatpush1.msra.mxu0 %v4913
    %5035 = vmatprep.subr.mxu0 0.0
    %5036 = vmatpush1.msra.mxu0 %v4912
    %5037 = vmatprep.subr.mxu0 0.0
    %5038 = vmatpush1.msra.mxu0 %v4911
    %5039 = vmatprep.subr.mxu0 0.0
    %5040 = vmatpush2.msra.mxu0 0.0
    %5041 = vmatprep.subr.mxu0 0.0
    %5042 = vmatpush2.msra.mxu0 0.0
    %5043 = vmatprep.subr.mxu0 0.0
    %5044 = vmatpush2.msra.mxu0 0.0
    %5045 = vmatprep.subr.mxu0 0.0
    %5046 = vmatpush2.msra.mxu0 0.0
    %5047 = vmatprep.subr.mxu0 0.0
    %5048 = vmatpush2.msra.mxu0 0.0
    %5049 = vmatprep.subr.mxu0 0.0
    %5050 = vmatpush2.msra.mxu0 0.0
    %5051 = vmatprep.subr.mxu0 0.0
    %5052 = vmatpush2.msra.mxu0 0.0
    %5053 = vmatprep.subr.mxu0 0.0
    %5054 = vmatpush2.msra.mxu0 0.0
    %5055 = vmatprep.subr.mxu0 0.0
    %5056 = vmatpush2.msra.mxu0 0.0
    %5057 = vmatprep.subr.mxu0 0.0
    %5058 = vmatpush2.msra.mxu0 0.0
    %5059 = vmatprep.subr.mxu0 0.0
    %5060 = vmatpush2.msra.mxu0 0.0
    %5061 = vmatprep.subr.mxu0 0.0
    %5062 = vmatpush2.msra.mxu0 0.0
    %5063 = vmatprep.subr.mxu0 0.0
    %5064 = vmatpush2.msra.mxu0 0.0
    %5065 = vmatprep.subr.mxu0 0.0
    %5066 = vmatpush2.msra.mxu0 0.0
    %5067 = vmatprep.subr.mxu0 0.0
    %5068 = vmatpush2.msra.mxu0 0.0
    %5069 = vmatprep.subr.mxu0 0.0
    %5070 = vmatpush2.msra.mxu0 0.0
    %5071 = vmatprep.mubr.f32.mxu0 0.0
    %5072 = vmatmul.mubr.f32.gmra.mxu0 %v4992
    %v5073 = vpop.f32.mrf.mxu0
    %v5074 = vadd.f32 0.0, %v5073
    %v5075 = vpop.f32.mrf.mxu0
    %5076 = vmatprep.mubr.f32.mxu0 0.0
    %5077 = vmatmul.mubr.f32.gmra.mxu0 %v4995
    %v5078 = vpop.f32.mrf.mxu0
    %v5079 = vadd.f32 0.0, %v5078
    %v5080 = vpop.f32.mrf.mxu0
    %5081 = vmatprep.mubr.f32.mxu0 0.0
    %5082 = vmatmul.mubr.f32.gmra.mxu0 %v4998
    %v5083 = vpop.f32.mrf.mxu0
    %v5084 = vadd.f32 0.0, %v5083
    %v5085 = vpop.f32.mrf.mxu0
    %5086 = vmatprep.mubr.f32.mxu0 0.0
    %5087 = vmatmul.mubr.f32.gmra.mxu0 %v5001
    %v5088 = vpop.f32.mrf.mxu0
    %v5089 = vadd.f32 0.0, %v5088
    %v5090 = vpop.f32.mrf.mxu0
    %5091 = vdwg.mxu0
    %v5093 = vsel %vm3884, %v4613, 0
    %v5096 = vsel %vm3884, %v4618, 0
    %v5099 = vsel %vm3884, %v4623, 0
    %v5102 = vsel %vm3884, %v4628, 0
    %v5105 = vsel %vm5003, %v4920, 0
    %5107 = vmatprep.subr.mxu0 0.0
    %5108 = vmatpush1.msra.mxu0 0.0
    %5109 = vmatprep.subr.mxu0 0.0
    %5110 = vmatpush1.msra.mxu0 0.0
    %5111 = vmatprep.subr.mxu0 0.0
    %5112 = vmatpush1.msra.mxu0 0.0
    %5113 = vmatprep.subr.mxu0 0.0
    %5114 = vmatpush1.msra.mxu0 0.0
    %5115 = vmatprep.subr.mxu0 0.0
    %5116 = vmatpush1.msra.mxu0 0.0
    %5117 = vmatprep.subr.mxu0 0.0
    %5118 = vmatpush1.msra.mxu0 0.0
    %5119 = vmatprep.subr.mxu0 0.0
    %5120 = vmatpush1.msra.mxu0 0.0
    %5121 = vmatprep.subr.mxu0 0.0
    %5122 = vmatpush1.msra.mxu0 0.0
    %5123 = vmatprep.subr.mxu0 0.0
    %5124 = vmatpush1.msra.mxu0 0.0
    %5125 = vmatprep.subr.mxu0 0.0
    %5126 = vmatpush1.msra.mxu0 0.0
    %5127 = vmatprep.subr.mxu0 0.0
    %5128 = vmatpush1.msra.mxu0 0.0
    %5129 = vmatprep.subr.mxu0 0.0
    %5130 = vmatpush1.msra.mxu0 %v5105
    %5131 = vmatprep.subr.mxu0 0.0
    %5132 = vmatpush1.msra.mxu0 %v4919
    %5133 = vmatprep.subr.mxu0 0.0
    %5134 = vmatpush1.msra.mxu0 %v4918
    %5135 = vmatprep.subr.mxu0 0.0
    %5136 = vmatpush1.msra.mxu0 %v4917
    %5137 = vmatprep.subr.mxu0 0.0
    %5138 = vmatpush1.msra.mxu0 %v4916
    %5139 = vmatprep.subr.mxu0 0.0
    %5140 = vmatpush2.msra.mxu0 0.0
    %5141 = vmatprep.subr.mxu0 0.0
    %5142 = vmatpush2.msra.mxu0 0.0
    %5143 = vmatprep.subr.mxu0 0.0
    %5144 = vmatpush2.msra.mxu0 0.0
    %5145 = vmatprep.subr.mxu0 0.0
    %5146 = vmatpush2.msra.mxu0 0.0
    %5147 = vmatprep.subr.mxu0 0.0
    %5148 = vmatpush2.msra.mxu0 0.0
    %5149 = vmatprep.subr.mxu0 0.0
    %5150 = vmatpush2.msra.mxu0 0.0
    %5151 = vmatprep.subr.mxu0 0.0
    %5152 = vmatpush2.msra.mxu0 0.0
    %5153 = vmatprep.subr.mxu0 0.0
    %5154 = vmatpush2.msra.mxu0 0.0
    %5155 = vmatprep.subr.mxu0 0.0
    %5156 = vmatpush2.msra.mxu0 0.0
    %5157 = vmatprep.subr.mxu0 0.0
    %5158 = vmatpush2.msra.mxu0 0.0
    %5159 = vmatprep.subr.mxu0 0.0
    %5160 = vmatpush2.msra.mxu0 0.0
    %5161 = vmatprep.subr.mxu0 0.0
    %5162 = vmatpush2.msra.mxu0 0.0
    %5163 = vmatprep.subr.mxu0 0.0
    %5164 = vmatpush2.msra.mxu0 0.0
    %5165 = vmatprep.subr.mxu0 0.0
    %5166 = vmatpush2.msra.mxu0 0.0
    %5167 = vmatprep.subr.mxu0 0.0
    %5168 = vmatpush2.msra.mxu0 0.0
    %5169 = vmatprep.subr.mxu0 0.0
    %5170 = vmatpush2.msra.mxu0 0.0
    %5171 = vmatprep.mubr.f32.mxu0 0.0
    %5172 = vmatmul.mubr.f32.gmra.mxu0 %v5093
    %v5173 = vpop.f32.mrf.mxu0
    %v5174 = vadd.f32 0.0, %v5173
    %v5175 = vpop.f32.mrf.mxu0
    %5176 = vmatprep.mubr.f32.mxu0 0.0
    %5177 = vmatmul.mubr.f32.gmra.mxu0 %v5096
    %v5178 = vpop.f32.mrf.mxu0
    %v5179 = vadd.f32 0.0, %v5178
    %v5180 = vpop.f32.mrf.mxu0
    %5181 = vmatprep.mubr.f32.mxu0 0.0
    %5182 = vmatmul.mubr.f32.gmra.mxu0 %v5099
    %v5183 = vpop.f32.mrf.mxu0
    %v5184 = vadd.f32 0.0, %v5183
    %v5185 = vpop.f32.mrf.mxu0
    %5186 = vmatprep.mubr.f32.mxu0 0.0
    %5187 = vmatmul.mubr.f32.gmra.mxu0 %v5102
    %v5188 = vpop.f32.mrf.mxu0
    %v5189 = vadd.f32 0.0, %v5188
    %v5190 = vpop.f32.mrf.mxu0
    %5191 = vdwg.mxu0
    %v5193 = vsel %vm3884, %v4633, 0
    %v5196 = vsel %vm3884, %v4638, 0
    %v5199 = vsel %vm3884, %v4643, 0
    %v5202 = vsel %vm3884, %v4648, 0
    %v5205 = vsel %vm5003, %v4925, 0
    %5207 = vmatprep.subr.mxu0 0.0
    %5208 = vmatpush1.msra.mxu0 0.0
    %5209 = vmatprep.subr.mxu0 0.0
    %5210 = vmatpush1.msra.mxu0 0.0
    %5211 = vmatprep.subr.mxu0 0.0
    %5212 = vmatpush1.msra.mxu0 0.0
    %5213 = vmatprep.subr.mxu0 0.0
    %5214 = vmatpush1.msra.mxu0 0.0
    %5215 = vmatprep.subr.mxu0 0.0
    %5216 = vmatpush1.msra.mxu0 0.0
    %5217 = vmatprep.subr.mxu0 0.0
    %5218 = vmatpush1.msra.mxu0 0.0
    %5219 = vmatprep.subr.mxu0 0.0
    %5220 = vmatpush1.msra.mxu0 0.0
    %5221 = vmatprep.subr.mxu0 0.0
    %5222 = vmatpush1.msra.mxu0 0.0
    %5223 = vmatprep.subr.mxu0 0.0
    %5224 = vmatpush1.msra.mxu0 0.0
    %5225 = vmatprep.subr.mxu0 0.0
    %5226 = vmatpush1.msra.mxu0 0.0
    %5227 = vmatprep.subr.mxu0 0.0
    %5228 = vmatpush1.msra.mxu0 0.0
    %5229 = vmatprep.subr.mxu0 0.0
    %5230 = vmatpush1.msra.mxu0 %v5205
    %5231 = vmatprep.subr.mxu0 0.0
    %5232 = vmatpush1.msra.mxu0 %v4924
    %5233 = vmatprep.subr.mxu0 0.0
    %5234 = vmatpush1.msra.mxu0 %v4923
    %5235 = vmatprep.subr.mxu0 0.0
    %5236 = vmatpush1.msra.mxu0 %v4922
    %5237 = vmatprep.subr.mxu0 0.0
    %5238 = vmatpush1.msra.mxu0 %v4921
    %5239 = vmatprep.subr.mxu0 0.0
    %5240 = vmatpush2.msra.mxu0 0.0
    %5241 = vmatprep.subr.mxu0 0.0
    %5242 = vmatpush2.msra.mxu0 0.0
    %5243 = vmatprep.subr.mxu0 0.0
    %5244 = vmatpush2.msra.mxu0 0.0
    %5245 = vmatprep.subr.mxu0 0.0
    %5246 = vmatpush2.msra.mxu0 0.0
    %5247 = vmatprep.subr.mxu0 0.0
    %5248 = vmatpush2.msra.mxu0 0.0
    %5249 = vmatprep.subr.mxu0 0.0
    %5250 = vmatpush2.msra.mxu0 0.0
    %5251 = vmatprep.subr.mxu0 0.0
    %5252 = vmatpush2.msra.mxu0 0.0
    %5253 = vmatprep.subr.mxu0 0.0
    %5254 = vmatpush2.msra.mxu0 0.0
    %5255 = vmatprep.subr.mxu0 0.0
    %5256 = vmatpush2.msra.mxu0 0.0
    %5257 = vmatprep.subr.mxu0 0.0
    %5258 = vmatpush2.msra.mxu0 0.0
    %5259 = vmatprep.subr.mxu0 0.0
    %5260 = vmatpush2.msra.mxu0 0.0
    %5261 = vmatprep.subr.mxu0 0.0
    %5262 = vmatpush2.msra.mxu0 0.0
    %5263 = vmatprep.subr.mxu0 0.0
    %5264 = vmatpush2.msra.mxu0 0.0
    %5265 = vmatprep.subr.mxu0 0.0
    %5266 = vmatpush2.msra.mxu0 0.0
    %5267 = vmatprep.subr.mxu0 0.0
    %5268 = vmatpush2.msra.mxu0 0.0
    %5269 = vmatprep.subr.mxu0 0.0
    %5270 = vmatpush2.msra.mxu0 0.0
    %5271 = vmatprep.mubr.f32.mxu0 0.0
    %5272 = vmatmul.mubr.f32.gmra.mxu0 %v5193
    %v5273 = vpop.f32.mrf.mxu0
    %v5274 = vadd.f32 0.0, %v5273
    %v5275 = vpop.f32.mrf.mxu0
    %5276 = vmatprep.mubr.f32.mxu0 0.0
    %5277 = vmatmul.mubr.f32.gmra.mxu0 %v5196
    %v5278 = vpop.f32.mrf.mxu0
    %v5279 = vadd.f32 0.0, %v5278
    %v5280 = vpop.f32.mrf.mxu0
    %5281 = vmatprep.mubr.f32.mxu0 0.0
    %5282 = vmatmul.mubr.f32.gmra.mxu0 %v5199
    %v5283 = vpop.f32.mrf.mxu0
    %v5284 = vadd.f32 0.0, %v5283
    %v5285 = vpop.f32.mrf.mxu0
    %5286 = vmatprep.mubr.f32.mxu0 0.0
    %5287 = vmatmul.mubr.f32.gmra.mxu0 %v5202
    %v5288 = vpop.f32.mrf.mxu0
    %v5289 = vadd.f32 0.0, %v5288
    %v5290 = vpop.f32.mrf.mxu0
    %5291 = vdwg.mxu0
    %v5293 = vsel %vm3884, %v4653, 0
    %v5296 = vsel %vm3884, %v4658, 0
    %v5299 = vsel %vm3884, %v4663, 0
    %v5302 = vsel %vm3884, %v4668, 0
    %v5305 = vsel %vm5003, %v4930, 0
    %5307 = vmatprep.subr.mxu0 0.0
    %5308 = vmatpush1.msra.mxu0 0.0
    %5309 = vmatprep.subr.mxu0 0.0
    %5310 = vmatpush1.msra.mxu0 0.0
    %5311 = vmatprep.subr.mxu0 0.0
    %5312 = vmatpush1.msra.mxu0 0.0
    %5313 = vmatprep.subr.mxu0 0.0
    %5314 = vmatpush1.msra.mxu0 0.0
    %5315 = vmatprep.subr.mxu0 0.0
    %5316 = vmatpush1.msra.mxu0 0.0
    %5317 = vmatprep.subr.mxu0 0.0
    %5318 = vmatpush1.msra.mxu0 0.0
    %5319 = vmatprep.subr.mxu0 0.0
    %5320 = vmatpush1.msra.mxu0 0.0
    %5321 = vmatprep.subr.mxu0 0.0
    %5322 = vmatpush1.msra.mxu0 0.0
    %5323 = vmatprep.subr.mxu0 0.0
    %5324 = vmatpush1.msra.mxu0 0.0
    %5325 = vmatprep.subr.mxu0 0.0
    %5326 = vmatpush1.msra.mxu0 0.0
    %5327 = vmatprep.subr.mxu0 0.0
    %5328 = vmatpush1.msra.mxu0 0.0
    %5329 = vmatprep.subr.mxu0 0.0
    %5330 = vmatpush1.msra.mxu0 %v5305
    %5331 = vmatprep.subr.mxu0 0.0
    %5332 = vmatpush1.msra.mxu0 %v4929
    %5333 = vmatprep.subr.mxu0 0.0
    %5334 = vmatpush1.msra.mxu0 %v4928
    %5335 = vmatprep.subr.mxu0 0.0
    %5336 = vmatpush1.msra.mxu0 %v4927
    %5337 = vmatprep.subr.mxu0 0.0
    %5338 = vmatpush1.msra.mxu0 %v4926
    %5339 = vmatprep.subr.mxu0 0.0
    %5340 = vmatpush2.msra.mxu0 0.0
    %5341 = vmatprep.subr.mxu0 0.0
    %5342 = vmatpush2.msra.mxu0 0.0
    %5343 = vmatprep.subr.mxu0 0.0
    %5344 = vmatpush2.msra.mxu0 0.0
    %5345 = vmatprep.subr.mxu0 0.0
    %5346 = vmatpush2.msra.mxu0 0.0
    %5347 = vmatprep.subr.mxu0 0.0
    %5348 = vmatpush2.msra.mxu0 0.0
    %5349 = vmatprep.subr.mxu0 0.0
    %5350 = vmatpush2.msra.mxu0 0.0
    %5351 = vmatprep.subr.mxu0 0.0
    %5352 = vmatpush2.msra.mxu0 0.0
    %5353 = vmatprep.subr.mxu0 0.0
    %5354 = vmatpush2.msra.mxu0 0.0
    %5355 = vmatprep.subr.mxu0 0.0
    %5356 = vmatpush2.msra.mxu0 0.0
    %5357 = vmatprep.subr.mxu0 0.0
    %5358 = vmatpush2.msra.mxu0 0.0
    %5359 = vmatprep.subr.mxu0 0.0
    %5360 = vmatpush2.msra.mxu0 0.0
    %5361 = vmatprep.subr.mxu0 0.0
    %5362 = vmatpush2.msra.mxu0 0.0
    %5363 = vmatprep.subr.mxu0 0.0
    %5364 = vmatpush2.msra.mxu0 0.0
    %5365 = vmatprep.subr.mxu0 0.0
    %5366 = vmatpush2.msra.mxu0 0.0
    %5367 = vmatprep.subr.mxu0 0.0
    %5368 = vmatpush2.msra.mxu0 0.0
    %5369 = vmatprep.subr.mxu0 0.0
    %5370 = vmatpush2.msra.mxu0 0.0
    %5371 = vmatprep.mubr.f32.mxu0 0.0
    %5372 = vmatmul.mubr.f32.gmra.mxu0 %v5293
    %v5373 = vpop.f32.mrf.mxu0
    %v5374 = vadd.f32 0.0, %v5373
    %v5375 = vpop.f32.mrf.mxu0
    %5376 = vmatprep.mubr.f32.mxu0 0.0
    %5377 = vmatmul.mubr.f32.gmra.mxu0 %v5296
    %v5378 = vpop.f32.mrf.mxu0
    %v5379 = vadd.f32 0.0, %v5378
    %v5380 = vpop.f32.mrf.mxu0
    %5381 = vmatprep.mubr.f32.mxu0 0.0
    %5382 = vmatmul.mubr.f32.gmra.mxu0 %v5299
    %v5383 = vpop.f32.mrf.mxu0
    %v5384 = vadd.f32 0.0, %v5383
    %v5385 = vpop.f32.mrf.mxu0
    %5386 = vmatprep.mubr.f32.mxu0 0.0
    %5387 = vmatmul.mubr.f32.gmra.mxu0 %v5302
    %v5388 = vpop.f32.mrf.mxu0
    %v5389 = vadd.f32 0.0, %v5388
    %v5390 = vpop.f32.mrf.mxu0
    %5391 = vdwg.mxu0
    %v5393 = vsel %vm3884, %v4673, 0
    %v5396 = vsel %vm3884, %v4678, 0
    %v5399 = vsel %vm3884, %v4683, 0
    %v5402 = vsel %vm3884, %v4688, 0
    %v5405 = vsel %vm5003, %v4935, 0
    %5407 = vmatprep.subr.mxu0 0.0
    %5408 = vmatpush1.msra.mxu0 0.0
    %5409 = vmatprep.subr.mxu0 0.0
    %5410 = vmatpush1.msra.mxu0 0.0
    %5411 = vmatprep.subr.mxu0 0.0
    %5412 = vmatpush1.msra.mxu0 0.0
    %5413 = vmatprep.subr.mxu0 0.0
    %5414 = vmatpush1.msra.mxu0 0.0
    %5415 = vmatprep.subr.mxu0 0.0
    %5416 = vmatpush1.msra.mxu0 0.0
    %5417 = vmatprep.subr.mxu0 0.0
    %5418 = vmatpush1.msra.mxu0 0.0
    %5419 = vmatprep.subr.mxu0 0.0
    %5420 = vmatpush1.msra.mxu0 0.0
    %5421 = vmatprep.subr.mxu0 0.0
    %5422 = vmatpush1.msra.mxu0 0.0
    %5423 = vmatprep.subr.mxu0 0.0
    %5424 = vmatpush1.msra.mxu0 0.0
    %5425 = vmatprep.subr.mxu0 0.0
    %5426 = vmatpush1.msra.mxu0 0.0
    %5427 = vmatprep.subr.mxu0 0.0
    %5428 = vmatpush1.msra.mxu0 0.0
    %5429 = vmatprep.subr.mxu0 0.0
    %5430 = vmatpush1.msra.mxu0 %v5405
    %5431 = vmatprep.subr.mxu0 0.0
    %5432 = vmatpush1.msra.mxu0 %v4934
    %5433 = vmatprep.subr.mxu0 0.0
    %5434 = vmatpush1.msra.mxu0 %v4933
    %5435 = vmatprep.subr.mxu0 0.0
    %5436 = vmatpush1.msra.mxu0 %v4932
    %5437 = vmatprep.subr.mxu0 0.0
    %5438 = vmatpush1.msra.mxu0 %v4931
    %5439 = vmatprep.subr.mxu0 0.0
    %5440 = vmatpush2.msra.mxu0 0.0
    %5441 = vmatprep.subr.mxu0 0.0
    %5442 = vmatpush2.msra.mxu0 0.0
    %5443 = vmatprep.subr.mxu0 0.0
    %5444 = vmatpush2.msra.mxu0 0.0
    %5445 = vmatprep.subr.mxu0 0.0
    %5446 = vmatpush2.msra.mxu0 0.0
    %5447 = vmatprep.subr.mxu0 0.0
    %5448 = vmatpush2.msra.mxu0 0.0
    %5449 = vmatprep.subr.mxu0 0.0
    %5450 = vmatpush2.msra.mxu0 0.0
    %5451 = vmatprep.subr.mxu0 0.0
    %5452 = vmatpush2.msra.mxu0 0.0
    %5453 = vmatprep.subr.mxu0 0.0
    %5454 = vmatpush2.msra.mxu0 0.0
    %5455 = vmatprep.subr.mxu0 0.0
    %5456 = vmatpush2.msra.mxu0 0.0
    %5457 = vmatprep.subr.mxu0 0.0
    %5458 = vmatpush2.msra.mxu0 0.0
    %5459 = vmatprep.subr.mxu0 0.0
    %5460 = vmatpush2.msra.mxu0 0.0
    %5461 = vmatprep.subr.mxu0 0.0
    %5462 = vmatpush2.msra.mxu0 0.0
    %5463 = vmatprep.subr.mxu0 0.0
    %5464 = vmatpush2.msra.mxu0 0.0
    %5465 = vmatprep.subr.mxu0 0.0
    %5466 = vmatpush2.msra.mxu0 0.0
    %5467 = vmatprep.subr.mxu0 0.0
    %5468 = vmatpush2.msra.mxu0 0.0
    %5469 = vmatprep.subr.mxu0 0.0
    %5470 = vmatpush2.msra.mxu0 0.0
    %5471 = vmatprep.mubr.f32.mxu0 0.0
    %5472 = vmatmul.mubr.f32.gmra.mxu0 %v5393
    %v5473 = vpop.f32.mrf.mxu0
    %v5474 = vadd.f32 0.0, %v5473
    %v5475 = vpop.f32.mrf.mxu0
    %5476 = vmatprep.mubr.f32.mxu0 0.0
    %5477 = vmatmul.mubr.f32.gmra.mxu0 %v5396
    %v5478 = vpop.f32.mrf.mxu0
    %v5479 = vadd.f32 0.0, %v5478
    %v5480 = vpop.f32.mrf.mxu0
    %5481 = vmatprep.mubr.f32.mxu0 0.0
    %5482 = vmatmul.mubr.f32.gmra.mxu0 %v5399
    %v5483 = vpop.f32.mrf.mxu0
    %v5484 = vadd.f32 0.0, %v5483
    %v5485 = vpop.f32.mrf.mxu0
    %5486 = vmatprep.mubr.f32.mxu0 0.0
    %5487 = vmatmul.mubr.f32.gmra.mxu0 %v5402
    %v5488 = vpop.f32.mrf.mxu0
    %v5489 = vadd.f32 0.0, %v5488
    %v5490 = vpop.f32.mrf.mxu0
    %5491 = vdwg.mxu0
    %v5493 = vsel %vm3884, %v4693, 0
    %v5496 = vsel %vm3884, %v4698, 0
    %v5499 = vsel %vm3884, %v4703, 0
    %v5502 = vsel %vm3884, %v4708, 0
    %v5505 = vsel %vm5003, %v4940, 0
    %5507 = vmatprep.subr.mxu0 0.0
    %5508 = vmatpush1.msra.mxu0 0.0
    %5509 = vmatprep.subr.mxu0 0.0
    %5510 = vmatpush1.msra.mxu0 0.0
    %5511 = vmatprep.subr.mxu0 0.0
    %5512 = vmatpush1.msra.mxu0 0.0
    %5513 = vmatprep.subr.mxu0 0.0
    %5514 = vmatpush1.msra.mxu0 0.0
    %5515 = vmatprep.subr.mxu0 0.0
    %5516 = vmatpush1.msra.mxu0 0.0
    %5517 = vmatprep.subr.mxu0 0.0
    %5518 = vmatpush1.msra.mxu0 0.0
    %5519 = vmatprep.subr.mxu0 0.0
    %5520 = vmatpush1.msra.mxu0 0.0
    %5521 = vmatprep.subr.mxu0 0.0
    %5522 = vmatpush1.msra.mxu0 0.0
    %5523 = vmatprep.subr.mxu0 0.0
    %5524 = vmatpush1.msra.mxu0 0.0
    %5525 = vmatprep.subr.mxu0 0.0
    %5526 = vmatpush1.msra.mxu0 0.0
    %5527 = vmatprep.subr.mxu0 0.0
    %5528 = vmatpush1.msra.mxu0 0.0
    %5529 = vmatprep.subr.mxu0 0.0
    %5530 = vmatpush1.msra.mxu0 %v5505
    %5531 = vmatprep.subr.mxu0 0.0
    %5532 = vmatpush1.msra.mxu0 %v4939
    %5533 = vmatprep.subr.mxu0 0.0
    %5534 = vmatpush1.msra.mxu0 %v4938
    %5535 = vmatprep.subr.mxu0 0.0
    %5536 = vmatpush1.msra.mxu0 %v4937
    %5537 = vmatprep.subr.mxu0 0.0
    %5538 = vmatpush1.msra.mxu0 %v4936
    %5539 = vmatprep.subr.mxu0 0.0
    %5540 = vmatpush2.msra.mxu0 0.0
    %5541 = vmatprep.subr.mxu0 0.0
    %5542 = vmatpush2.msra.mxu0 0.0
    %5543 = vmatprep.subr.mxu0 0.0
    %5544 = vmatpush2.msra.mxu0 0.0
    %5545 = vmatprep.subr.mxu0 0.0
    %5546 = vmatpush2.msra.mxu0 0.0
    %5547 = vmatprep.subr.mxu0 0.0
    %5548 = vmatpush2.msra.mxu0 0.0
    %5549 = vmatprep.subr.mxu0 0.0
    %5550 = vmatpush2.msra.mxu0 0.0
    %5551 = vmatprep.subr.mxu0 0.0
    %5552 = vmatpush2.msra.mxu0 0.0
    %5553 = vmatprep.subr.mxu0 0.0
    %5554 = vmatpush2.msra.mxu0 0.0
    %5555 = vmatprep.subr.mxu0 0.0
    %5556 = vmatpush2.msra.mxu0 0.0
    %5557 = vmatprep.subr.mxu0 0.0
    %5558 = vmatpush2.msra.mxu0 0.0
    %5559 = vmatprep.subr.mxu0 0.0
    %5560 = vmatpush2.msra.mxu0 0.0
    %5561 = vmatprep.subr.mxu0 0.0
    %5562 = vmatpush2.msra.mxu0 0.0
    %5563 = vmatprep.subr.mxu0 0.0
    %5564 = vmatpush2.msra.mxu0 0.0
    %5565 = vmatprep.subr.mxu0 0.0
    %5566 = vmatpush2.msra.mxu0 0.0
    %5567 = vmatprep.subr.mxu0 0.0
    %5568 = vmatpush2.msra.mxu0 0.0
    %5569 = vmatprep.subr.mxu0 0.0
    %5570 = vmatpush2.msra.mxu0 0.0
    %5571 = vmatprep.mubr.f32.mxu0 0.0
    %5572 = vmatmul.mubr.f32.gmra.mxu0 %v5493
    %v5573 = vpop.f32.mrf.mxu0
    %v5574 = vadd.f32 0.0, %v5573
    %v5575 = vpop.f32.mrf.mxu0
    %5576 = vmatprep.mubr.f32.mxu0 0.0
    %5577 = vmatmul.mubr.f32.gmra.mxu0 %v5496
    %v5578 = vpop.f32.mrf.mxu0
    %v5579 = vadd.f32 0.0, %v5578
    %v5580 = vpop.f32.mrf.mxu0
    %5581 = vmatprep.mubr.f32.mxu0 0.0
    %5582 = vmatmul.mubr.f32.gmra.mxu0 %v5499
    %v5583 = vpop.f32.mrf.mxu0
    %v5584 = vadd.f32 0.0, %v5583
    %v5585 = vpop.f32.mrf.mxu0
    %5586 = vmatprep.mubr.f32.mxu0 0.0
    %5587 = vmatmul.mubr.f32.gmra.mxu0 %v5502
    %v5588 = vpop.f32.mrf.mxu0
    %v5589 = vadd.f32 0.0, %v5588
    %v5590 = vpop.f32.mrf.mxu0
    %5591 = vdwg.mxu0
    %v5593 = vsel %vm3884, %v4713, 0
    %v5596 = vsel %vm3884, %v4718, 0
    %v5599 = vsel %vm3884, %v4723, 0
    %v5602 = vsel %vm3884, %v4728, 0
    %v5605 = vsel %vm5003, %v4945, 0
    %5607 = vmatprep.subr.mxu0 0.0
    %5608 = vmatpush1.msra.mxu0 0.0
    %5609 = vmatprep.subr.mxu0 0.0
    %5610 = vmatpush1.msra.mxu0 0.0
    %5611 = vmatprep.subr.mxu0 0.0
    %5612 = vmatpush1.msra.mxu0 0.0
    %5613 = vmatprep.subr.mxu0 0.0
    %5614 = vmatpush1.msra.mxu0 0.0
    %5615 = vmatprep.subr.mxu0 0.0
    %5616 = vmatpush1.msra.mxu0 0.0
    %5617 = vmatprep.subr.mxu0 0.0
    %5618 = vmatpush1.msra.mxu0 0.0
    %5619 = vmatprep.subr.mxu0 0.0
    %5620 = vmatpush1.msra.mxu0 0.0
    %5621 = vmatprep.subr.mxu0 0.0
    %5622 = vmatpush1.msra.mxu0 0.0
    %5623 = vmatprep.subr.mxu0 0.0
    %5624 = vmatpush1.msra.mxu0 0.0
    %5625 = vmatprep.subr.mxu0 0.0
    %5626 = vmatpush1.msra.mxu0 0.0
    %5627 = vmatprep.subr.mxu0 0.0
    %5628 = vmatpush1.msra.mxu0 0.0
    %5629 = vmatprep.subr.mxu0 0.0
    %5630 = vmatpush1.msra.mxu0 %v5605
    %5631 = vmatprep.subr.mxu0 0.0
    %5632 = vmatpush1.msra.mxu0 %v4944
    %5633 = vmatprep.subr.mxu0 0.0
    %5634 = vmatpush1.msra.mxu0 %v4943
    %5635 = vmatprep.subr.mxu0 0.0
    %5636 = vmatpush1.msra.mxu0 %v4942
    %5637 = vmatprep.subr.mxu0 0.0
    %5638 = vmatpush1.msra.mxu0 %v4941
    %5639 = vmatprep.subr.mxu0 0.0
    %5640 = vmatpush2.msra.mxu0 0.0
    %5641 = vmatprep.subr.mxu0 0.0
    %5642 = vmatpush2.msra.mxu0 0.0
    %5643 = vmatprep.subr.mxu0 0.0
    %5644 = vmatpush2.msra.mxu0 0.0
    %5645 = vmatprep.subr.mxu0 0.0
    %5646 = vmatpush2.msra.mxu0 0.0
    %5647 = vmatprep.subr.mxu0 0.0
    %5648 = vmatpush2.msra.mxu0 0.0
    %5649 = vmatprep.subr.mxu0 0.0
    %5650 = vmatpush2.msra.mxu0 0.0
    %5651 = vmatprep.subr.mxu0 0.0
    %5652 = vmatpush2.msra.mxu0 0.0
    %5653 = vmatprep.subr.mxu0 0.0
    %5654 = vmatpush2.msra.mxu0 0.0
    %5655 = vmatprep.subr.mxu0 0.0
    %5656 = vmatpush2.msra.mxu0 0.0
    %5657 = vmatprep.subr.mxu0 0.0
    %5658 = vmatpush2.msra.mxu0 0.0
    %5659 = vmatprep.subr.mxu0 0.0
    %5660 = vmatpush2.msra.mxu0 0.0
    %5661 = vmatprep.subr.mxu0 0.0
    %5662 = vmatpush2.msra.mxu0 0.0
    %5663 = vmatprep.subr.mxu0 0.0
    %5664 = vmatpush2.msra.mxu0 0.0
    %5665 = vmatprep.subr.mxu0 0.0
    %5666 = vmatpush2.msra.mxu0 0.0
    %5667 = vmatprep.subr.mxu0 0.0
    %5668 = vmatpush2.msra.mxu0 0.0
    %5669 = vmatprep.subr.mxu0 0.0
    %5670 = vmatpush2.msra.mxu0 0.0
    %5671 = vmatprep.mubr.f32.mxu0 0.0
    %5672 = vmatmul.mubr.f32.gmra.mxu0 %v5593
    %v5673 = vpop.f32.mrf.mxu0
    %v5674 = vadd.f32 0.0, %v5673
    %v5675 = vpop.f32.mrf.mxu0
    %5676 = vmatprep.mubr.f32.mxu0 0.0
    %5677 = vmatmul.mubr.f32.gmra.mxu0 %v5596
    %v5678 = vpop.f32.mrf.mxu0
    %v5679 = vadd.f32 0.0, %v5678
    %v5680 = vpop.f32.mrf.mxu0
    %5681 = vmatprep.mubr.f32.mxu0 0.0
    %5682 = vmatmul.mubr.f32.gmra.mxu0 %v5599
    %v5683 = vpop.f32.mrf.mxu0
    %v5684 = vadd.f32 0.0, %v5683
    %v5685 = vpop.f32.mrf.mxu0
    %5686 = vmatprep.mubr.f32.mxu0 0.0
    %5687 = vmatmul.mubr.f32.gmra.mxu0 %v5602
    %v5688 = vpop.f32.mrf.mxu0
    %v5689 = vadd.f32 0.0, %v5688
    %v5690 = vpop.f32.mrf.mxu0
    %5691 = vdwg.mxu0
    %v5693 = vsel %vm3884, %v4733, 0
    %v5696 = vsel %vm3884, %v4738, 0
    %v5699 = vsel %vm3884, %v4743, 0
    %v5702 = vsel %vm3884, %v4748, 0
    %v5705 = vsel %vm5003, %v4950, 0
    %5707 = vmatprep.subr.mxu0 0.0
    %5708 = vmatpush1.msra.mxu0 0.0
    %5709 = vmatprep.subr.mxu0 0.0
    %5710 = vmatpush1.msra.mxu0 0.0
    %5711 = vmatprep.subr.mxu0 0.0
    %5712 = vmatpush1.msra.mxu0 0.0
    %5713 = vmatprep.subr.mxu0 0.0
    %5714 = vmatpush1.msra.mxu0 0.0
    %5715 = vmatprep.subr.mxu0 0.0
    %5716 = vmatpush1.msra.mxu0 0.0
    %5717 = vmatprep.subr.mxu0 0.0
    %5718 = vmatpush1.msra.mxu0 0.0
    %5719 = vmatprep.subr.mxu0 0.0
    %5720 = vmatpush1.msra.mxu0 0.0
    %5721 = vmatprep.subr.mxu0 0.0
    %5722 = vmatpush1.msra.mxu0 0.0
    %5723 = vmatprep.subr.mxu0 0.0
    %5724 = vmatpush1.msra.mxu0 0.0
    %5725 = vmatprep.subr.mxu0 0.0
    %5726 = vmatpush1.msra.mxu0 0.0
    %5727 = vmatprep.subr.mxu0 0.0
    %5728 = vmatpush1.msra.mxu0 0.0
    %5729 = vmatprep.subr.mxu0 0.0
    %5730 = vmatpush1.msra.mxu0 %v5705
    %5731 = vmatprep.subr.mxu0 0.0
    %5732 = vmatpush1.msra.mxu0 %v4949
    %5733 = vmatprep.subr.mxu0 0.0
    %5734 = vmatpush1.msra.mxu0 %v4948
    %5735 = vmatprep.subr.mxu0 0.0
    %5736 = vmatpush1.msra.mxu0 %v4947
    %5737 = vmatprep.subr.mxu0 0.0
    %5738 = vmatpush1.msra.mxu0 %v4946
    %5739 = vmatprep.subr.mxu0 0.0
    %5740 = vmatpush2.msra.mxu0 0.0
    %5741 = vmatprep.subr.mxu0 0.0
    %5742 = vmatpush2.msra.mxu0 0.0
    %5743 = vmatprep.subr.mxu0 0.0
    %5744 = vmatpush2.msra.mxu0 0.0
    %5745 = vmatprep.subr.mxu0 0.0
    %5746 = vmatpush2.msra.mxu0 0.0
    %5747 = vmatprep.subr.mxu0 0.0
    %5748 = vmatpush2.msra.mxu0 0.0
    %5749 = vmatprep.subr.mxu0 0.0
    %5750 = vmatpush2.msra.mxu0 0.0
    %5751 = vmatprep.subr.mxu0 0.0
    %5752 = vmatpush2.msra.mxu0 0.0
    %5753 = vmatprep.subr.mxu0 0.0
    %5754 = vmatpush2.msra.mxu0 0.0
    %5755 = vmatprep.subr.mxu0 0.0
    %5756 = vmatpush2.msra.mxu0 0.0
    %5757 = vmatprep.subr.mxu0 0.0
    %5758 = vmatpush2.msra.mxu0 0.0
    %5759 = vmatprep.subr.mxu0 0.0
    %5760 = vmatpush2.msra.mxu0 0.0
    %5761 = vmatprep.subr.mxu0 0.0
    %5762 = vmatpush2.msra.mxu0 0.0
    %5763 = vmatprep.subr.mxu0 0.0
    %5764 = vmatpush2.msra.mxu0 0.0
    %5765 = vmatprep.subr.mxu0 0.0
    %5766 = vmatpush2.msra.mxu0 0.0
    %5767 = vmatprep.subr.mxu0 0.0
    %5768 = vmatpush2.msra.mxu0 0.0
    %5769 = vmatprep.subr.mxu0 0.0
    %5770 = vmatpush2.msra.mxu0 0.0
    %5771 = vmatprep.mubr.f32.mxu0 0.0
    %5772 = vmatmul.mubr.f32.gmra.mxu0 %v5693
    %v5773 = vpop.f32.mrf.mxu0
    %v5774 = vadd.f32 0.0, %v5773
    %v5775 = vpop.f32.mrf.mxu0
    %5776 = vmatprep.mubr.f32.mxu0 0.0
    %5777 = vmatmul.mubr.f32.gmra.mxu0 %v5696
    %v5778 = vpop.f32.mrf.mxu0
    %v5779 = vadd.f32 0.0, %v5778
    %v5780 = vpop.f32.mrf.mxu0
    %5781 = vmatprep.mubr.f32.mxu0 0.0
    %5782 = vmatmul.mubr.f32.gmra.mxu0 %v5699
    %v5783 = vpop.f32.mrf.mxu0
    %v5784 = vadd.f32 0.0, %v5783
    %v5785 = vpop.f32.mrf.mxu0
    %5786 = vmatprep.mubr.f32.mxu0 0.0
    %5787 = vmatmul.mubr.f32.gmra.mxu0 %v5702
    %v5788 = vpop.f32.mrf.mxu0
    %v5789 = vadd.f32 0.0, %v5788
    %v5790 = vpop.f32.mrf.mxu0
    %5791 = vdwg.mxu0
    %v5793 = vsel %vm3884, %v4753, 0
    %v5796 = vsel %vm3884, %v4758, 0
    %v5799 = vsel %vm3884, %v4763, 0
    %v5802 = vsel %vm3884, %v4768, 0
    %v5805 = vsel %vm5003, %v4955, 0
    %5807 = vmatprep.subr.mxu0 0.0
    %5808 = vmatpush1.msra.mxu0 0.0
    %5809 = vmatprep.subr.mxu0 0.0
    %5810 = vmatpush1.msra.mxu0 0.0
    %5811 = vmatprep.subr.mxu0 0.0
    %5812 = vmatpush1.msra.mxu0 0.0
    %5813 = vmatprep.subr.mxu0 0.0
    %5814 = vmatpush1.msra.mxu0 0.0
    %5815 = vmatprep.subr.mxu0 0.0
    %5816 = vmatpush1.msra.mxu0 0.0
    %5817 = vmatprep.subr.mxu0 0.0
    %5818 = vmatpush1.msra.mxu0 0.0
    %5819 = vmatprep.subr.mxu0 0.0
    %5820 = vmatpush1.msra.mxu0 0.0
    %5821 = vmatprep.subr.mxu0 0.0
    %5822 = vmatpush1.msra.mxu0 0.0
    %5823 = vmatprep.subr.mxu0 0.0
    %5824 = vmatpush1.msra.mxu0 0.0
    %5825 = vmatprep.subr.mxu0 0.0
    %5826 = vmatpush1.msra.mxu0 0.0
    %5827 = vmatprep.subr.mxu0 0.0
    %5828 = vmatpush1.msra.mxu0 0.0
    %5829 = vmatprep.subr.mxu0 0.0
    %5830 = vmatpush1.msra.mxu0 %v5805
    %5831 = vmatprep.subr.mxu0 0.0
    %5832 = vmatpush1.msra.mxu0 %v4954
    %5833 = vmatprep.subr.mxu0 0.0
    %5834 = vmatpush1.msra.mxu0 %v4953
    %5835 = vmatprep.subr.mxu0 0.0
    %5836 = vmatpush1.msra.mxu0 %v4952
    %5837 = vmatprep.subr.mxu0 0.0
    %5838 = vmatpush1.msra.mxu0 %v4951
    %5839 = vmatprep.subr.mxu0 0.0
    %5840 = vmatpush2.msra.mxu0 0.0
    %5841 = vmatprep.subr.mxu0 0.0
    %5842 = vmatpush2.msra.mxu0 0.0
    %5843 = vmatprep.subr.mxu0 0.0
    %5844 = vmatpush2.msra.mxu0 0.0
    %5845 = vmatprep.subr.mxu0 0.0
    %5846 = vmatpush2.msra.mxu0 0.0
    %5847 = vmatprep.subr.mxu0 0.0
    %5848 = vmatpush2.msra.mxu0 0.0
    %5849 = vmatprep.subr.mxu0 0.0
    %5850 = vmatpush2.msra.mxu0 0.0
    %5851 = vmatprep.subr.mxu0 0.0
    %5852 = vmatpush2.msra.mxu0 0.0
    %5853 = vmatprep.subr.mxu0 0.0
    %5854 = vmatpush2.msra.mxu0 0.0
    %5855 = vmatprep.subr.mxu0 0.0
    %5856 = vmatpush2.msra.mxu0 0.0
    %5857 = vmatprep.subr.mxu0 0.0
    %5858 = vmatpush2.msra.mxu0 0.0
    %5859 = vmatprep.subr.mxu0 0.0
    %5860 = vmatpush2.msra.mxu0 0.0
    %5861 = vmatprep.subr.mxu0 0.0
    %5862 = vmatpush2.msra.mxu0 0.0
    %5863 = vmatprep.subr.mxu0 0.0
    %5864 = vmatpush2.msra.mxu0 0.0
    %5865 = vmatprep.subr.mxu0 0.0
    %5866 = vmatpush2.msra.mxu0 0.0
    %5867 = vmatprep.subr.mxu0 0.0
    %5868 = vmatpush2.msra.mxu0 0.0
    %5869 = vmatprep.subr.mxu0 0.0
    %5870 = vmatpush2.msra.mxu0 0.0
    %5871 = vmatprep.mubr.f32.mxu0 0.0
    %5872 = vmatmul.mubr.f32.gmra.mxu0 %v5793
    %v5873 = vpop.f32.mrf.mxu0
    %v5874 = vadd.f32 0.0, %v5873
    %v5875 = vpop.f32.mrf.mxu0
    %5876 = vmatprep.mubr.f32.mxu0 0.0
    %5877 = vmatmul.mubr.f32.gmra.mxu0 %v5796
    %v5878 = vpop.f32.mrf.mxu0
    %v5879 = vadd.f32 0.0, %v5878
    %v5880 = vpop.f32.mrf.mxu0
    %5881 = vmatprep.mubr.f32.mxu0 0.0
    %5882 = vmatmul.mubr.f32.gmra.mxu0 %v5799
    %v5883 = vpop.f32.mrf.mxu0
    %v5884 = vadd.f32 0.0, %v5883
    %v5885 = vpop.f32.mrf.mxu0
    %5886 = vmatprep.mubr.f32.mxu0 0.0
    %5887 = vmatmul.mubr.f32.gmra.mxu0 %v5802
    %v5888 = vpop.f32.mrf.mxu0
    %v5889 = vadd.f32 0.0, %v5888
    %v5890 = vpop.f32.mrf.mxu0
    %5891 = vdwg.mxu0
    %v5893 = vsel %vm3884, %v4773, 0
    %v5896 = vsel %vm3884, %v4778, 0
    %v5899 = vsel %vm3884, %v4783, 0
    %v5902 = vsel %vm3884, %v4788, 0
    %v5905 = vsel %vm5003, %v4960, 0
    %5907 = vmatprep.subr.mxu0 0.0
    %5908 = vmatpush1.msra.mxu0 0.0
    %5909 = vmatprep.subr.mxu0 0.0
    %5910 = vmatpush1.msra.mxu0 0.0
    %5911 = vmatprep.subr.mxu0 0.0
    %5912 = vmatpush1.msra.mxu0 0.0
    %5913 = vmatprep.subr.mxu0 0.0
    %5914 = vmatpush1.msra.mxu0 0.0
    %5915 = vmatprep.subr.mxu0 0.0
    %5916 = vmatpush1.msra.mxu0 0.0
    %5917 = vmatprep.subr.mxu0 0.0
    %5918 = vmatpush1.msra.mxu0 0.0
    %5919 = vmatprep.subr.mxu0 0.0
    %5920 = vmatpush1.msra.mxu0 0.0
    %5921 = vmatprep.subr.mxu0 0.0
    %5922 = vmatpush1.msra.mxu0 0.0
    %5923 = vmatprep.subr.mxu0 0.0
    %5924 = vmatpush1.msra.mxu0 0.0
    %5925 = vmatprep.subr.mxu0 0.0
    %5926 = vmatpush1.msra.mxu0 0.0
    %5927 = vmatprep.subr.mxu0 0.0
    %5928 = vmatpush1.msra.mxu0 0.0
    %5929 = vmatprep.subr.mxu0 0.0
    %5930 = vmatpush1.msra.mxu0 %v5905
    %5931 = vmatprep.subr.mxu0 0.0
    %5932 = vmatpush1.msra.mxu0 %v4959
    %5933 = vmatprep.subr.mxu0 0.0
    %5934 = vmatpush1.msra.mxu0 %v4958
    %5935 = vmatprep.subr.mxu0 0.0
    %5936 = vmatpush1.msra.mxu0 %v4957
    %5937 = vmatprep.subr.mxu0 0.0
    %5938 = vmatpush1.msra.mxu0 %v4956
    %5939 = vmatprep.subr.mxu0 0.0
    %5940 = vmatpush2.msra.mxu0 0.0
    %5941 = vmatprep.subr.mxu0 0.0
    %5942 = vmatpush2.msra.mxu0 0.0
    %5943 = vmatprep.subr.mxu0 0.0
    %5944 = vmatpush2.msra.mxu0 0.0
    %5945 = vmatprep.subr.mxu0 0.0
    %5946 = vmatpush2.msra.mxu0 0.0
    %5947 = vmatprep.subr.mxu0 0.0
    %5948 = vmatpush2.msra.mxu0 0.0
    %5949 = vmatprep.subr.mxu0 0.0
    %5950 = vmatpush2.msra.mxu0 0.0
    %5951 = vmatprep.subr.mxu0 0.0
    %5952 = vmatpush2.msra.mxu0 0.0
    %5953 = vmatprep.subr.mxu0 0.0
    %5954 = vmatpush2.msra.mxu0 0.0
    %5955 = vmatprep.subr.mxu0 0.0
    %5956 = vmatpush2.msra.mxu0 0.0
    %5957 = vmatprep.subr.mxu0 0.0
    %5958 = vmatpush2.msra.mxu0 0.0
    %5959 = vmatprep.subr.mxu0 0.0
    %5960 = vmatpush2.msra.mxu0 0.0
    %5961 = vmatprep.subr.mxu0 0.0
    %5962 = vmatpush2.msra.mxu0 0.0
    %5963 = vmatprep.subr.mxu0 0.0
    %5964 = vmatpush2.msra.mxu0 0.0
    %5965 = vmatprep.subr.mxu0 0.0
    %5966 = vmatpush2.msra.mxu0 0.0
    %5967 = vmatprep.subr.mxu0 0.0
    %5968 = vmatpush2.msra.mxu0 0.0
    %5969 = vmatprep.subr.mxu0 0.0
    %5970 = vmatpush2.msra.mxu0 0.0
    %5971 = vmatprep.mubr.f32.mxu0 0.0
    %5972 = vmatmul.mubr.f32.gmra.mxu0 %v5893
    %v5973 = vpop.f32.mrf.mxu0
    %v5974 = vadd.f32 0.0, %v5973
    %v5975 = vpop.f32.mrf.mxu0
    %5976 = vmatprep.mubr.f32.mxu0 0.0
    %5977 = vmatmul.mubr.f32.gmra.mxu0 %v5896
    %v5978 = vpop.f32.mrf.mxu0
    %v5979 = vadd.f32 0.0, %v5978
    %v5980 = vpop.f32.mrf.mxu0
    %5981 = vmatprep.mubr.f32.mxu0 0.0
    %5982 = vmatmul.mubr.f32.gmra.mxu0 %v5899
    %v5983 = vpop.f32.mrf.mxu0
    %v5984 = vadd.f32 0.0, %v5983
    %v5985 = vpop.f32.mrf.mxu0
    %5986 = vmatprep.mubr.f32.mxu0 0.0
    %5987 = vmatmul.mubr.f32.gmra.mxu0 %v5902
    %v5988 = vpop.f32.mrf.mxu0
    %v5989 = vadd.f32 0.0, %v5988
    %v5990 = vpop.f32.mrf.mxu0
    %5991 = vdwg.mxu0
    %v5993 = vsel %vm3884, %v4793, 0
    %v5996 = vsel %vm3884, %v4798, 0
    %v5999 = vsel %vm3884, %v4803, 0
    %v6002 = vsel %vm3884, %v4808, 0
    %v6005 = vsel %vm5003, %v4965, 0
    %6007 = vmatprep.subr.mxu0 0.0
    %6008 = vmatpush1.msra.mxu0 0.0
    %6009 = vmatprep.subr.mxu0 0.0
    %6010 = vmatpush1.msra.mxu0 0.0
    %6011 = vmatprep.subr.mxu0 0.0
    %6012 = vmatpush1.msra.mxu0 0.0
    %6013 = vmatprep.subr.mxu0 0.0
    %6014 = vmatpush1.msra.mxu0 0.0
    %6015 = vmatprep.subr.mxu0 0.0
    %6016 = vmatpush1.msra.mxu0 0.0
    %6017 = vmatprep.subr.mxu0 0.0
    %6018 = vmatpush1.msra.mxu0 0.0
    %6019 = vmatprep.subr.mxu0 0.0
    %6020 = vmatpush1.msra.mxu0 0.0
    %6021 = vmatprep.subr.mxu0 0.0
    %6022 = vmatpush1.msra.mxu0 0.0
    %6023 = vmatprep.subr.mxu0 0.0
    %6024 = vmatpush1.msra.mxu0 0.0
    %6025 = vmatprep.subr.mxu0 0.0
    %6026 = vmatpush1.msra.mxu0 0.0
    %6027 = vmatprep.subr.mxu0 0.0
    %6028 = vmatpush1.msra.mxu0 0.0
    %6029 = vmatprep.subr.mxu0 0.0
    %6030 = vmatpush1.msra.mxu0 %v6005
    %6031 = vmatprep.subr.mxu0 0.0
    %6032 = vmatpush1.msra.mxu0 %v4964
    %6033 = vmatprep.subr.mxu0 0.0
    %6034 = vmatpush1.msra.mxu0 %v4963
    %6035 = vmatprep.subr.mxu0 0.0
    %6036 = vmatpush1.msra.mxu0 %v4962
    %6037 = vmatprep.subr.mxu0 0.0
    %6038 = vmatpush1.msra.mxu0 %v4961
    %6039 = vmatprep.subr.mxu0 0.0
    %6040 = vmatpush2.msra.mxu0 0.0
    %6041 = vmatprep.subr.mxu0 0.0
    %6042 = vmatpush2.msra.mxu0 0.0
    %6043 = vmatprep.subr.mxu0 0.0
    %6044 = vmatpush2.msra.mxu0 0.0
    %6045 = vmatprep.subr.mxu0 0.0
    %6046 = vmatpush2.msra.mxu0 0.0
    %6047 = vmatprep.subr.mxu0 0.0
    %6048 = vmatpush2.msra.mxu0 0.0
    %6049 = vmatprep.subr.mxu0 0.0
    %6050 = vmatpush2.msra.mxu0 0.0
    %6051 = vmatprep.subr.mxu0 0.0
    %6052 = vmatpush2.msra.mxu0 0.0
    %6053 = vmatprep.subr.mxu0 0.0
    %6054 = vmatpush2.msra.mxu0 0.0
    %6055 = vmatprep.subr.mxu0 0.0
    %6056 = vmatpush2.msra.mxu0 0.0
    %6057 = vmatprep.subr.mxu0 0.0
    %6058 = vmatpush2.msra.mxu0 0.0
    %6059 = vmatprep.subr.mxu0 0.0
    %6060 = vmatpush2.msra.mxu0 0.0
    %6061 = vmatprep.subr.mxu0 0.0
    %6062 = vmatpush2.msra.mxu0 0.0
    %6063 = vmatprep.subr.mxu0 0.0
    %6064 = vmatpush2.msra.mxu0 0.0
    %6065 = vmatprep.subr.mxu0 0.0
    %6066 = vmatpush2.msra.mxu0 0.0
    %6067 = vmatprep.subr.mxu0 0.0
    %6068 = vmatpush2.msra.mxu0 0.0
    %6069 = vmatprep.subr.mxu0 0.0
    %6070 = vmatpush2.msra.mxu0 0.0
    %6071 = vmatprep.mubr.f32.mxu0 0.0
    %6072 = vmatmul.mubr.f32.gmra.mxu0 %v5993
    %v6073 = vpop.f32.mrf.mxu0
    %v6074 = vadd.f32 0.0, %v6073
    %v6075 = vpop.f32.mrf.mxu0
    %6076 = vmatprep.mubr.f32.mxu0 0.0
    %6077 = vmatmul.mubr.f32.gmra.mxu0 %v5996
    %v6078 = vpop.f32.mrf.mxu0
    %v6079 = vadd.f32 0.0, %v6078
    %v6080 = vpop.f32.mrf.mxu0
    %6081 = vmatprep.mubr.f32.mxu0 0.0
    %6082 = vmatmul.mubr.f32.gmra.mxu0 %v5999
    %v6083 = vpop.f32.mrf.mxu0
    %v6084 = vadd.f32 0.0, %v6083
    %v6085 = vpop.f32.mrf.mxu0
    %6086 = vmatprep.mubr.f32.mxu0 0.0
    %6087 = vmatmul.mubr.f32.gmra.mxu0 %v6002
    %v6088 = vpop.f32.mrf.mxu0
    %v6089 = vadd.f32 0.0, %v6088
    %v6090 = vpop.f32.mrf.mxu0
    %6091 = vdwg.mxu0
    %v6093 = vsel %vm3884, %v4813, 0
    %v6096 = vsel %vm3884, %v4818, 0
    %v6099 = vsel %vm3884, %v4823, 0
    %v6102 = vsel %vm3884, %v4828, 0
    %v6105 = vsel %vm5003, %v4970, 0
    %6107 = vmatprep.subr.mxu0 0.0
    %6108 = vmatpush1.msra.mxu0 0.0
    %6109 = vmatprep.subr.mxu0 0.0
    %6110 = vmatpush1.msra.mxu0 0.0
    %6111 = vmatprep.subr.mxu0 0.0
    %6112 = vmatpush1.msra.mxu0 0.0
    %6113 = vmatprep.subr.mxu0 0.0
    %6114 = vmatpush1.msra.mxu0 0.0
    %6115 = vmatprep.subr.mxu0 0.0
    %6116 = vmatpush1.msra.mxu0 0.0
    %6117 = vmatprep.subr.mxu0 0.0
    %6118 = vmatpush1.msra.mxu0 0.0
    %6119 = vmatprep.subr.mxu0 0.0
    %6120 = vmatpush1.msra.mxu0 0.0
    %6121 = vmatprep.subr.mxu0 0.0
    %6122 = vmatpush1.msra.mxu0 0.0
    %6123 = vmatprep.subr.mxu0 0.0
    %6124 = vmatpush1.msra.mxu0 0.0
    %6125 = vmatprep.subr.mxu0 0.0
    %6126 = vmatpush1.msra.mxu0 0.0
    %6127 = vmatprep.subr.mxu0 0.0
    %6128 = vmatpush1.msra.mxu0 0.0
    %6129 = vmatprep.subr.mxu0 0.0
    %6130 = vmatpush1.msra.mxu0 %v6105
    %6131 = vmatprep.subr.mxu0 0.0
    %6132 = vmatpush1.msra.mxu0 %v4969
    %6133 = vmatprep.subr.mxu0 0.0
    %6134 = vmatpush1.msra.mxu0 %v4968
    %6135 = vmatprep.subr.mxu0 0.0
    %6136 = vmatpush1.msra.mxu0 %v4967
    %6137 = vmatprep.subr.mxu0 0.0
    %6138 = vmatpush1.msra.mxu0 %v4966
    %6139 = vmatprep.subr.mxu0 0.0
    %6140 = vmatpush2.msra.mxu0 0.0
    %6141 = vmatprep.subr.mxu0 0.0
    %6142 = vmatpush2.msra.mxu0 0.0
    %6143 = vmatprep.subr.mxu0 0.0
    %6144 = vmatpush2.msra.mxu0 0.0
    %6145 = vmatprep.subr.mxu0 0.0
    %6146 = vmatpush2.msra.mxu0 0.0
    %6147 = vmatprep.subr.mxu0 0.0
    %6148 = vmatpush2.msra.mxu0 0.0
    %6149 = vmatprep.subr.mxu0 0.0
    %6150 = vmatpush2.msra.mxu0 0.0
    %6151 = vmatprep.subr.mxu0 0.0
    %6152 = vmatpush2.msra.mxu0 0.0
    %6153 = vmatprep.subr.mxu0 0.0
    %6154 = vmatpush2.msra.mxu0 0.0
    %6155 = vmatprep.subr.mxu0 0.0
    %6156 = vmatpush2.msra.mxu0 0.0
    %6157 = vmatprep.subr.mxu0 0.0
    %6158 = vmatpush2.msra.mxu0 0.0
    %6159 = vmatprep.subr.mxu0 0.0
    %6160 = vmatpush2.msra.mxu0 0.0
    %6161 = vmatprep.subr.mxu0 0.0
    %6162 = vmatpush2.msra.mxu0 0.0
    %6163 = vmatprep.subr.mxu0 0.0
    %6164 = vmatpush2.msra.mxu0 0.0
    %6165 = vmatprep.subr.mxu0 0.0
    %6166 = vmatpush2.msra.mxu0 0.0
    %6167 = vmatprep.subr.mxu0 0.0
    %6168 = vmatpush2.msra.mxu0 0.0
    %6169 = vmatprep.subr.mxu0 0.0
    %6170 = vmatpush2.msra.mxu0 0.0
    %6171 = vmatprep.mubr.f32.mxu0 0.0
    %6172 = vmatmul.mubr.f32.gmra.mxu0 %v6093
    %v6173 = vpop.f32.mrf.mxu0
    %v6174 = vadd.f32 0.0, %v6173
    %v6175 = vpop.f32.mrf.mxu0
    %6176 = vmatprep.mubr.f32.mxu0 0.0
    %6177 = vmatmul.mubr.f32.gmra.mxu0 %v6096
    %v6178 = vpop.f32.mrf.mxu0
    %v6179 = vadd.f32 0.0, %v6178
    %v6180 = vpop.f32.mrf.mxu0
    %6181 = vmatprep.mubr.f32.mxu0 0.0
    %6182 = vmatmul.mubr.f32.gmra.mxu0 %v6099
    %v6183 = vpop.f32.mrf.mxu0
    %v6184 = vadd.f32 0.0, %v6183
    %v6185 = vpop.f32.mrf.mxu0
    %6186 = vmatprep.mubr.f32.mxu0 0.0
    %6187 = vmatmul.mubr.f32.gmra.mxu0 %v6102
    %v6188 = vpop.f32.mrf.mxu0
    %v6189 = vadd.f32 0.0, %v6188
    %v6190 = vpop.f32.mrf.mxu0
    %6191 = vdwg.mxu0
    %v6193 = vsel %vm3884, %v4833, 0
    %v6196 = vsel %vm3884, %v4838, 0
    %v6199 = vsel %vm3884, %v4843, 0
    %v6202 = vsel %vm3884, %v4848, 0
    %v6205 = vsel %vm5003, %v4975, 0
    %6207 = vmatprep.subr.mxu0 0.0
    %6208 = vmatpush1.msra.mxu0 0.0
    %6209 = vmatprep.subr.mxu0 0.0
    %6210 = vmatpush1.msra.mxu0 0.0
    %6211 = vmatprep.subr.mxu0 0.0
    %6212 = vmatpush1.msra.mxu0 0.0
    %6213 = vmatprep.subr.mxu0 0.0
    %6214 = vmatpush1.msra.mxu0 0.0
    %6215 = vmatprep.subr.mxu0 0.0
    %6216 = vmatpush1.msra.mxu0 0.0
    %6217 = vmatprep.subr.mxu0 0.0
    %6218 = vmatpush1.msra.mxu0 0.0
    %6219 = vmatprep.subr.mxu0 0.0
    %6220 = vmatpush1.msra.mxu0 0.0
    %6221 = vmatprep.subr.mxu0 0.0
    %6222 = vmatpush1.msra.mxu0 0.0
    %6223 = vmatprep.subr.mxu0 0.0
    %6224 = vmatpush1.msra.mxu0 0.0
    %6225 = vmatprep.subr.mxu0 0.0
    %6226 = vmatpush1.msra.mxu0 0.0
    %6227 = vmatprep.subr.mxu0 0.0
    %6228 = vmatpush1.msra.mxu0 0.0
    %6229 = vmatprep.subr.mxu0 0.0
    %6230 = vmatpush1.msra.mxu0 %v6205
    %6231 = vmatprep.subr.mxu0 0.0
    %6232 = vmatpush1.msra.mxu0 %v4974
    %6233 = vmatprep.subr.mxu0 0.0
    %6234 = vmatpush1.msra.mxu0 %v4973
    %6235 = vmatprep.subr.mxu0 0.0
    %6236 = vmatpush1.msra.mxu0 %v4972
    %6237 = vmatprep.subr.mxu0 0.0
    %6238 = vmatpush1.msra.mxu0 %v4971
    %6239 = vmatprep.subr.mxu0 0.0
    %6240 = vmatpush2.msra.mxu0 0.0
    %6241 = vmatprep.subr.mxu0 0.0
    %6242 = vmatpush2.msra.mxu0 0.0
    %6243 = vmatprep.subr.mxu0 0.0
    %6244 = vmatpush2.msra.mxu0 0.0
    %6245 = vmatprep.subr.mxu0 0.0
    %6246 = vmatpush2.msra.mxu0 0.0
    %6247 = vmatprep.subr.mxu0 0.0
    %6248 = vmatpush2.msra.mxu0 0.0
    %6249 = vmatprep.subr.mxu0 0.0
    %6250 = vmatpush2.msra.mxu0 0.0
    %6251 = vmatprep.subr.mxu0 0.0
    %6252 = vmatpush2.msra.mxu0 0.0
    %6253 = vmatprep.subr.mxu0 0.0
    %6254 = vmatpush2.msra.mxu0 0.0
    %6255 = vmatprep.subr.mxu0 0.0
    %6256 = vmatpush2.msra.mxu0 0.0
    %6257 = vmatprep.subr.mxu0 0.0
    %6258 = vmatpush2.msra.mxu0 0.0
    %6259 = vmatprep.subr.mxu0 0.0
    %6260 = vmatpush2.msra.mxu0 0.0
    %6261 = vmatprep.subr.mxu0 0.0
    %6262 = vmatpush2.msra.mxu0 0.0
    %6263 = vmatprep.subr.mxu0 0.0
    %6264 = vmatpush2.msra.mxu0 0.0
    %6265 = vmatprep.subr.mxu0 0.0
    %6266 = vmatpush2.msra.mxu0 0.0
    %6267 = vmatprep.subr.mxu0 0.0
    %6268 = vmatpush2.msra.mxu0 0.0
    %6269 = vmatprep.subr.mxu0 0.0
    %6270 = vmatpush2.msra.mxu0 0.0
    %6271 = vmatprep.mubr.f32.mxu0 0.0
    %6272 = vmatmul.mubr.f32.gmra.mxu0 %v6193
    %v6273 = vpop.f32.mrf.mxu0
    %v6274 = vadd.f32 0.0, %v6273
    %v6275 = vpop.f32.mrf.mxu0
    %6276 = vmatprep.mubr.f32.mxu0 0.0
    %6277 = vmatmul.mubr.f32.gmra.mxu0 %v6196
    %v6278 = vpop.f32.mrf.mxu0
    %v6279 = vadd.f32 0.0, %v6278
    %v6280 = vpop.f32.mrf.mxu0
    %6281 = vmatprep.mubr.f32.mxu0 0.0
    %6282 = vmatmul.mubr.f32.gmra.mxu0 %v6199
    %v6283 = vpop.f32.mrf.mxu0
    %v6284 = vadd.f32 0.0, %v6283
    %v6285 = vpop.f32.mrf.mxu0
    %6286 = vmatprep.mubr.f32.mxu0 0.0
    %6287 = vmatmul.mubr.f32.gmra.mxu0 %v6202
    %v6288 = vpop.f32.mrf.mxu0
    %v6289 = vadd.f32 0.0, %v6288
    %v6290 = vpop.f32.mrf.mxu0
    %6291 = vdwg.mxu0
    %v6293 = vsel %vm3884, %v4853, 0
    %v6296 = vsel %vm3884, %v4858, 0
    %v6299 = vsel %vm3884, %v4863, 0
    %v6302 = vsel %vm3884, %v4868, 0
    %v6305 = vsel %vm5003, %v4980, 0
    %6307 = vmatprep.subr.mxu0 0.0
    %6308 = vmatpush1.msra.mxu0 0.0
    %6309 = vmatprep.subr.mxu0 0.0
    %6310 = vmatpush1.msra.mxu0 0.0
    %6311 = vmatprep.subr.mxu0 0.0
    %6312 = vmatpush1.msra.mxu0 0.0
    %6313 = vmatprep.subr.mxu0 0.0
    %6314 = vmatpush1.msra.mxu0 0.0
    %6315 = vmatprep.subr.mxu0 0.0
    %6316 = vmatpush1.msra.mxu0 0.0
    %6317 = vmatprep.subr.mxu0 0.0
    %6318 = vmatpush1.msra.mxu0 0.0
    %6319 = vmatprep.subr.mxu0 0.0
    %6320 = vmatpush1.msra.mxu0 0.0
    %6321 = vmatprep.subr.mxu0 0.0
    %6322 = vmatpush1.msra.mxu0 0.0
    %6323 = vmatprep.subr.mxu0 0.0
    %6324 = vmatpush1.msra.mxu0 0.0
    %6325 = vmatprep.subr.mxu0 0.0
    %6326 = vmatpush1.msra.mxu0 0.0
    %6327 = vmatprep.subr.mxu0 0.0
    %6328 = vmatpush1.msra.mxu0 0.0
    %6329 = vmatprep.subr.mxu0 0.0
    %6330 = vmatpush1.msra.mxu0 %v6305
    %6331 = vmatprep.subr.mxu0 0.0
    %6332 = vmatpush1.msra.mxu0 %v4979
    %6333 = vmatprep.subr.mxu0 0.0
    %6334 = vmatpush1.msra.mxu0 %v4978
    %6335 = vmatprep.subr.mxu0 0.0
    %6336 = vmatpush1.msra.mxu0 %v4977
    %6337 = vmatprep.subr.mxu0 0.0
    %6338 = vmatpush1.msra.mxu0 %v4976
    %6339 = vmatprep.subr.mxu0 0.0
    %6340 = vmatpush2.msra.mxu0 0.0
    %6341 = vmatprep.subr.mxu0 0.0
    %6342 = vmatpush2.msra.mxu0 0.0
    %6343 = vmatprep.subr.mxu0 0.0
    %6344 = vmatpush2.msra.mxu0 0.0
    %6345 = vmatprep.subr.mxu0 0.0
    %6346 = vmatpush2.msra.mxu0 0.0
    %6347 = vmatprep.subr.mxu0 0.0
    %6348 = vmatpush2.msra.mxu0 0.0
    %6349 = vmatprep.subr.mxu0 0.0
    %6350 = vmatpush2.msra.mxu0 0.0
    %6351 = vmatprep.subr.mxu0 0.0
    %6352 = vmatpush2.msra.mxu0 0.0
    %6353 = vmatprep.subr.mxu0 0.0
    %6354 = vmatpush2.msra.mxu0 0.0
    %6355 = vmatprep.subr.mxu0 0.0
    %6356 = vmatpush2.msra.mxu0 0.0
    %6357 = vmatprep.subr.mxu0 0.0
    %6358 = vmatpush2.msra.mxu0 0.0
    %6359 = vmatprep.subr.mxu0 0.0
    %6360 = vmatpush2.msra.mxu0 0.0
    %6361 = vmatprep.subr.mxu0 0.0
    %6362 = vmatpush2.msra.mxu0 0.0
    %6363 = vmatprep.subr.mxu0 0.0
    %6364 = vmatpush2.msra.mxu0 0.0
    %6365 = vmatprep.subr.mxu0 0.0
    %6366 = vmatpush2.msra.mxu0 0.0
    %6367 = vmatprep.subr.mxu0 0.0
    %6368 = vmatpush2.msra.mxu0 0.0
    %6369 = vmatprep.subr.mxu0 0.0
    %6370 = vmatpush2.msra.mxu0 0.0
    %6371 = vmatprep.mubr.f32.mxu0 0.0
    %6372 = vmatmul.mubr.f32.gmra.mxu0 %v6293
    %v6373 = vpop.f32.mrf.mxu0
    %v6374 = vadd.f32 0.0, %v6373
    %v6375 = vpop.f32.mrf.mxu0
    %6376 = vmatprep.mubr.f32.mxu0 0.0
    %6377 = vmatmul.mubr.f32.gmra.mxu0 %v6296
    %v6378 = vpop.f32.mrf.mxu0
    %v6379 = vadd.f32 0.0, %v6378
    %v6380 = vpop.f32.mrf.mxu0
    %6381 = vmatprep.mubr.f32.mxu0 0.0
    %6382 = vmatmul.mubr.f32.gmra.mxu0 %v6299
    %v6383 = vpop.f32.mrf.mxu0
    %v6384 = vadd.f32 0.0, %v6383
    %v6385 = vpop.f32.mrf.mxu0
    %6386 = vmatprep.mubr.f32.mxu0 0.0
    %6387 = vmatmul.mubr.f32.gmra.mxu0 %v6302
    %v6388 = vpop.f32.mrf.mxu0
    %v6389 = vadd.f32 0.0, %v6388
    %v6390 = vpop.f32.mrf.mxu0
    %6391 = vdwg.mxu0
    %v6393 = vsel %vm3884, %v4873, 0
    %v6396 = vsel %vm3884, %v4878, 0
    %v6399 = vsel %vm3884, %v4883, 0
    %v6402 = vsel %vm3884, %v4888, 0
    %v6405 = vsel %vm5003, %v4985, 0
    %6407 = vmatprep.subr.mxu0 0.0
    %6408 = vmatpush1.msra.mxu0 0.0
    %6409 = vmatprep.subr.mxu0 0.0
    %6410 = vmatpush1.msra.mxu0 0.0
    %6411 = vmatprep.subr.mxu0 0.0
    %6412 = vmatpush1.msra.mxu0 0.0
    %6413 = vmatprep.subr.mxu0 0.0
    %6414 = vmatpush1.msra.mxu0 0.0
    %6415 = vmatprep.subr.mxu0 0.0
    %6416 = vmatpush1.msra.mxu0 0.0
    %6417 = vmatprep.subr.mxu0 0.0
    %6418 = vmatpush1.msra.mxu0 0.0
    %6419 = vmatprep.subr.mxu0 0.0
    %6420 = vmatpush1.msra.mxu0 0.0
    %6421 = vmatprep.subr.mxu0 0.0
    %6422 = vmatpush1.msra.mxu0 0.0
    %6423 = vmatprep.subr.mxu0 0.0
    %6424 = vmatpush1.msra.mxu0 0.0
    %6425 = vmatprep.subr.mxu0 0.0
    %6426 = vmatpush1.msra.mxu0 0.0
    %6427 = vmatprep.subr.mxu0 0.0
    %6428 = vmatpush1.msra.mxu0 0.0
    %6429 = vmatprep.subr.mxu0 0.0
    %6430 = vmatpush1.msra.mxu0 %v6405
    %6431 = vmatprep.subr.mxu0 0.0
    %6432 = vmatpush1.msra.mxu0 %v4984
    %6433 = vmatprep.subr.mxu0 0.0
    %6434 = vmatpush1.msra.mxu0 %v4983
    %6435 = vmatprep.subr.mxu0 0.0
    %6436 = vmatpush1.msra.mxu0 %v4982
    %6437 = vmatprep.subr.mxu0 0.0
    %6438 = vmatpush1.msra.mxu0 %v4981
    %6439 = vmatprep.subr.mxu0 0.0
    %6440 = vmatpush2.msra.mxu0 0.0
    %6441 = vmatprep.subr.mxu0 0.0
    %6442 = vmatpush2.msra.mxu0 0.0
    %6443 = vmatprep.subr.mxu0 0.0
    %6444 = vmatpush2.msra.mxu0 0.0
    %6445 = vmatprep.subr.mxu0 0.0
    %6446 = vmatpush2.msra.mxu0 0.0
    %6447 = vmatprep.subr.mxu0 0.0
    %6448 = vmatpush2.msra.mxu0 0.0
    %6449 = vmatprep.subr.mxu0 0.0
    %6450 = vmatpush2.msra.mxu0 0.0
    %6451 = vmatprep.subr.mxu0 0.0
    %6452 = vmatpush2.msra.mxu0 0.0
    %6453 = vmatprep.subr.mxu0 0.0
    %6454 = vmatpush2.msra.mxu0 0.0
    %6455 = vmatprep.subr.mxu0 0.0
    %6456 = vmatpush2.msra.mxu0 0.0
    %6457 = vmatprep.subr.mxu0 0.0
    %6458 = vmatpush2.msra.mxu0 0.0
    %6459 = vmatprep.subr.mxu0 0.0
    %6460 = vmatpush2.msra.mxu0 0.0
    %6461 = vmatprep.subr.mxu0 0.0
    %6462 = vmatpush2.msra.mxu0 0.0
    %6463 = vmatprep.subr.mxu0 0.0
    %6464 = vmatpush2.msra.mxu0 0.0
    %6465 = vmatprep.subr.mxu0 0.0
    %6466 = vmatpush2.msra.mxu0 0.0
    %6467 = vmatprep.subr.mxu0 0.0
    %6468 = vmatpush2.msra.mxu0 0.0
    %6469 = vmatprep.subr.mxu0 0.0
    %6470 = vmatpush2.msra.mxu0 0.0
    %6471 = vmatprep.mubr.f32.mxu0 0.0
    %6472 = vmatmul.mubr.f32.gmra.mxu0 %v6393
    %v6473 = vpop.f32.mrf.mxu0
    %v6474 = vadd.f32 0.0, %v6473
    %v6475 = vpop.f32.mrf.mxu0
    %6476 = vmatprep.mubr.f32.mxu0 0.0
    %6477 = vmatmul.mubr.f32.gmra.mxu0 %v6396
    %v6478 = vpop.f32.mrf.mxu0
    %v6479 = vadd.f32 0.0, %v6478
    %v6480 = vpop.f32.mrf.mxu0
    %6481 = vmatprep.mubr.f32.mxu0 0.0
    %6482 = vmatmul.mubr.f32.gmra.mxu0 %v6399
    %v6483 = vpop.f32.mrf.mxu0
    %v6484 = vadd.f32 0.0, %v6483
    %v6485 = vpop.f32.mrf.mxu0
    %6486 = vmatprep.mubr.f32.mxu0 0.0
    %6487 = vmatmul.mubr.f32.gmra.mxu0 %v6402
    %v6488 = vpop.f32.mrf.mxu0
    %v6489 = vadd.f32 0.0, %v6488
    %v6490 = vpop.f32.mrf.mxu0
    %6491 = vdwg.mxu0
    %v6493 = vsel %vm3884, %v4893, 0
    %v6496 = vsel %vm3884, %v4898, 0
    %v6499 = vsel %vm3884, %v4903, 0
    %v6502 = vsel %vm3884, %v4908, 0
    %v6505 = vsel %vm5003, %v4990, 0
    %6507 = vmatprep.subr.mxu0 0.0
    %6508 = vmatpush1.msra.mxu0 0.0
    %6509 = vmatprep.subr.mxu0 0.0
    %6510 = vmatpush1.msra.mxu0 0.0
    %6511 = vmatprep.subr.mxu0 0.0
    %6512 = vmatpush1.msra.mxu0 0.0
    %6513 = vmatprep.subr.mxu0 0.0
    %6514 = vmatpush1.msra.mxu0 0.0
    %6515 = vmatprep.subr.mxu0 0.0
    %6516 = vmatpush1.msra.mxu0 0.0
    %6517 = vmatprep.subr.mxu0 0.0
    %6518 = vmatpush1.msra.mxu0 0.0
    %6519 = vmatprep.subr.mxu0 0.0
    %6520 = vmatpush1.msra.mxu0 0.0
    %6521 = vmatprep.subr.mxu0 0.0
    %6522 = vmatpush1.msra.mxu0 0.0
    %6523 = vmatprep.subr.mxu0 0.0
    %6524 = vmatpush1.msra.mxu0 0.0
    %6525 = vmatprep.subr.mxu0 0.0
    %6526 = vmatpush1.msra.mxu0 0.0
    %6527 = vmatprep.subr.mxu0 0.0
    %6528 = vmatpush1.msra.mxu0 0.0
    %6529 = vmatprep.subr.mxu0 0.0
    %6530 = vmatpush1.msra.mxu0 %v6505
    %6531 = vmatprep.subr.mxu0 0.0
    %6532 = vmatpush1.msra.mxu0 %v4989
    %6533 = vmatprep.subr.mxu0 0.0
    %6534 = vmatpush1.msra.mxu0 %v4988
    %6535 = vmatprep.subr.mxu0 0.0
    %6536 = vmatpush1.msra.mxu0 %v4987
    %6537 = vmatprep.subr.mxu0 0.0
    %6538 = vmatpush1.msra.mxu0 %v4986
    %6539 = vmatprep.subr.mxu0 0.0
    %6540 = vmatpush2.msra.mxu0 0.0
    %6541 = vmatprep.subr.mxu0 0.0
    %6542 = vmatpush2.msra.mxu0 0.0
    %6543 = vmatprep.subr.mxu0 0.0
    %6544 = vmatpush2.msra.mxu0 0.0
    %6545 = vmatprep.subr.mxu0 0.0
    %6546 = vmatpush2.msra.mxu0 0.0
    %6547 = vmatprep.subr.mxu0 0.0
    %6548 = vmatpush2.msra.mxu0 0.0
    %6549 = vmatprep.subr.mxu0 0.0
    %6550 = vmatpush2.msra.mxu0 0.0
    %6551 = vmatprep.subr.mxu0 0.0
    %6552 = vmatpush2.msra.mxu0 0.0
    %6553 = vmatprep.subr.mxu0 0.0
    %6554 = vmatpush2.msra.mxu0 0.0
    %6555 = vmatprep.subr.mxu0 0.0
    %6556 = vmatpush2.msra.mxu0 0.0
    %6557 = vmatprep.subr.mxu0 0.0
    %6558 = vmatpush2.msra.mxu0 0.0
    %6559 = vmatprep.subr.mxu0 0.0
    %6560 = vmatpush2.msra.mxu0 0.0
    %6561 = vmatprep.subr.mxu0 0.0
    %6562 = vmatpush2.msra.mxu0 0.0
    %6563 = vmatprep.subr.mxu0 0.0
    %6564 = vmatpush2.msra.mxu0 0.0
    %6565 = vmatprep.subr.mxu0 0.0
    %6566 = vmatpush2.msra.mxu0 0.0
    %6567 = vmatprep.subr.mxu0 0.0
    %6568 = vmatpush2.msra.mxu0 0.0
    %6569 = vmatprep.subr.mxu0 0.0
    %6570 = vmatpush2.msra.mxu0 0.0
    %6571 = vmatprep.mubr.f32.mxu0 0.0
    %6572 = vmatmul.mubr.f32.gmra.mxu0 %v6493
    %v6573 = vpop.f32.mrf.mxu0
    %v6574 = vadd.f32 0.0, %v6573
    %v6575 = vpop.f32.mrf.mxu0
    %6576 = vmatprep.mubr.f32.mxu0 0.0
    %6577 = vmatmul.mubr.f32.gmra.mxu0 %v6496
    %v6578 = vpop.f32.mrf.mxu0
    %v6579 = vadd.f32 0.0, %v6578
    %v6580 = vpop.f32.mrf.mxu0
    %6581 = vmatprep.mubr.f32.mxu0 0.0
    %6582 = vmatmul.mubr.f32.gmra.mxu0 %v6499
    %v6583 = vpop.f32.mrf.mxu0
    %v6584 = vadd.f32 0.0, %v6583
    %v6585 = vpop.f32.mrf.mxu0
    %6586 = vmatprep.mubr.f32.mxu0 0.0
    %6587 = vmatmul.mubr.f32.gmra.mxu0 %v6502
    %v6588 = vpop.f32.mrf.mxu0
    %v6589 = vadd.f32 0.0, %v6588
    %v6590 = vpop.f32.mrf.mxu0
    %6591 = vdwg.mxu0
    %v6592 = vsel %vm307, %v5074, 0.0
    %v6593 = vsel %vm307, %v5174, 0.0
    %v6594 = vadd.f32 %v6592, %v6593
    %v6595 = vsel %vm307, %v5274, 0.0
    %v6596 = vadd.f32 %v6594, %v6595
    %v6597 = vsel %vm307, %v5374, 0.0
    %v6598 = vadd.f32 %v6596, %v6597
    %v6599 = vsel %vm307, %v5474, 0.0
    %v6600 = vadd.f32 %v6598, %v6599
    %v6601 = vsel %vm307, %v5574, 0.0
    %v6602 = vadd.f32 %v6600, %v6601
    %v6603 = vsel %vm307, %v5674, 0.0
    %v6604 = vadd.f32 %v6602, %v6603
    %v6605 = vsel %vm307, %v5774, 0.0
    %v6606 = vadd.f32 %v6604, %v6605
    %v6607 = vsel %vm307, %v5874, 0.0
    %v6608 = vadd.f32 %v6606, %v6607
    %v6609 = vsel %vm307, %v5974, 0.0
    %v6610 = vadd.f32 %v6608, %v6609
    %v6611 = vsel %vm307, %v6074, 0.0
    %v6612 = vadd.f32 %v6610, %v6611
    %v6613 = vsel %vm307, %v6174, 0.0
    %v6614 = vadd.f32 %v6612, %v6613
    %v6615 = vsel %vm307, %v6274, 0.0
    %v6616 = vadd.f32 %v6614, %v6615
    %v6617 = vsel %vm307, %v6374, 0.0
    %v6618 = vadd.f32 %v6616, %v6617
    %v6619 = vsel %vm307, %v6474, 0.0
    %v6620 = vadd.f32 %v6618, %v6619
    %v6621 = vsel %vm307, %v6574, 0.0
    %v6622 = vadd.f32 %v6620, %v6621
    %v6623 = vsel %vm307, %v5079, 0.0
    %v6624 = vsel %vm307, %v5179, 0.0
    %v6625 = vadd.f32 %v6623, %v6624
    %v6626 = vsel %vm307, %v5279, 0.0
    %v6627 = vadd.f32 %v6625, %v6626
    %v6628 = vsel %vm307, %v5379, 0.0
    %v6629 = vadd.f32 %v6627, %v6628
    %v6630 = vsel %vm307, %v5479, 0.0
    %v6631 = vadd.f32 %v6629, %v6630
    %v6632 = vsel %vm307, %v5579, 0.0
    %v6633 = vadd.f32 %v6631, %v6632
    %v6634 = vsel %vm307, %v5679, 0.0
    %v6635 = vadd.f32 %v6633, %v6634
    %v6636 = vsel %vm307, %v5779, 0.0
    %v6637 = vadd.f32 %v6635, %v6636
    %v6638 = vsel %vm307, %v5879, 0.0
    %v6639 = vadd.f32 %v6637, %v6638
    %v6640 = vsel %vm307, %v5979, 0.0
    %v6641 = vadd.f32 %v6639, %v6640
    %v6642 = vsel %vm307, %v6079, 0.0
    %v6643 = vadd.f32 %v6641, %v6642
    %v6644 = vsel %vm307, %v6179, 0.0
    %v6645 = vadd.f32 %v6643, %v6644
    %v6646 = vsel %vm307, %v6279, 0.0
    %v6647 = vadd.f32 %v6645, %v6646
    %v6648 = vsel %vm307, %v6379, 0.0
    %v6649 = vadd.f32 %v6647, %v6648
    %v6650 = vsel %vm307, %v6479, 0.0
    %v6651 = vadd.f32 %v6649, %v6650
    %v6652 = vsel %vm307, %v6579, 0.0
    %v6653 = vadd.f32 %v6651, %v6652
    %v6654 = vsel %vm307, %v5084, 0.0
    %v6655 = vsel %vm307, %v5184, 0.0
    %v6656 = vadd.f32 %v6654, %v6655
    %v6657 = vsel %vm307, %v5284, 0.0
    %v6658 = vadd.f32 %v6656, %v6657
    %v6659 = vsel %vm307, %v5384, 0.0
    %v6660 = vadd.f32 %v6658, %v6659
    %v6661 = vsel %vm307, %v5484, 0.0
    %v6662 = vadd.f32 %v6660, %v6661
    %v6663 = vsel %vm307, %v5584, 0.0
    %v6664 = vadd.f32 %v6662, %v6663
    %v6665 = vsel %vm307, %v5684, 0.0
    %v6666 = vadd.f32 %v6664, %v6665
    %v6667 = vsel %vm307, %v5784, 0.0
    %v6668 = vadd.f32 %v6666, %v6667
    %v6669 = vsel %vm307, %v5884, 0.0
    %v6670 = vadd.f32 %v6668, %v6669
    %v6671 = vsel %vm307, %v5984, 0.0
    %v6672 = vadd.f32 %v6670, %v6671
    %v6673 = vsel %vm307, %v6084, 0.0
    %v6674 = vadd.f32 %v6672, %v6673
    %v6675 = vsel %vm307, %v6184, 0.0
    %v6676 = vadd.f32 %v6674, %v6675
    %v6677 = vsel %vm307, %v6284, 0.0
    %v6678 = vadd.f32 %v6676, %v6677
    %v6679 = vsel %vm307, %v6384, 0.0
    %v6680 = vadd.f32 %v6678, %v6679
    %v6681 = vsel %vm307, %v6484, 0.0
    %v6682 = vadd.f32 %v6680, %v6681
    %v6683 = vsel %vm307, %v6584, 0.0
    %v6684 = vadd.f32 %v6682, %v6683
    %v6685 = vsel %vm307, %v5089, 0.0
    %v6686 = vsel %vm307, %v5189, 0.0
    %v6687 = vadd.f32 %v6685, %v6686
    %v6688 = vsel %vm307, %v5289, 0.0
    %v6689 = vadd.f32 %v6687, %v6688
    %v6690 = vsel %vm307, %v5389, 0.0
    %v6691 = vadd.f32 %v6689, %v6690
    %v6692 = vsel %vm307, %v5489, 0.0
    %v6693 = vadd.f32 %v6691, %v6692
    %v6694 = vsel %vm307, %v5589, 0.0
    %v6695 = vadd.f32 %v6693, %v6694
    %v6696 = vsel %vm307, %v5689, 0.0
    %v6697 = vadd.f32 %v6695, %v6696
    %v6698 = vsel %vm307, %v5789, 0.0
    %v6699 = vadd.f32 %v6697, %v6698
    %v6700 = vsel %vm307, %v5889, 0.0
    %v6701 = vadd.f32 %v6699, %v6700
    %v6702 = vsel %vm307, %v5989, 0.0
    %v6703 = vadd.f32 %v6701, %v6702
    %v6704 = vsel %vm307, %v6089, 0.0
    %v6705 = vadd.f32 %v6703, %v6704
    %v6706 = vsel %vm307, %v6189, 0.0
    %v6707 = vadd.f32 %v6705, %v6706
    %v6708 = vsel %vm307, %v6289, 0.0
    %v6709 = vadd.f32 %v6707, %v6708
    %v6710 = vsel %vm307, %v6389, 0.0
    %v6711 = vadd.f32 %v6709, %v6710
    %v6712 = vsel %vm307, %v6489, 0.0
    %v6713 = vadd.f32 %v6711, %v6712
    %v6714 = vsel %vm307, %v6589, 0.0
    %v6715 = vadd.f32 %v6713, %v6714
    %v6716 = vsel %vm307, %v6622, -inf
    %vm6717 = vcmask 139264
    %v6718 = vsel %vm6717, %v6653, -inf
    %v6719 = vmax.f32 %v6716, %v6718
    %v6720 = vrot.slane %v6719, 4
    %v6721 = vmax.f32 %v6719, %v6720
    %v6722 = vrot.slane %v6721, 2
    %v6723 = vmax.f32 %v6721, %v6722
    %v6724 = vrot.slane %v6723, 1
    %v6725 = vmax.f32 %v6723, %v6724
    %v6726 = vsel %vm307, %v6684, -inf
    %v6727 = vsel %vm6717, %v6715, -inf
    %v6728 = vmax.f32 %v6726, %v6727
    %v6729 = vrot.slane %v6728, 4
    %v6730 = vmax.f32 %v6728, %v6729
    %v6731 = vrot.slane %v6730, 2
    %v6732 = vmax.f32 %v6730, %v6731
    %v6733 = vrot.slane %v6732, 1
    %v6734 = vmax.f32 %v6732, %v6733
    %v6735 = vld [vmem:[%s10] sm:$0xff]
    %v6736 = vld [vmem:[%s10 + $0x8] sm:$0xff]
    %v6737 = vld [vmem:[%s10 + $0x10] sm:$0x3]
    %v6738 = vld [vmem:[%s11] sm:$0x1]
    %v6740 = vlaneseq
    %v6741 = vshrl.u32 %v6740, 7
    %v6742 = vsub.s32 0, %v6741
    %v6743 = vrot.slane %v6738, %v6742
    %vm6747 = vcmask 1041409
    %v6748 = vsel %vm6747, %v6734, %v6725
    %v6749 = vsel %vm307, %v6748, 0
    %v6752 = vsel %vm1223, %v6737, 0
    %6754 = vmatprep.subr.mxu0 0.0
    %6755 = vmatpush1.msra.mxu0 0.0
    %6756 = vmatprep.subr.mxu0 0.0
    %6757 = vmatpush1.msra.mxu0 0.0
    %6758 = vmatprep.subr.mxu0 0.0
    %6759 = vmatpush1.msra.mxu0 0.0
    %6760 = vmatprep.subr.mxu0 0.0
    %6761 = vmatpush1.msra.mxu0 0.0
    %6762 = vmatprep.subr.mxu0 0.0
    %6763 = vmatpush1.msra.mxu0 0.0
    %6764 = vmatprep.subr.mxu0 0.0
    %6765 = vmatpush1.msra.mxu0 0.0
    %6766 = vmatprep.subr.mxu0 0.0
    %6767 = vmatpush1.msra.mxu0 0.0
    %6768 = vmatprep.subr.mxu0 0.0
    %6769 = vmatpush1.msra.mxu0 0.0
    %6770 = vmatprep.subr.mxu0 0.0
    %6771 = vmatpush1.msra.mxu0 0.0
    %6772 = vmatprep.subr.mxu0 0.0
    %6773 = vmatpush1.msra.mxu0 0.0
    %6774 = vmatprep.subr.mxu0 0.0
    %6775 = vmatpush1.msra.mxu0 0.0
    %6776 = vmatprep.subr.mxu0 0.0
    %6777 = vmatpush1.msra.mxu0 0.0
    %6778 = vmatprep.subr.mxu0 0.0
    %6779 = vmatpush1.msra.mxu0 0.0
    %6780 = vmatprep.subr.mxu0 0.0
    %6781 = vmatpush1.msra.mxu0 %v6752
    %6782 = vmatprep.subr.mxu0 0.0
    %6783 = vmatpush1.msra.mxu0 %v6736
    %6784 = vmatprep.subr.mxu0 0.0
    %6785 = vmatpush1.msra.mxu0 %v6735
    %6786 = vmatprep.subr.mxu0 0.0
    %6787 = vmatpush2.msra.mxu0 0.0
    %6788 = vmatprep.subr.mxu0 0.0
    %6789 = vmatpush2.msra.mxu0 0.0
    %6790 = vmatprep.subr.mxu0 0.0
    %6791 = vmatpush2.msra.mxu0 0.0
    %6792 = vmatprep.subr.mxu0 0.0
    %6793 = vmatpush2.msra.mxu0 0.0
    %6794 = vmatprep.subr.mxu0 0.0
    %6795 = vmatpush2.msra.mxu0 0.0
    %6796 = vmatprep.subr.mxu0 0.0
    %6797 = vmatpush2.msra.mxu0 0.0
    %6798 = vmatprep.subr.mxu0 0.0
    %6799 = vmatpush2.msra.mxu0 0.0
    %6800 = vmatprep.subr.mxu0 0.0
    %6801 = vmatpush2.msra.mxu0 0.0
    %6802 = vmatprep.subr.mxu0 0.0
    %6803 = vmatpush2.msra.mxu0 0.0
    %6804 = vmatprep.subr.mxu0 0.0
    %6805 = vmatpush2.msra.mxu0 0.0
    %6806 = vmatprep.subr.mxu0 0.0
    %6807 = vmatpush2.msra.mxu0 0.0
    %6808 = vmatprep.subr.mxu0 0.0
    %6809 = vmatpush2.msra.mxu0 0.0
    %6810 = vmatprep.subr.mxu0 0.0
    %6811 = vmatpush2.msra.mxu0 0.0
    %6812 = vmatprep.subr.mxu0 0.0
    %6813 = vmatpush2.msra.mxu0 0.0
    %6814 = vmatprep.subr.mxu0 0.0
    %6815 = vmatpush2.msra.mxu0 0.0
    %6816 = vmatprep.subr.mxu0 0.0
    %6817 = vmatpush2.msra.mxu0 0.0
    %6818 = vmatprep.mubr.f32.mxu0 0.0
    %6819 = vmatmul.mubr.f32.gmra.mxu0 %v6749
    %v6820 = vpop.f32.mrf.mxu0
    %v6821 = vadd.f32 %v6743, %v6820
    %v6822 = vpop.f32.mrf.mxu0
    %6823 = vdwg.mxu0
    %vm6824 = vcmask 9216
    %6825 = vst.msk [vmem:[#allocation2] sm:$0x3] %vm6824, %v6821
    // Predicated region
    $region50: #{upps_net_forward.1} parent=1 // pred_check
      _
    $region51: #{upps_net_forward.1} parent=1 // pred_check_branch
      %6827 = sbr.rel (0) target = $region53
    $region52: #{upps_net_forward.1} parent=1 // pred_region
      %s6829 = ssub.s32 32, 32
      %6830 = vsyncadd [#allocation3], %s6829
      %s6832 = sshll.u32 [#allocation2], 4
      %s6833 = int_to_ptr.vmem [resolvable:$true] %s6832
      %6835 = dma.vmem_to_hbm [thread:$0]  %s6833, 32, %s12, [#allocation3]
    $region53: #{upps_net_forward.1} parent=1 // pred_fallthru
      _
    // Predicated region
    $region54: #{upps_net_forward.1} parent=1 // pred_check
      _
    $region55: #{upps_net_forward.1} parent=1 // pred_check_branch
      %6837 = sbr.rel (0) target = $region57
    $region56: #{upps_net_forward.1} parent=1 // pred_region
      %6838 = dma.done [#allocation3], 32
    $region57: #{upps_net_forward.1} parent=1 // pred_fallthru
      _
    %6839 = vsyncpa [#allocation3], 1

</llo_original>
